<compile_context>
chip_gen: v7x
topology: tpu7x:2x2x1
jax: 0.10.0
libtpu: 0.0.40
codegen_flags: <defaults>
</compile_context>

<pallas_src>
import math
import functools

import jax
import jax.numpy as jnp
from jax import lax
from jax.experimental import pallas as pl
from jax.experimental.pallas import tpu as pltpu

# Full-f32 matmul precision for both the Pallas MXU dots and the XLA reference
# so the correctness check is tight and deterministic.
jax.config.update("jax_default_matmul_precision", "highest")


# ----------------------------------------------------------------------------
# Kernel (one grid step == one (batch element, layer) pair)
# ----------------------------------------------------------------------------

def _gelu_exact(x):
    # F.gelu default (erf formulation)
    return 0.5 * x * (1.0 + lax.erf(x * (1.0 / math.sqrt(2.0))))


def _transformer_layer_kernel(x_ref, pe_ref,
                              wqkv_ref, bqkv_ref,
                              g_ref, beta_ref,
                              w1_ref, b1_ref, w2_ref, b2_ref,
                              o_ref,
                              x_acc,
                              *, embed, embed_pad, matmul_dtype):
    layer = pl.program_id(1)
    num_layers = pl.num_programs(1)

    # Residual stream lives in VMEM scratch across the layer axis.
    @pl.when(layer == 0)
    def _():
        x_acc[...] = x_ref[...].astype(jnp.float32) + pe_ref[...]

    x = x_acc[...]                                           # (S, Ep) f32

    def mm(a, w_ref, b_ref):
        return jnp.dot(a.astype(matmul_dtype), w_ref[...].astype(matmul_dtype),
                       preferred_element_type=jnp.float32) + b_ref[...]

    # --- fused Q/K/V projection: one (S, Ep) @ (Ep, 3Ep) MXU pass -------------
    qkv = mm(x, wqkv_ref, bqkv_ref)                          # (S, 3*Ep)
    # Slices at multiples of 128 lanes -> lane-aligned, no XLU shuffles.
    q = qkv[:, 0 * embed_pad:1 * embed_pad]
    k = qkv[:, 1 * embed_pad:2 * embed_pad]
    v = qkv[:, 2 * embed_pad:3 * embed_pad]

    # --- attention (no softmax in reference); 1/sqrt(E) already folded into Wq.
    # Contract on the shared last dim (MXU-native A @ B^T, no explicit k.T).
    scores = lax.dot_general(q.astype(matmul_dtype), k.astype(matmul_dtype),
                             dimension_numbers=(((1,), (1,)), ((), ())),
                             preferred_element_type=jnp.float32)   # (S, S)
    attn = jnp.dot(scores.astype(matmul_dtype), v.astype(matmul_dtype),
                   preferred_element_type=jnp.float32)             # (S, Ep)

    # --- LayerNorm over the LOGICAL embed dim (eps = 1e-5, affine) ------------
    inv_e = 1.0 / float(embed)
    mean = jnp.sum(attn, axis=-1, keepdims=True) * inv_e     # padded lanes are 0
    cen = attn - mean
    if embed_pad != embed:
        lane = lax.broadcasted_iota(jnp.int32, attn.shape, dimension=1)
        cen = jnp.where(lane < embed, cen, 0.0)              # mask padded lanes
    var = jnp.sum(cen * cen, axis=-1, keepdims=True) * inv_e
    ctx = cen * lax.rsqrt(var + 1e-5) * g_ref[...] + beta_ref[...]

    # --- FeedForward + gelu, block-level gelu, residual ------------------------
    h = _gelu_exact(mm(ctx, w1_ref, b1_ref))
    h = _gelu_exact(mm(h, w2_ref, b2_ref))

    x_new = h + x
    x_acc[...] = x_new

    @pl.when(layer == num_layers - 1)
    def _():
        o_ref[...] = x_new.astype(o_ref.dtype)


# ----------------------------------------------------------------------------
# Wrapper
# ----------------------------------------------------------------------------

def _round_up(n, m):
    return ((n + m - 1) // m) * m


def transformer_forward(x, pe, params, *, matmul_dtype=jnp.float32):
    """x: (B, S, E) f32; pe: (max_seq, E); params: stacked per-layer weights."""
    B, S, E = x.shape
    L = params["wq"].shape[0]
    Ep = _round_up(E, 128)                 # lane-dense padded embed
    scale = 1.0 / math.sqrt(E)

    def pad_w(w):                          # (L, E, E) -> (L, Ep, Ep)
        return jnp.pad(w, ((0, 0), (0, Ep - E), (0, Ep - E)))

    def pad_b(b):                          # (L, E)    -> (L, 1, Ep)
        return jnp.pad(b, ((0, 0), (0, Ep - E)))[:, None, :]

    # Fused QKV; 1/sqrt(E) folded into the Q segment so the kernel never scales.
    wqkv = jnp.concatenate([pad_w(params["wq"] * scale),
                            pad_w(params["wk"]),
                            pad_w(params["wv"])], axis=-1)          # (L, Ep, 3Ep)
    bqkv = jnp.concatenate([pad_b(params["bq"] * scale),
                            pad_b(params["bk"]),
                            pad_b(params["bv"])], axis=-1)          # (L, 1, 3Ep)
    w1, b1 = pad_w(params["w1"]), pad_b(params["b1"])
    w2, b2 = pad_w(params["w2"]), pad_b(params["b2"])
    g, beta = pad_b(params["ln_g"]), pad_b(params["ln_b"])

    xp = jnp.pad(x, ((0, 0), (0, 0), (0, Ep - E)))                  # (B, S, Ep)
    pep = jnp.pad(pe[:S, :], ((0, 0), (0, Ep - E)))                 # (S, Ep)

    kernel = functools.partial(_transformer_layer_kernel,
                               embed=E, embed_pad=Ep, matmul_dtype=matmul_dtype)

    xmap = lambda b, l: (b, 0, 0)          # per-batch activation / output tile
    wmap = lambda b, l: (l, 0, 0)          # per-layer streamed weights
    pemap = lambda b, l: (0, 0)            # single shared PE table

    out = pl.pallas_call(
        kernel,
        out_shape=jax.ShapeDtypeStruct((B, S, Ep), x.dtype),
        grid=(B, L),
        in_specs=[
            pl.BlockSpec((None, S, Ep), xmap),        # x
            pl.BlockSpec((S, Ep), pemap),             # positional encoding
            pl.BlockSpec((None, Ep, 3 * Ep), wmap),   # Wqkv (Q pre-scaled)
            pl.BlockSpec((None, 1, 3 * Ep), wmap),    # bqkv
            pl.BlockSpec((None, 1, Ep), wmap),        # ln gamma
            pl.BlockSpec((None, 1, Ep), wmap),        # ln beta
            pl.BlockSpec((None, Ep, Ep), wmap),       # W1
            pl.BlockSpec((None, 1, Ep), wmap),        # b1
            pl.BlockSpec((None, Ep, Ep), wmap),       # W2
            pl.BlockSpec((None, 1, Ep), wmap),        # b2
        ],
        out_specs=pl.BlockSpec((None, S, Ep), xmap),
        scratch_shapes=[pltpu.VMEM((S, Ep), jnp.float32)],          # residual acc
        compiler_params=pltpu.CompilerParams(
            dimension_semantics=("parallel", "arbitrary"),
            vmem_limit_bytes=48 * 1024 * 1024),
    )(xp, pep, wqkv, bqkv, g, beta, w1, b1, w2, b2)

    return out[:, :, :E]                   # strip lane padding in XLA, not in-kernel


# ----------------------------------------------------------------------------
# Parameter / buffer construction (deterministic, matches PyTorch shapes)
# ----------------------------------------------------------------------------

def make_sinusoidal_pe(embed_size, max_seq_length):
    position = jnp.arange(max_seq_length, dtype=jnp.float32)[:, None]
    div_term = jnp.exp(jnp.arange(0, embed_size, 2, dtype=jnp.float32)
                       * (-math.log(1000.0) / embed_size))
    pe = jnp.zeros((max_seq_length, embed_size), dtype=jnp.float32)
    pe = pe.at[:, 0::2].set(jnp.sin(position * div_term))
    pe = pe.at[:, 1::2].set(jnp.cos(position * div_term))
    return pe


def make_linear(key, in_dim, out_dim):
    # PyTorch nn.Linear style init: U(-1/sqrt(in), 1/sqrt(in)); weight stored
    # (out, in) and used as x @ W.T + b.  Pre-transpose so kernels do x @ W + b.
    kw, kb = jax.random.split(key)
    bound = 1.0 / math.sqrt(in_dim)
    w = jax.random.uniform(kw, (out_dim, in_dim), jnp.float32, -bound, bound)
    b = jax.random.uniform(kb, (out_dim,), jnp.float32, -bound, bound)
    return w.T, b


def make_params(key, embed, num_layers):
    acc = {n: [] for n in ["wq", "bq", "wk", "bk", "wv", "bv",
                           "w1", "b1", "w2", "b2", "ln_g", "ln_b"]}
    pairs = [("wq", "bq"), ("wk", "bk"), ("wv", "bv"), ("w1", "b1"), ("w2", "b2")]
    for k in jax.random.split(key, num_layers):
        ks = jax.random.split(k, 5)
        for (wname, bname), kk in zip(pairs, ks):
            w, b = make_linear(kk, embed, embed)
            acc[wname].append(w)
            acc[bname].append(b)
        acc["ln_g"].append(jnp.ones((embed,), jnp.float32))   # LayerNorm defaults
        acc["ln_b"].append(jnp.zeros((embed,), jnp.float32))
    return {n: jnp.stack(v, axis=0) for n, v in acc.items()}


# ----------------------------------------------------------------------------
# Pure-JAX reference (for a correctness check of the kernel)
# ----------------------------------------------------------------------------

def reference_forward(x, pe, params):
    B, S, E = x.shape
    x = x + pe[:S, :][None]
    L = params["wq"].shape[0]
    scale = 1.0 / math.sqrt(E)
    for l in range(L):
        q = x @ params["wq"][l] + params["bq"][l]
        k = x @ params["wk"][l] + params["bk"][l]
        v = x @ params["wv"][l] + params["bv"][l]
        scores = jnp.einsum("bse,bte->bst", q, k) * scale
        attn = jnp.einsum("bst,bte->bse", scores, v)
        mean = attn.mean(-1, keepdims=True)
        var = ((attn - mean) ** 2).mean(-1, keepdims=True)
        ctx = (attn - mean) * lax.rsqrt(var + 1e-5) * params["ln_g"][l] + params["ln_b"][l]
        h = ctx @ params["w1"][l] + params["b1"][l]
        h = jax.nn.gelu(h, approximate=False)
        h = h @ params["w2"][l] + params["b2"][l]
        h = jax.nn.gelu(h, approximate=False)
        x = h + x
    return x


# ----------------------------------------------------------------------------
# Main
# ----------------------------------------------------------------------------

if __name__ == "__main__":
    EMBED = 32
    NUM_LAYERS = 2
    MAX_SEQ = 16
    BATCH = 2
    SEQ = 8

    root = jax.random.PRNGKey(0)
    k_x, k_p = jax.random.split(root)

    x = jax.random.normal(k_x, (BATCH, SEQ, EMBED), jnp.float32)
    pe = make_sinusoidal_pe(EMBED, MAX_SEQ)
    params = make_params(k_p, EMBED, NUM_LAYERS)

    out = transformer_forward(x, pe, params)
    out = jax.block_until_ready(out)

    ref = reference_forward(x, pe, params)
    assert out.shape == (BATCH, SEQ, EMBED)
    assert jnp.allclose(out, ref, atol=1e-3, rtol=1e-3), "mismatch vs JAX reference"

    print("KERNEL_OK")
</pallas_src>

<mosaic_0001>
module attributes {stable_mosaic.version = 11 : i64} {
  func.func @_transformer_layer_kernel(%arg0: i32, %arg1: i32, %arg2: memref<1x8x128xf32, #tpu.memory_space<vmem>>, %arg3: memref<8x128xf32, #tpu.memory_space<vmem>>, %arg4: memref<1x128x384xf32, #tpu.memory_space<vmem>>, %arg5: memref<1x1x384xf32, #tpu.memory_space<vmem>>, %arg6: memref<1x1x128xf32, #tpu.memory_space<vmem>>, %arg7: memref<1x1x128xf32, #tpu.memory_space<vmem>>, %arg8: memref<1x128x128xf32, #tpu.memory_space<vmem>>, %arg9: memref<1x1x128xf32, #tpu.memory_space<vmem>>, %arg10: memref<1x128x128xf32, #tpu.memory_space<vmem>>, %arg11: memref<1x1x128xf32, #tpu.memory_space<vmem>>, %arg12: memref<1x8x128xf32, #tpu.memory_space<vmem>>, %arg13: memref<8x128xf32, #tpu.memory_space<vmem>>) attributes {dimension_semantics = [#tpu.dimension_semantics<parallel>, #tpu.dimension_semantics<arbitrary>], iteration_bounds = array<i64: 2, 2>, scalar_prefetch = 0 : i64, scratch_operands = 1 : i64, tpu.core_type = #tpu.core_type<tc>, window_params = [{transform_indices = @transform_0, window_bounds = array<i64: 1, 8, 128>}, {pipeline_mode = #tpu.pipeline_mode<synchronous>, transform_indices = @transform_1, window_bounds = array<i64: 8, 128>}, {transform_indices = @transform_2, window_bounds = array<i64: 1, 128, 384>}, {transform_indices = @transform_3, window_bounds = array<i64: 1, 1, 384>}, {transform_indices = @transform_4, window_bounds = array<i64: 1, 1, 128>}, {transform_indices = @transform_5, window_bounds = array<i64: 1, 1, 128>}, {transform_indices = @transform_6, window_bounds = array<i64: 1, 128, 128>}, {transform_indices = @transform_7, window_bounds = array<i64: 1, 1, 128>}, {transform_indices = @transform_8, window_bounds = array<i64: 1, 128, 128>}, {transform_indices = @transform_9, window_bounds = array<i64: 1, 1, 128>}, {transform_indices = @transform_10, window_bounds = array<i64: 1, 8, 128>}]} {
    %c0_i32 = arith.constant 0 : i32
    %0 = arith.cmpi eq, %arg1, %c0_i32 : i32
    %1 = arith.extui %0 : i1 to i32
    %c0_i32_0 = arith.constant 0 : i32
    %2 = arith.cmpi ne, %1, %c0_i32_0 : i32
    scf.if %2 {
      %c0_45 = arith.constant 0 : index
      %c0_46 = arith.constant 0 : index
      %c0_47 = arith.constant 0 : index
      %80 = vector.load %arg2[%c0_45, %c0_46, %c0_47] : memref<1x8x128xf32, #tpu.memory_space<vmem>>, vector<1x8x128xf32>
      %81 = vector.shape_cast %80 : vector<1x8x128xf32> to vector<8x128xf32>
      %c0_48 = arith.constant 0 : index
      %c0_49 = arith.constant 0 : index
      %82 = vector.load %arg3[%c0_48, %c0_49] : memref<8x128xf32, #tpu.memory_space<vmem>>, vector<8x128xf32>
      %83 = arith.addf %81, %82 : vector<8x128xf32>
      %c0_50 = arith.constant 0 : index
      %c0_51 = arith.constant 0 : index
      %84 = vector.load %arg13[%c0_50, %c0_51] : memref<8x128xf32, #tpu.memory_space<vmem>>, vector<8x128xf32>
      tpu.vector_store %arg13[%c0_50, %c0_51], %83 {strides = array<i32>} : memref<8x128xf32, #tpu.memory_space<vmem>>, vector<8x128xf32>,
    } else {
    }
    %c0 = arith.constant 0 : index
    %c0_1 = arith.constant 0 : index
    %3 = vector.load %arg13[%c0, %c0_1] : memref<8x128xf32, #tpu.memory_space<vmem>>, vector<8x128xf32>
    %c0_2 = arith.constant 0 : index
    %c0_3 = arith.constant 0 : index
    %c0_4 = arith.constant 0 : index
    %4 = vector.load %arg4[%c0_2, %c0_3, %c0_4] : memref<1x128x384xf32, #tpu.memory_space<vmem>>, vector<1x128x384xf32>
    %5 = vector.shape_cast %4 : vector<1x128x384xf32> to vector<128x384xf32>
    %cst = arith.constant dense<0.000000e+00> : vector<8x384xf32>
    %6 = tpu.matmul %3, %5, %cst {dimension_numbers = #tpu.dot_dimension_numbers<[1], [0], [0], [1], [0, 0, 1, 1], [], []>, precision = #tpu.contract_precision<fp32>} : vector<8x128xf32>, vector<128x384xf32>, vector<8x384xf32> -> vector<8x384xf32>
    %c0_5 = arith.constant 0 : index
    %c0_6 = arith.constant 0 : index
    %c0_7 = arith.constant 0 : index
    %7 = vector.load %arg5[%c0_5, %c0_6, %c0_7] : memref<1x1x384xf32, #tpu.memory_space<vmem>>, vector<1x1x384xf32>
    %8 = vector.shape_cast %7 : vector<1x1x384xf32> to vector<1x384xf32>
    %9 = vector.broadcast %8 : vector<1x384xf32> to vector<8x384xf32>
    %10 = arith.addf %6, %9 : vector<8x384xf32>
    %11 = vector.extract_strided_slice %10 {offsets = [0, 0], sizes = [8, 128], strides = [1, 1]} : vector<8x384xf32> to vector<8x128xf32>
    %12 = vector.extract_strided_slice %10 {offsets = [0, 128], sizes = [8, 128], strides = [1, 1]} : vector<8x384xf32> to vector<8x128xf32>
    %13 = vector.extract_strided_slice %10 {offsets = [0, 256], sizes = [8, 128], strides = [1, 1]} : vector<8x384xf32> to vector<8x128xf32>
    %cst_8 = arith.constant dense<0.000000e+00> : vector<8x8xf32>
    %14 = tpu.matmul %11, %12, %cst_8 {dimension_numbers = #tpu.dot_dimension_numbers<[1], [1], [0], [0], [0, 0, 1, 0], [], []>, precision = #tpu.contract_precision<fp32>} : vector<8x128xf32>, vector<8x128xf32>, vector<8x8xf32> -> vector<8x8xf32>
    %cst_9 = arith.constant dense<0.000000e+00> : vector<8x128xf32>
    %15 = tpu.matmul %14, %13, %cst_9 {dimension_numbers = #tpu.dot_dimension_numbers<[1], [0], [0], [1], [0, 0, 1, 1], [], []>, precision = #tpu.contract_precision<fp32>} : vector<8x8xf32>, vector<8x128xf32>, vector<8x128xf32> -> vector<8x128xf32>
    %cst_10 = arith.constant dense<0.000000e+00> : vector<8xf32>
    %16 = vector.multi_reduction <add>, %15, %cst_10 [1] : vector<8x128xf32> to vector<8xf32>
    %17 = vector.shape_cast %16 : vector<8xf32> to vector<8x1xf32>
    %cst_11 = arith.constant 3.125000e-02 : f32
    %18 = vector.broadcast %cst_11 : f32 to vector<8x1xf32>
    %19 = arith.mulf %17, %18 : vector<8x1xf32>
    %20 = vector.broadcast %19 : vector<8x1xf32> to vector<8x128xf32>
    %21 = arith.subf %15, %20 : vector<8x128xf32>
    %22 = tpu.iota {dimensions = array<i32: 1>} : vector<8x128xi32>
    %c32_i32 = arith.constant 32 : i32
    %23 = vector.broadcast %c32_i32 : i32 to vector<8x128xi32>
    %24 = arith.cmpi slt, %22, %23 : vector<8x128xi32>
    %cst_12 = arith.constant 0.000000e+00 : f32
    %25 = vector.broadcast %cst_12 : f32 to vector<8x128xf32>
    %26 = arith.select %24, %21, %25 : vector<8x128xi1>, vector<8x128xf32>
    %27 = arith.mulf %26, %26 : vector<8x128xf32>
    %cst_13 = arith.constant dense<0.000000e+00> : vector<8xf32>
    %28 = vector.multi_reduction <add>, %27, %cst_13 [1] : vector<8x128xf32> to vector<8xf32>
    %29 = vector.shape_cast %28 : vector<8xf32> to vector<8x1xf32>
    %cst_14 = arith.constant 3.125000e-02 : f32
    %30 = vector.broadcast %cst_14 : f32 to vector<8x1xf32>
    %31 = arith.mulf %29, %30 : vector<8x1xf32>
    %cst_15 = arith.constant 9.99999974E-6 : f32
    %32 = vector.broadcast %cst_15 : f32 to vector<8x1xf32>
    %33 = arith.addf %31, %32 : vector<8x1xf32>
    %34 = math.rsqrt %33 : vector<8x1xf32>
    %35 = vector.broadcast %34 : vector<8x1xf32> to vector<8x128xf32>
    %36 = arith.mulf %26, %35 : vector<8x128xf32>
    %c0_16 = arith.constant 0 : index
    %c0_17 = arith.constant 0 : index
    %c0_18 = arith.constant 0 : index
    %37 = vector.load %arg6[%c0_16, %c0_17, %c0_18] : memref<1x1x128xf32, #tpu.memory_space<vmem>>, vector<1x1x128xf32>
    %38 = vector.shape_cast %37 : vector<1x1x128xf32> to vector<1x128xf32>
    %39 = vector.broadcast %38 : vector<1x128xf32> to vector<8x128xf32>
    %40 = arith.mulf %36, %39 : vector<8x128xf32>
    %c0_19 = arith.constant 0 : index
    %c0_20 = arith.constant 0 : index
    %c0_21 = arith.constant 0 : index
    %41 = vector.load %arg7[%c0_19, %c0_20, %c0_21] : memref<1x1x128xf32, #tpu.memory_space<vmem>>, vector<1x1x128xf32>
    %42 = vector.shape_cast %41 : vector<1x1x128xf32> to vector<1x128xf32>
    %43 = vector.broadcast %42 : vector<1x128xf32> to vector<8x128xf32>
    %44 = arith.addf %40, %43 : vector<8x128xf32>
    %c0_22 = arith.constant 0 : index
    %c0_23 = arith.constant 0 : index
    %c0_24 = arith.constant 0 : index
    %45 = vector.load %arg8[%c0_22, %c0_23, %c0_24] : memref<1x128x128xf32, #tpu.memory_space<vmem>>, vector<1x128x128xf32>
    %46 = vector.shape_cast %45 : vector<1x128x128xf32> to vector<128x128xf32>
    %cst_25 = arith.constant dense<0.000000e+00> : vector<8x128xf32>
    %47 = tpu.matmul %44, %46, %cst_25 {dimension_numbers = #tpu.dot_dimension_numbers<[1], [0], [0], [1], [0, 0, 1, 1], [], []>, precision = #tpu.contract_precision<fp32>} : vector<8x128xf32>, vector<128x128xf32>, vector<8x128xf32> -> vector<8x128xf32>
    %c0_26 = arith.constant 0 : index
    %c0_27 = arith.constant 0 : index
    %c0_28 = arith.constant 0 : index
    %48 = vector.load %arg9[%c0_26, %c0_27, %c0_28] : memref<1x1x128xf32, #tpu.memory_space<vmem>>, vector<1x1x128xf32>
    %49 = vector.shape_cast %48 : vector<1x1x128xf32> to vector<1x128xf32>
    %50 = vector.broadcast %49 : vector<1x128xf32> to vector<8x128xf32>
    %51 = arith.addf %47, %50 : vector<8x128xf32>
    %cst_29 = arith.constant 5.000000e-01 : f32
    %52 = vector.broadcast %cst_29 : f32 to vector<8x128xf32>
    %53 = arith.mulf %52, %51 : vector<8x128xf32>
    %cst_30 = arith.constant 0.707106769 : f32
    %54 = vector.broadcast %cst_30 : f32 to vector<8x128xf32>
    %55 = arith.mulf %51, %54 : vector<8x128xf32>
    %56 = math.erf %55 : vector<8x128xf32>
    %cst_31 = arith.constant 1.000000e+00 : f32
    %57 = vector.broadcast %cst_31 : f32 to vector<8x128xf32>
    %58 = arith.addf %57, %56 : vector<8x128xf32>
    %59 = arith.mulf %53, %58 : vector<8x128xf32>
    %c0_32 = arith.constant 0 : index
    %c0_33 = arith.constant 0 : index
    %c0_34 = arith.constant 0 : index
    %60 = vector.load %arg10[%c0_32, %c0_33, %c0_34] : memref<1x128x128xf32, #tpu.memory_space<vmem>>, vector<1x128x128xf32>
    %61 = vector.shape_cast %60 : vector<1x128x128xf32> to vector<128x128xf32>
    %cst_35 = arith.constant dense<0.000000e+00> : vector<8x128xf32>
    %62 = tpu.matmul %59, %61, %cst_35 {dimension_numbers = #tpu.dot_dimension_numbers<[1], [0], [0], [1], [0, 0, 1, 1], [], []>, precision = #tpu.contract_precision<fp32>} : vector<8x128xf32>, vector<128x128xf32>, vector<8x128xf32> -> vector<8x128xf32>
    %c0_36 = arith.constant 0 : index
    %c0_37 = arith.constant 0 : index
    %c0_38 = arith.constant 0 : index
    %63 = vector.load %arg11[%c0_36, %c0_37, %c0_38] : memref<1x1x128xf32, #tpu.memory_space<vmem>>, vector<1x1x128xf32>
    %64 = vector.shape_cast %63 : vector<1x1x128xf32> to vector<1x128xf32>
    %65 = vector.broadcast %64 : vector<1x128xf32> to vector<8x128xf32>
    %66 = arith.addf %62, %65 : vector<8x128xf32>
    %cst_39 = arith.constant 5.000000e-01 : f32
    %67 = vector.broadcast %cst_39 : f32 to vector<8x128xf32>
    %68 = arith.mulf %67, %66 : vector<8x128xf32>
    %cst_40 = arith.constant 0.707106769 : f32
    %69 = vector.broadcast %cst_40 : f32 to vector<8x128xf32>
    %70 = arith.mulf %66, %69 : vector<8x128xf32>
    %71 = math.erf %70 : vector<8x128xf32>
    %cst_41 = arith.constant 1.000000e+00 : f32
    %72 = vector.broadcast %cst_41 : f32 to vector<8x128xf32>
    %73 = arith.addf %72, %71 : vector<8x128xf32>
    %74 = arith.mulf %68, %73 : vector<8x128xf32>
    %75 = arith.addf %74, %3 : vector<8x128xf32>
    %c0_42 = arith.constant 0 : index
    %c0_43 = arith.constant 0 : index
    %76 = vector.load %arg13[%c0_42, %c0_43] : memref<8x128xf32, #tpu.memory_space<vmem>>, vector<8x128xf32>
    tpu.vector_store %arg13[%c0_42, %c0_43], %75 {strides = array<i32>} : memref<8x128xf32, #tpu.memory_space<vmem>>, vector<8x128xf32>,
    %c1_i32 = arith.constant 1 : i32
    %77 = arith.cmpi eq, %arg1, %c1_i32 : i32
    %78 = arith.extui %77 : i1 to i32
    %c0_i32_44 = arith.constant 0 : i32
    %79 = arith.cmpi ne, %78, %c0_i32_44 : i32
    scf.if %79 {
      %c0_45 = arith.constant 0 : index
      %c0_46 = arith.constant 0 : index
      %c0_47 = arith.constant 0 : index
      %80 = vector.load %arg12[%c0_45, %c0_46, %c0_47] : memref<1x8x128xf32, #tpu.memory_space<vmem>>, vector<1x8x128xf32>
      %81 = vector.shape_cast %80 : vector<1x8x128xf32> to vector<8x128xf32>
      %82 = vector.shape_cast %75 : vector<8x128xf32> to vector<1x8x128xf32>
      tpu.vector_store %arg12[%c0_45, %c0_46, %c0_47], %82 {strides = array<i32>} : memref<1x8x128xf32, #tpu.memory_space<vmem>>, vector<1x8x128xf32>,
    } else {
    }
    return
  }
  func.func @transform_0(%arg0: i32, %arg1: i32) -> (i32, i32, i32) {
    %c0_i32 = arith.constant 0 : i32
    %c0_i32_0 = arith.constant 0 : i32
    %c0_i32_1 = arith.constant 0 : i32
    return %arg0, %c0_i32, %c0_i32_0 : i32, i32, i32
  }
  func.func @transform_1(%arg0: i32, %arg1: i32) -> (i32, i32) {
    %c0_i32 = arith.constant 0 : i32
    %c0_i32_0 = arith.constant 0 : i32
    %c0_i32_1 = arith.constant 0 : i32
    return %c0_i32, %c0_i32_0 : i32, i32
  }
  func.func @transform_2(%arg0: i32, %arg1: i32) -> (i32, i32, i32) {
    %c0_i32 = arith.constant 0 : i32
    %c0_i32_0 = arith.constant 0 : i32
    %c0_i32_1 = arith.constant 0 : i32
    return %arg1, %c0_i32, %c0_i32_0 : i32, i32, i32
  }
  func.func @transform_3(%arg0: i32, %arg1: i32) -> (i32, i32, i32) {
    %c0_i32 = arith.constant 0 : i32
    %c0_i32_0 = arith.constant 0 : i32
    %c0_i32_1 = arith.constant 0 : i32
    return %arg1, %c0_i32, %c0_i32_0 : i32, i32, i32
  }
  func.func @transform_4(%arg0: i32, %arg1: i32) -> (i32, i32, i32) {
    %c0_i32 = arith.constant 0 : i32
    %c0_i32_0 = arith.constant 0 : i32
    %c0_i32_1 = arith.constant 0 : i32
    return %arg1, %c0_i32, %c0_i32_0 : i32, i32, i32
  }
  func.func @transform_5(%arg0: i32, %arg1: i32) -> (i32, i32, i32) {
    %c0_i32 = arith.constant 0 : i32
    %c0_i32_0 = arith.constant 0 : i32
    %c0_i32_1 = arith.constant 0 : i32
    return %arg1, %c0_i32, %c0_i32_0 : i32, i32, i32
  }
  func.func @transform_6(%arg0: i32, %arg1: i32) -> (i32, i32, i32) {
    %c0_i32 = arith.constant 0 : i32
    %c0_i32_0 = arith.constant 0 : i32
    %c0_i32_1 = arith.constant 0 : i32
    return %arg1, %c0_i32, %c0_i32_0 : i32, i32, i32
  }
  func.func @transform_7(%arg0: i32, %arg1: i32) -> (i32, i32, i32) {
    %c0_i32 = arith.constant 0 : i32
    %c0_i32_0 = arith.constant 0 : i32
    %c0_i32_1 = arith.constant 0 : i32
    return %arg1, %c0_i32, %c0_i32_0 : i32, i32, i32
  }
  func.func @transform_8(%arg0: i32, %arg1: i32) -> (i32, i32, i32) {
    %c0_i32 = arith.constant 0 : i32
    %c0_i32_0 = arith.constant 0 : i32
    %c0_i32_1 = arith.constant 0 : i32
    return %arg1, %c0_i32, %c0_i32_0 : i32, i32, i32
  }
  func.func @transform_9(%arg0: i32, %arg1: i32) -> (i32, i32, i32) {
    %c0_i32 = arith.constant 0 : i32
    %c0_i32_0 = arith.constant 0 : i32
    %c0_i32_1 = arith.constant 0 : i32
    return %arg1, %c0_i32, %c0_i32_0 : i32, i32, i32
  }
  func.func @transform_10(%arg0: i32, %arg1: i32) -> (i32, i32, i32) {
    %c0_i32 = arith.constant 0 : i32
    %c0_i32_0 = arith.constant 0 : i32
    %c0_i32_1 = arith.constant 0 : i32
    return %arg0, %c0_i32, %c0_i32_0 : i32, i32, i32
  }
}

</mosaic_0001>

<llo_original>
// kernel: tpu_custom_call.1
$region0: #{tpu_custom_call.1}
  #allocation0 [shape = 'u32[]', space=smem, size = 0x4, offset = 0x4, fixed_abs, tag = 'smem constant byte address 0x4 - core index']
  #allocation1 [shape = 'u32[144,128]{1,0:T(1,128)}', space=vmem, size = 0x12000, scoped, tag = 'internal scratch']
  #allocation2 [shape = 'f32[8,128]{1,0:T(8,128)}', space=vmem, size = 0x1000, scoped, tag = 'scratch operand']
  %s0 = inlined_call_operand.hbm [shape: f32[2,8,128], index: 0, kind: input, shape index: {}]
  %s1 = inlined_call_operand.hbm [shape: f32[8,128], index: 1, kind: input, shape index: {}]
  %s2 = inlined_call_operand.hbm [shape: f32[2,128,384], index: 2, kind: input, shape index: {}]
  %s3 = inlined_call_operand.vmem [shape: f32[2,1,384], index: 3, kind: input, shape index: {}]
  %s4 = inlined_call_operand.vmem [shape: f32[2,1,128], index: 4, kind: input, shape index: {}]
  %s5 = inlined_call_operand.vmem [shape: f32[2,1,128], index: 5, kind: input, shape index: {}]
  %s6 = inlined_call_operand.hbm [shape: f32[2,128,128], index: 6, kind: input, shape index: {}]
  %s7 = inlined_call_operand.vmem [shape: f32[2,1,128], index: 7, kind: input, shape index: {}]
  %s8 = inlined_call_operand.hbm [shape: f32[2,128,128], index: 8, kind: input, shape index: {}]
  %s9 = inlined_call_operand.vmem [shape: f32[2,1,128], index: 9, kind: input, shape index: {}]
  %s10 = inlined_call_operand.hbm [shape: f32[2,8,128], index: 10, kind: output, shape index: {}]
  %s11 = sld [smem:[#allocation0]]
  $region101: #{tpu_custom_call.1} parent=0
    _
  %s13 = ssub.s32 1, %s11
  %s14 = scalar_select 0, %s13, %s11
  $region1: #{tpu_custom_call.1} parent=0
    #allocation3 [shape = 'u8[8192]{0}', space=vmem, size = 0x2000, scoped, tag = 'input window, operand 0']
    #allocation4 [shape = 's32[2]{0}', space=sflag, size = 0x8, scoped, tag = 'scoped memory for tpu_custom_call.1']
    #allocation5 [shape = 's32[2]{0}', space=sflag, size = 0x8, scoped, tag = 'scoped memory for tpu_custom_call.1']
    #allocation6 [shape = 'u8[4096]{0}', space=vmem, size = 0x1000, scoped, tag = 'input window, operand 1, single buffered']
    #allocation7 [shape = 's32[1]{0}', space=sflag, size = 0x4, scoped, tag = 'scoped memory for tpu_custom_call.1']
    #allocation8 [shape = 'u8[393216]{0}', space=vmem, size = 0x60000, scoped, tag = 'input window, operand 2']
    #allocation9 [shape = 'u8[131072]{0}', space=vmem, size = 0x20000, scoped, tag = 'input window, operand 6']
    #allocation10 [shape = 'u8[131072]{0}', space=vmem, size = 0x20000, scoped, tag = 'input window, operand 8']
    #allocation11 [shape = 'u8[8192]{0}', space=vmem, size = 0x2000, scoped, tag = 'output window, operand 0']
    %15 = vsyncpa [#allocation4], 0
    %s16 = scalar_lea.sflag [#allocation4], 1
    %17 = vsyncpa %s16, 0
    %18 = vsyncpa [#allocation7], 0
    %19 = vsyncpa [#allocation5], 0
    %s20 = scalar_lea.sflag [#allocation5], 1
    %21 = vsyncpa %s20, 0
    loop: start=0, step=1, limit=6
    $region2: #{tpu_custom_call.1} parent=1 // loop_pre_header
      _
    $region3: #{tpu_custom_call.1} parent=1 // loop_header
      %s23 = sphi 0, %s27
      %p24 = scmp.ge.s32.totalorder %s23, 6
      %s30 = sphi 0, %s42
      %s31 = sphi 0, %s38
      %s32 = sphi 0, %s30
      %s33 = sphi 0, %s31
      %s34 = sphi 0, %s32
      %s35 = sphi 0, %s33
      %s45 = sphi 0, %s47
      %s48 = sphi 0, %s45
      %s49 = sphi 0, %s48
      %s65 = sphi 0, %s49
      %s69 = sphi 0, %s69
      %s71 = sphi 0, %s69
      %s72 = sphi 0, %s71
      %s86 = sphi 0, %s72
      %s92 = sphi 0, %s94
      %s95 = sphi 0, %s92
      %s96 = sphi 0, %s95
      %s112 = sphi 0, %s96
      %s118 = sphi 0, %s120
      %s121 = sphi 0, %s118
      %s122 = sphi 0, %s121
      %s138 = sphi 0, %s122
      %s144 = sphi 0, %s146
      %s147 = sphi 0, %s144
      %s148 = sphi 0, %s147
      %s164 = sphi 0, %s148
      %s170 = sphi 0, %s172
      %s173 = sphi 0, %s170
      %s174 = sphi 0, %s173
      %s190 = sphi 0, %s174
      %s196 = sphi 0, %s198
      %s199 = sphi 0, %s196
      %s200 = sphi 0, %s199
      %s216 = sphi 0, %s200
      %s222 = sphi 0, %s224
      %s225 = sphi 0, %s222
      %s226 = sphi 0, %s225
      %s242 = sphi 0, %s226
      %s248 = sphi 0, %s250
      %s251 = sphi 0, %s248
      %s252 = sphi 0, %s251
      %s268 = sphi 0, %s252
      %s274 = sphi 0, %s276
      %s277 = sphi 0, %s274
      %s278 = sphi 0, %s277
      %s294 = sphi 0, %s278
      %s300 = sphi 0, %s302
      %s303 = sphi 0, %s300
      %s304 = sphi 0, %s303
      %s320 = sphi 0, %s304
    $region4: #{tpu_custom_call.1} parent=1 // loop_header_branch
      %26 = sbr.rel (%p24) target = $region8
    $region5: #{tpu_custom_call.1} parent=1 // loop_body
      %s28 = ssub.s32 %s23, 1
      %s29 = ssub.s32 %s23, 2
      %s36 = sadd.s32 1, %s31
      %p37 = scmp.ge.s32.totalorder %s36, 2
      %s38 = scalar_select %p37, 0, %s36
      %s39 = sadd.s32 1, %s30
      %s40 = scalar_select %p37, %s39, %s30
      %p41 = scmp.ge.s32.totalorder %s40, 2
      %s42 = scalar_select %p41, 0, %s40
      %s43 = ssub.s32 %s30, %s42
      %p44 = scmp.eq.s32.totalorder %s43, 0
      %s46 = sadd.s32 %s45, 1
      %s47 = scalar_select %p44, %s45, %s46
      %p50 = pneg %p44
      %p51 = scmp.eq.s32.totalorder %s23, 3
      %p52 = por %p50, %p51
      %p53 = scmp.ne.s32.totalorder %s45, %s48
      %p54 = scmp.eq.s32.totalorder %s23, 0
      %p55 = por %p53, %p54
      %p56 = scmp.ne.s32.totalorder %s45, %s48
      %p57 = scmp.eq.s32.totalorder %s28, 3
      %p58 = por %p56, %p57
      %p59 = scmp.ne.s32.totalorder %s48, %s49
      %p60 = scmp.eq.s32.totalorder %s28, 0
      %p61 = por %p59, %p60
      %p62 = scmp.ne.s32.totalorder %s48, %s49
      %p63 = scmp.eq.s32.totalorder %s29, 3
      %p64 = por %p62, %p63
      %p66 = scmp.ne.s32.totalorder %s49, %s65
      %p67 = scmp.eq.s32.totalorder %s29, 0
      %p68 = por %p66, %p67
      %s70 = sadd.s32 %s69, 1
      %p73 = scmp.eq.s32.totalorder %s23, 3
      %p74 = scmp.ne.s32.totalorder %s69, %s71
      %p75 = scmp.eq.s32.totalorder %s23, 0
      %p76 = por %p74, %p75
      %p77 = scmp.ne.s32.totalorder %s69, %s71
      %p78 = scmp.eq.s32.totalorder %s28, 3
      %p79 = por %p77, %p78
      %p80 = scmp.ne.s32.totalorder %s71, %s72
      %p81 = scmp.eq.s32.totalorder %s28, 0
      %p82 = por %p80, %p81
      %p83 = scmp.ne.s32.totalorder %s71, %s72
      %p84 = scmp.eq.s32.totalorder %s29, 3
      %p85 = por %p83, %p84
      %p87 = scmp.ne.s32.totalorder %s72, %s86
      %p88 = scmp.eq.s32.totalorder %s29, 0
      %p89 = por %p87, %p88
      %s90 = ssub.s32 %s31, %s38
      %p91 = scmp.eq.s32.totalorder %s90, 0
      %s93 = sadd.s32 %s92, 1
      %s94 = scalar_select %p91, %s92, %s93
      %p97 = pneg %p91
      %p98 = scmp.eq.s32.totalorder %s23, 3
      %p99 = por %p97, %p98
      %p100 = scmp.ne.s32.totalorder %s92, %s95
      %p101 = scmp.eq.s32.totalorder %s23, 0
      %p102 = por %p100, %p101
      %p103 = scmp.ne.s32.totalorder %s92, %s95
      %p104 = scmp.eq.s32.totalorder %s28, 3
      %p105 = por %p103, %p104
      %p106 = scmp.ne.s32.totalorder %s95, %s96
      %p107 = scmp.eq.s32.totalorder %s28, 0
      %p108 = por %p106, %p107
      %p109 = scmp.ne.s32.totalorder %s95, %s96
      %p110 = scmp.eq.s32.totalorder %s29, 3
      %p111 = por %p109, %p110
      %p113 = scmp.ne.s32.totalorder %s96, %s112
      %p114 = scmp.eq.s32.totalorder %s29, 0
      %p115 = por %p113, %p114
      %s116 = ssub.s32 %s31, %s38
      %p117 = scmp.eq.s32.totalorder %s116, 0
      %s119 = sadd.s32 %s118, 1
      %s120 = scalar_select %p117, %s118, %s119
      %p123 = pneg %p117
      %p124 = scmp.eq.s32.totalorder %s23, 3
      %p125 = por %p123, %p124
      %p126 = scmp.ne.s32.totalorder %s118, %s121
      %p127 = scmp.eq.s32.totalorder %s23, 0
      %p128 = por %p126, %p127
      %p129 = scmp.ne.s32.totalorder %s118, %s121
      %p130 = scmp.eq.s32.totalorder %s28, 3
      %p131 = por %p129, %p130
      %p132 = scmp.ne.s32.totalorder %s121, %s122
      %p133 = scmp.eq.s32.totalorder %s28, 0
      %p134 = por %p132, %p133
      %p135 = scmp.ne.s32.totalorder %s121, %s122
      %p136 = scmp.eq.s32.totalorder %s29, 3
      %p137 = por %p135, %p136
      %p139 = scmp.ne.s32.totalorder %s122, %s138
      %p140 = scmp.eq.s32.totalorder %s29, 0
      %p141 = por %p139, %p140
      %s142 = ssub.s32 %s31, %s38
      %p143 = scmp.eq.s32.totalorder %s142, 0
      %s145 = sadd.s32 %s144, 1
      %s146 = scalar_select %p143, %s144, %s145
      %p149 = pneg %p143
      %p150 = scmp.eq.s32.totalorder %s23, 3
      %p151 = por %p149, %p150
      %p152 = scmp.ne.s32.totalorder %s144, %s147
      %p153 = scmp.eq.s32.totalorder %s23, 0
      %p154 = por %p152, %p153
      %p155 = scmp.ne.s32.totalorder %s144, %s147
      %p156 = scmp.eq.s32.totalorder %s28, 3
      %p157 = por %p155, %p156
      %p158 = scmp.ne.s32.totalorder %s147, %s148
      %p159 = scmp.eq.s32.totalorder %s28, 0
      %p160 = por %p158, %p159
      %p161 = scmp.ne.s32.totalorder %s147, %s148
      %p162 = scmp.eq.s32.totalorder %s29, 3
      %p163 = por %p161, %p162
      %p165 = scmp.ne.s32.totalorder %s148, %s164
      %p166 = scmp.eq.s32.totalorder %s29, 0
      %p167 = por %p165, %p166
      %s168 = ssub.s32 %s31, %s38
      %p169 = scmp.eq.s32.totalorder %s168, 0
      %s171 = sadd.s32 %s170, 1
      %s172 = scalar_select %p169, %s170, %s171
      %p175 = pneg %p169
      %p176 = scmp.eq.s32.totalorder %s23, 3
      %p177 = por %p175, %p176
      %p178 = scmp.ne.s32.totalorder %s170, %s173
      %p179 = scmp.eq.s32.totalorder %s23, 0
      %p180 = por %p178, %p179
      %p181 = scmp.ne.s32.totalorder %s170, %s173
      %p182 = scmp.eq.s32.totalorder %s28, 3
      %p183 = por %p181, %p182
      %p184 = scmp.ne.s32.totalorder %s173, %s174
      %p185 = scmp.eq.s32.totalorder %s28, 0
      %p186 = por %p184, %p185
      %p187 = scmp.ne.s32.totalorder %s173, %s174
      %p188 = scmp.eq.s32.totalorder %s29, 3
      %p189 = por %p187, %p188
      %p191 = scmp.ne.s32.totalorder %s174, %s190
      %p192 = scmp.eq.s32.totalorder %s29, 0
      %p193 = por %p191, %p192
      %s194 = ssub.s32 %s31, %s38
      %p195 = scmp.eq.s32.totalorder %s194, 0
      %s197 = sadd.s32 %s196, 1
      %s198 = scalar_select %p195, %s196, %s197
      %p201 = pneg %p195
      %p202 = scmp.eq.s32.totalorder %s23, 3
      %p203 = por %p201, %p202
      %p204 = scmp.ne.s32.totalorder %s196, %s199
      %p205 = scmp.eq.s32.totalorder %s23, 0
      %p206 = por %p204, %p205
      %p207 = scmp.ne.s32.totalorder %s196, %s199
      %p208 = scmp.eq.s32.totalorder %s28, 3
      %p209 = por %p207, %p208
      %p210 = scmp.ne.s32.totalorder %s199, %s200
      %p211 = scmp.eq.s32.totalorder %s28, 0
      %p212 = por %p210, %p211
      %p213 = scmp.ne.s32.totalorder %s199, %s200
      %p214 = scmp.eq.s32.totalorder %s29, 3
      %p215 = por %p213, %p214
      %p217 = scmp.ne.s32.totalorder %s200, %s216
      %p218 = scmp.eq.s32.totalorder %s29, 0
      %p219 = por %p217, %p218
      %s220 = ssub.s32 %s31, %s38
      %p221 = scmp.eq.s32.totalorder %s220, 0
      %s223 = sadd.s32 %s222, 1
      %s224 = scalar_select %p221, %s222, %s223
      %p227 = pneg %p221
      %p228 = scmp.eq.s32.totalorder %s23, 3
      %p229 = por %p227, %p228
      %p230 = scmp.ne.s32.totalorder %s222, %s225
      %p231 = scmp.eq.s32.totalorder %s23, 0
      %p232 = por %p230, %p231
      %p233 = scmp.ne.s32.totalorder %s222, %s225
      %p234 = scmp.eq.s32.totalorder %s28, 3
      %p235 = por %p233, %p234
      %p236 = scmp.ne.s32.totalorder %s225, %s226
      %p237 = scmp.eq.s32.totalorder %s28, 0
      %p238 = por %p236, %p237
      %p239 = scmp.ne.s32.totalorder %s225, %s226
      %p240 = scmp.eq.s32.totalorder %s29, 3
      %p241 = por %p239, %p240
      %p243 = scmp.ne.s32.totalorder %s226, %s242
      %p244 = scmp.eq.s32.totalorder %s29, 0
      %p245 = por %p243, %p244
      %s246 = ssub.s32 %s31, %s38
      %p247 = scmp.eq.s32.totalorder %s246, 0
      %s249 = sadd.s32 %s248, 1
      %s250 = scalar_select %p247, %s248, %s249
      %p253 = pneg %p247
      %p254 = scmp.eq.s32.totalorder %s23, 3
      %p255 = por %p253, %p254
      %p256 = scmp.ne.s32.totalorder %s248, %s251
      %p257 = scmp.eq.s32.totalorder %s23, 0
      %p258 = por %p256, %p257
      %p259 = scmp.ne.s32.totalorder %s248, %s251
      %p260 = scmp.eq.s32.totalorder %s28, 3
      %p261 = por %p259, %p260
      %p262 = scmp.ne.s32.totalorder %s251, %s252
      %p263 = scmp.eq.s32.totalorder %s28, 0
      %p264 = por %p262, %p263
      %p265 = scmp.ne.s32.totalorder %s251, %s252
      %p266 = scmp.eq.s32.totalorder %s29, 3
      %p267 = por %p265, %p266
      %p269 = scmp.ne.s32.totalorder %s252, %s268
      %p270 = scmp.eq.s32.totalorder %s29, 0
      %p271 = por %p269, %p270
      %s272 = ssub.s32 %s31, %s38
      %p273 = scmp.eq.s32.totalorder %s272, 0
      %s275 = sadd.s32 %s274, 1
      %s276 = scalar_select %p273, %s274, %s275
      %p279 = pneg %p273
      %p280 = scmp.eq.s32.totalorder %s23, 3
      %p281 = por %p279, %p280
      %p282 = scmp.ne.s32.totalorder %s274, %s277
      %p283 = scmp.eq.s32.totalorder %s23, 0
      %p284 = por %p282, %p283
      %p285 = scmp.ne.s32.totalorder %s274, %s277
      %p286 = scmp.eq.s32.totalorder %s28, 3
      %p287 = por %p285, %p286
      %p288 = scmp.ne.s32.totalorder %s277, %s278
      %p289 = scmp.eq.s32.totalorder %s28, 0
      %p290 = por %p288, %p289
      %p291 = scmp.ne.s32.totalorder %s277, %s278
      %p292 = scmp.eq.s32.totalorder %s29, 3
      %p293 = por %p291, %p292
      %p295 = scmp.ne.s32.totalorder %s278, %s294
      %p296 = scmp.eq.s32.totalorder %s29, 0
      %p297 = por %p295, %p296
      %s298 = ssub.s32 %s30, %s42
      %p299 = scmp.eq.s32.totalorder %s298, 0
      %s301 = sadd.s32 %s300, 1
      %s302 = scalar_select %p299, %s300, %s301
      %p305 = pneg %p299
      %p306 = scmp.eq.s32.totalorder %s23, 3
      %p307 = por %p305, %p306
      %p308 = scmp.ne.s32.totalorder %s300, %s303
      %p309 = scmp.eq.s32.totalorder %s23, 0
      %p310 = por %p308, %p309
      %p311 = scmp.ne.s32.totalorder %s300, %s303
      %p312 = scmp.eq.s32.totalorder %s28, 3
      %p313 = por %p311, %p312
      %p314 = scmp.ne.s32.totalorder %s303, %s304
      %p315 = scmp.eq.s32.totalorder %s28, 0
      %p316 = por %p314, %p315
      %p317 = scmp.ne.s32.totalorder %s303, %s304
      %p318 = scmp.eq.s32.totalorder %s29, 3
      %p319 = por %p317, %p318
      %p321 = scmp.ne.s32.totalorder %s304, %s320
      %p322 = scmp.eq.s32.totalorder %s29, 0
      %p323 = por %p321, %p322
      %p324 = scmp.le.s32.totalorder 1, %s23
      %p325 = scmp.lt.s32.totalorder %s23, 5
      %p326 = pnand %p324, %p325
      %p327 = pneg %p326
      // Predicated region
      $region9: #{tpu_custom_call.1} parent=5 // pred_check
        _
      $region10: #{tpu_custom_call.1} parent=5 // pred_check_branch
        %329 = sbr.rel (%p326) target = $region12
      $region11: #{tpu_custom_call.1} parent=5 // pred_region
        %s330 = ssub.s32 %s23, 1
        // Predicated region
        $region13: #{tpu_custom_call.1} parent=11 // pred_check
          %p331 = pneg %p82
        $region14: #{tpu_custom_call.1} parent=11 // pred_check_branch
          %333 = sbr.rel (%p331) target = $region16
        $region15: #{tpu_custom_call.1} parent=11 // pred_region
          %s335 = ssub.s32 128, 128
          %336 = vsyncadd [#allocation7], %s335
          %s338 = sshll.u32 [#allocation6], 4
          %s339 = int_to_ptr.vmem [resolvable:$true] %s338
          %341 = dma.hbm_to_vmem [thread:$0]  %s1, 128, %s339, [#allocation7]
        $region16: #{tpu_custom_call.1} parent=11 // pred_fallthru
          _
      $region12: #{tpu_custom_call.1} parent=5 // pred_fallthru
        _
      %p342 = scmp.lt.s32.totalorder %s23, 4
      // Predicated region
      $region17: #{tpu_custom_call.1} parent=5 // pred_check
        %p343 = pneg %p342
      $region18: #{tpu_custom_call.1} parent=5 // pred_check_branch
        %345 = sbr.rel (%p343) target = $region20
      $region19: #{tpu_custom_call.1} parent=5 // pred_region
        // Predicated region
        $region21: #{tpu_custom_call.1} parent=19 // pred_check
          %p346 = pneg %p55
        $region22: #{tpu_custom_call.1} parent=19 // pred_check_branch
          %348 = sbr.rel (%p346) target = $region24
        $region23: #{tpu_custom_call.1} parent=19 // pred_region
          %s349 = sand.u32 %s23, 1
          %s350 = scalar_lea.sflag [#allocation4], %s349
          %s351 = sand.u32 %s45, 1
          %s352 = smul.addr %s351, 8
          %s353 = scalar_lea.vmem [#allocation3], %s352
          %s355 = ssub.s32 128, 128
          %356 = vsyncadd %s350, %s355
          %s357 = smul.addr %s30, 128
          %s358 = scalar_lea.hbm %s0, %s357
          %s360 = sshll.u32 %s353, 4
          %s361 = int_to_ptr.vmem [resolvable:$true] %s360
          %363 = dma.hbm_to_vmem [thread:$0]  %s358, 128, %s361, %s350
        $region24: #{tpu_custom_call.1} parent=19 // pred_fallthru
          _
        // Predicated region
        $region25: #{tpu_custom_call.1} parent=19 // pred_check
          %p364 = pneg %p102
        $region26: #{tpu_custom_call.1} parent=19 // pred_check_branch
          %366 = sbr.rel (%p364) target = $region28
        $region27: #{tpu_custom_call.1} parent=19 // pred_region
          %s367 = sand.u32 %s23, 1
          %s368 = scalar_lea.sflag [#allocation4], %s367
          %s369 = sand.u32 %s92, 1
          %s370 = smul.addr %s369, 384
          %s371 = scalar_lea.vmem [#allocation8], %s370
          %s373 = ssub.s32 6144, 6144
          %374 = vsyncadd %s368, %s373
          %s375 = smul.addr %s31, 48
          %s376 = smul.addr %s375, 128
          %s377 = scalar_lea.hbm %s2, %s376
          %s378 = sshll.u32 %s371, 4
          %s379 = int_to_ptr.vmem [resolvable:$true] %s378
          %384 = dma.hbm_to_vmem [thread:$0]  %s377, 6144, %s379, %s368, 384, 384, 24
        $region28: #{tpu_custom_call.1} parent=19 // pred_fallthru
          _
        // Predicated region
        $region29: #{tpu_custom_call.1} parent=19 // pred_check
          %p385 = pneg %p128
        $region30: #{tpu_custom_call.1} parent=19 // pred_check_branch
          %387 = sbr.rel (%p385) target = $region32
        $region31: #{tpu_custom_call.1} parent=19 // pred_region
          %p388 = scmp.lt.s32.totalorder %s31, 1
          %s389 = scalar_select %p388, %s31, 1
          %s390 = smul.addr %s389, 3
          %s391 = scalar_lea.vmem %s3, %s390
        $region32: #{tpu_custom_call.1} parent=19 // pred_fallthru
          _
        // Predicated region
        $region33: #{tpu_custom_call.1} parent=19 // pred_check
          %p392 = pneg %p154
        $region34: #{tpu_custom_call.1} parent=19 // pred_check_branch
          %394 = sbr.rel (%p392) target = $region36
        $region35: #{tpu_custom_call.1} parent=19 // pred_region
          %p395 = scmp.lt.s32.totalorder %s31, 1
          %s396 = scalar_select %p395, %s31, 1
          %s397 = scalar_lea.vmem %s4, %s396
        $region36: #{tpu_custom_call.1} parent=19 // pred_fallthru
          _
        // Predicated region
        $region37: #{tpu_custom_call.1} parent=19 // pred_check
          %p398 = pneg %p180
        $region38: #{tpu_custom_call.1} parent=19 // pred_check_branch
          %400 = sbr.rel (%p398) target = $region40
        $region39: #{tpu_custom_call.1} parent=19 // pred_region
          %p401 = scmp.lt.s32.totalorder %s31, 1
          %s402 = scalar_select %p401, %s31, 1
          %s403 = scalar_lea.vmem %s5, %s402
        $region40: #{tpu_custom_call.1} parent=19 // pred_fallthru
          _
        // Predicated region
        $region41: #{tpu_custom_call.1} parent=19 // pred_check
          %p404 = pneg %p206
        $region42: #{tpu_custom_call.1} parent=19 // pred_check_branch
          %406 = sbr.rel (%p404) target = $region44
        $region43: #{tpu_custom_call.1} parent=19 // pred_region
          %s407 = sand.u32 %s23, 1
          %s408 = scalar_lea.sflag [#allocation4], %s407
          %s409 = sand.u32 %s196, 1
          %s410 = smul.addr %s409, 128
          %s411 = scalar_lea.vmem [#allocation9], %s410
          %s413 = ssub.s32 2048, 2048
          %414 = vsyncadd %s408, %s413
          %s415 = smul.addr %s31, 16
          %s416 = smul.addr %s415, 128
          %s417 = scalar_lea.hbm %s6, %s416
          %s418 = sshll.u32 %s411, 4
          %s419 = int_to_ptr.vmem [resolvable:$true] %s418
          %424 = dma.hbm_to_vmem [thread:$0]  %s417, 2048, %s419, %s408, 128, 128, 8
        $region44: #{tpu_custom_call.1} parent=19 // pred_fallthru
          _
        // Predicated region
        $region45: #{tpu_custom_call.1} parent=19 // pred_check
          %p425 = pneg %p232
        $region46: #{tpu_custom_call.1} parent=19 // pred_check_branch
          %427 = sbr.rel (%p425) target = $region48
        $region47: #{tpu_custom_call.1} parent=19 // pred_region
          %p428 = scmp.lt.s32.totalorder %s31, 1
          %s429 = scalar_select %p428, %s31, 1
          %s430 = scalar_lea.vmem %s7, %s429
        $region48: #{tpu_custom_call.1} parent=19 // pred_fallthru
          _
        // Predicated region
        $region49: #{tpu_custom_call.1} parent=19 // pred_check
          %p431 = pneg %p258
        $region50: #{tpu_custom_call.1} parent=19 // pred_check_branch
          %433 = sbr.rel (%p431) target = $region52
        $region51: #{tpu_custom_call.1} parent=19 // pred_region
          %s434 = sand.u32 %s23, 1
          %s435 = scalar_lea.sflag [#allocation4], %s434
          %s436 = sand.u32 %s248, 1
          %s437 = smul.addr %s436, 128
          %s438 = scalar_lea.vmem [#allocation10], %s437
          %s440 = ssub.s32 2048, 2048
          %441 = vsyncadd %s435, %s440
          %s442 = smul.addr %s31, 16
          %s443 = smul.addr %s442, 128
          %s444 = scalar_lea.hbm %s8, %s443
          %s445 = sshll.u32 %s438, 4
          %s446 = int_to_ptr.vmem [resolvable:$true] %s445
          %451 = dma.hbm_to_vmem [thread:$0]  %s444, 2048, %s446, %s435, 128, 128, 8
        $region52: #{tpu_custom_call.1} parent=19 // pred_fallthru
          _
        // Predicated region
        $region53: #{tpu_custom_call.1} parent=19 // pred_check
          %p452 = pneg %p284
        $region54: #{tpu_custom_call.1} parent=19 // pred_check_branch
          %454 = sbr.rel (%p452) target = $region56
        $region55: #{tpu_custom_call.1} parent=19 // pred_region
          %p455 = scmp.lt.s32.totalorder %s31, 1
          %s456 = scalar_select %p455, %s31, 1
          %s457 = scalar_lea.vmem %s9, %s456
        $region56: #{tpu_custom_call.1} parent=19 // pred_fallthru
          _
      $region20: #{tpu_custom_call.1} parent=5 // pred_fallthru
        _
      %p458 = scmp.le.s32.totalorder 1, %s23
      %p459 = scmp.lt.s32.totalorder %s23, 5
      %p460 = pnand %p458, %p459
      %p461 = pneg %p460
      // Predicated region
      $region57: #{tpu_custom_call.1} parent=5 // pred_check
        _
      $region58: #{tpu_custom_call.1} parent=5 // pred_check_branch
        %463 = sbr.rel (%p460) target = $region60
      $region59: #{tpu_custom_call.1} parent=5 // pred_region
        %s464 = ssub.s32 %s23, 1
        %s465 = sand.u32 %s28, 1
        %s466 = scalar_lea.sflag [#allocation4], %s465
        %s467 = sand.u32 %s48, 1
        %s468 = smul.addr %s467, 8
        %s469 = scalar_lea.vmem [#allocation3], %s468
        // Predicated region
        $region61: #{tpu_custom_call.1} parent=59 // pred_check
          %p470 = pneg %p61
        $region62: #{tpu_custom_call.1} parent=59 // pred_check_branch
          %472 = sbr.rel (%p470) target = $region64
        $region63: #{tpu_custom_call.1} parent=59 // pred_region
          %473 = dma.done %s466, 128
        $region64: #{tpu_custom_call.1} parent=59 // pred_fallthru
          _
        // Predicated region
        $region65: #{tpu_custom_call.1} parent=59 // pred_check
          %p474 = pneg %p82
        $region66: #{tpu_custom_call.1} parent=59 // pred_check_branch
          %476 = sbr.rel (%p474) target = $region68
        $region67: #{tpu_custom_call.1} parent=59 // pred_region
          %477 = dma.done [#allocation7], 128
        $region68: #{tpu_custom_call.1} parent=59 // pred_fallthru
          _
        %s478 = sand.u32 %s28, 1
        %s479 = scalar_lea.sflag [#allocation4], %s478
        %s480 = sand.u32 %s95, 1
        %s481 = smul.addr %s480, 384
        %s482 = scalar_lea.vmem [#allocation8], %s481
        // Predicated region
        $region69: #{tpu_custom_call.1} parent=59 // pred_check
          %p483 = pneg %p108
        $region70: #{tpu_custom_call.1} parent=59 // pred_check_branch
          %485 = sbr.rel (%p483) target = $region72
        $region71: #{tpu_custom_call.1} parent=59 // pred_region
          %486 = dma.done %s479, 6144
        $region72: #{tpu_custom_call.1} parent=59 // pred_fallthru
          _
        %s487 = sand.u32 %s28, 1
        %s488 = scalar_lea.sflag [#allocation4], %s487
        %s489 = sand.u32 %s199, 1
        %s490 = smul.addr %s489, 128
        %s491 = scalar_lea.vmem [#allocation9], %s490
        // Predicated region
        $region73: #{tpu_custom_call.1} parent=59 // pred_check
          %p492 = pneg %p212
        $region74: #{tpu_custom_call.1} parent=59 // pred_check_branch
          %494 = sbr.rel (%p492) target = $region76
        $region75: #{tpu_custom_call.1} parent=59 // pred_region
          %495 = dma.done %s488, 2048
        $region76: #{tpu_custom_call.1} parent=59 // pred_fallthru
          _
        %s496 = sand.u32 %s28, 1
        %s497 = scalar_lea.sflag [#allocation4], %s496
        %s498 = sand.u32 %s251, 1
        %s499 = smul.addr %s498, 128
        %s500 = scalar_lea.vmem [#allocation10], %s499
        // Predicated region
        $region77: #{tpu_custom_call.1} parent=59 // pred_check
          %p501 = pneg %p264
        $region78: #{tpu_custom_call.1} parent=59 // pred_check_branch
          %503 = sbr.rel (%p501) target = $region80
        $region79: #{tpu_custom_call.1} parent=59 // pred_region
          %504 = dma.done %s497, 2048
        $region80: #{tpu_custom_call.1} parent=59 // pred_fallthru
          _
        %s505 = sand.u32 %s28, 1
        %s506 = scalar_lea.sflag [#allocation4], %s505
        %s507 = sand.u32 %s48, 1
        %s508 = smul.addr %s507, 8
        %s509 = scalar_lea.vmem [#allocation3], %s508
        %p510 = pneg %p61
        %p511 = pneg %p58
        %p512 = pneg %p82
        %p513 = pneg %p79
        %s514 = sand.u32 %s28, 1
        %s515 = scalar_lea.sflag [#allocation4], %s514
        %s516 = sand.u32 %s95, 1
        %s517 = smul.addr %s516, 384
        %s518 = scalar_lea.vmem [#allocation8], %s517
        %p519 = pneg %p108
        %p520 = pneg %p105
        %p521 = scmp.lt.s32.totalorder %s33, 1
        %s522 = scalar_select %p521, %s33, 1
        %s523 = smul.addr %s522, 3
        %s524 = scalar_lea.vmem %s3, %s523
        %p525 = pneg %p134
        %p526 = pneg %p131
        %p527 = scmp.lt.s32.totalorder %s33, 1
        %s528 = scalar_select %p527, %s33, 1
        %s529 = scalar_lea.vmem %s4, %s528
        %p530 = pneg %p160
        %p531 = pneg %p157
        %p532 = scmp.lt.s32.totalorder %s33, 1
        %s533 = scalar_select %p532, %s33, 1
        %s534 = scalar_lea.vmem %s5, %s533
        %p535 = pneg %p186
        %p536 = pneg %p183
        %s537 = sand.u32 %s28, 1
        %s538 = scalar_lea.sflag [#allocation4], %s537
        %s539 = sand.u32 %s199, 1
        %s540 = smul.addr %s539, 128
        %s541 = scalar_lea.vmem [#allocation9], %s540
        %p542 = pneg %p212
        %p543 = pneg %p209
        %p544 = scmp.lt.s32.totalorder %s33, 1
        %s545 = scalar_select %p544, %s33, 1
        %s546 = scalar_lea.vmem %s7, %s545
        %p547 = pneg %p238
        %p548 = pneg %p235
        %s549 = sand.u32 %s28, 1
        %s550 = scalar_lea.sflag [#allocation4], %s549
        %s551 = sand.u32 %s251, 1
        %s552 = smul.addr %s551, 128
        %s553 = scalar_lea.vmem [#allocation10], %s552
        %p554 = pneg %p264
        %p555 = pneg %p261
        %p556 = scmp.lt.s32.totalorder %s33, 1
        %s557 = scalar_select %p556, %s33, 1
        %s558 = scalar_lea.vmem %s9, %s557
        %p559 = pneg %p290
        %p560 = pneg %p287
        %p561 = pneg %p316
        %p562 = pneg %p313
        %s563 = sand.u32 %s303, 1
        %s564 = scalar_lea.sflag [#allocation5], %s563
        %s565 = sand.u32 %s303, 1
        %s566 = smul.addr %s565, 8
        %s567 = scalar_lea.vmem [#allocation11], %s566
        %p568 = scmp.lt.s32.totalorder %s33, 1
        %s569 = scalar_select %p568, %s33, 1
        %s570 = smul.addr %s569, 3
        %s571 = scalar_lea.vmem %s3, %s570
        %p572 = scmp.lt.s32.totalorder %s33, 1
        %s573 = scalar_select %p572, %s33, 1
        %s574 = scalar_lea.vmem %s4, %s573
        %p575 = scmp.lt.s32.totalorder %s33, 1
        %s576 = scalar_select %p575, %s33, 1
        %s577 = scalar_lea.vmem %s5, %s576
        %p578 = scmp.lt.s32.totalorder %s33, 1
        %s579 = scalar_select %p578, %s33, 1
        %s580 = scalar_lea.vmem %s7, %s579
        %p581 = scmp.lt.s32.totalorder %s33, 1
        %s582 = scalar_select %p581, %s33, 1
        %s583 = scalar_lea.vmem %s9, %s582
        %p584 = scmp.eq.s32.totalorder %s33, 0
        // Predicated region
        $region81: #{tpu_custom_call.1} parent=59 // pred_check
          %p585 = pneg %p584
        $region82: #{tpu_custom_call.1} parent=59 // pred_check_branch
          %587 = sbr.rel (%p585) target = $region84
        $region83: #{tpu_custom_call.1} parent=59 // pred_region
          %v588 = vld [vmem:[%s469] sm:$0xff]
          %v589 = vld [vmem:[#allocation6] sm:$0xff]
          %v590 = vadd.f32 %v588, %v589
          %591 = vst [vmem:[#allocation2] sm:$0xff] %v590
        $region84: #{tpu_custom_call.1} parent=59 // pred_fallthru
          _
        %v592 = vld [vmem:[#allocation2] sm:$0xff]
        %v593 = vld [vmem:[%s482] sm:$0xff]
        %v594 = vld [vmem:[%s482 + $0x8] sm:$0xff]
        %v595 = vld [vmem:[%s482 + $0x10] sm:$0xff]
        %v596 = vld [vmem:[%s482 + $0x18] sm:$0xff]
        %v597 = vld [vmem:[%s482 + $0x20] sm:$0xff]
        %v598 = vld [vmem:[%s482 + $0x28] sm:$0xff]
        %v599 = vld [vmem:[%s482 + $0x30] sm:$0xff]
        %v600 = vld [vmem:[%s482 + $0x38] sm:$0xff]
        %v601 = vld [vmem:[%s482 + $0x40] sm:$0xff]
        %v602 = vld [vmem:[%s482 + $0x48] sm:$0xff]
        %v603 = vld [vmem:[%s482 + $0x50] sm:$0xff]
        %v604 = vld [vmem:[%s482 + $0x58] sm:$0xff]
        %v605 = vld [vmem:[%s482 + $0x60] sm:$0xff]
        %v606 = vld [vmem:[%s482 + $0x68] sm:$0xff]
        %v607 = vld [vmem:[%s482 + $0x70] sm:$0xff]
        %v608 = vld [vmem:[%s482 + $0x78] sm:$0xff]
        %v609 = vld [vmem:[%s482 + $0x80] sm:$0xff]
        %v610 = vld [vmem:[%s482 + $0x88] sm:$0xff]
        %v611 = vld [vmem:[%s482 + $0x90] sm:$0xff]
        %v612 = vld [vmem:[%s482 + $0x98] sm:$0xff]
        %v613 = vld [vmem:[%s482 + $0xa0] sm:$0xff]
        %v614 = vld [vmem:[%s482 + $0xa8] sm:$0xff]
        %v615 = vld [vmem:[%s482 + $0xb0] sm:$0xff]
        %v616 = vld [vmem:[%s482 + $0xb8] sm:$0xff]
        %v617 = vld [vmem:[%s482 + $0xc0] sm:$0xff]
        %v618 = vld [vmem:[%s482 + $0xc8] sm:$0xff]
        %v619 = vld [vmem:[%s482 + $0xd0] sm:$0xff]
        %v620 = vld [vmem:[%s482 + $0xd8] sm:$0xff]
        %v621 = vld [vmem:[%s482 + $0xe0] sm:$0xff]
        %v622 = vld [vmem:[%s482 + $0xe8] sm:$0xff]
        %v623 = vld [vmem:[%s482 + $0xf0] sm:$0xff]
        %v624 = vld [vmem:[%s482 + $0xf8] sm:$0xff]
        %v625 = vld [vmem:[%s482 + $0x100] sm:$0xff]
        %v626 = vld [vmem:[%s482 + $0x108] sm:$0xff]
        %v627 = vld [vmem:[%s482 + $0x110] sm:$0xff]
        %v628 = vld [vmem:[%s482 + $0x118] sm:$0xff]
        %v629 = vld [vmem:[%s482 + $0x120] sm:$0xff]
        %v630 = vld [vmem:[%s482 + $0x128] sm:$0xff]
        %v631 = vld [vmem:[%s482 + $0x130] sm:$0xff]
        %v632 = vld [vmem:[%s482 + $0x138] sm:$0xff]
        %v633 = vld [vmem:[%s482 + $0x140] sm:$0xff]
        %v634 = vld [vmem:[%s482 + $0x148] sm:$0xff]
        %v635 = vld [vmem:[%s482 + $0x150] sm:$0xff]
        %v636 = vld [vmem:[%s482 + $0x158] sm:$0xff]
        %v637 = vld [vmem:[%s482 + $0x160] sm:$0xff]
        %v638 = vld [vmem:[%s482 + $0x168] sm:$0xff]
        %v639 = vld [vmem:[%s482 + $0x170] sm:$0xff]
        %v640 = vld [vmem:[%s482 + $0x178] sm:$0xff]
        %v641 = vld [vmem:[%s571] sm:$0x7]
        %v643 = vlaneseq
        %v644 = vshrl.u32 %v643, 7
        %v645 = vsub.s32 0, %v644
        %v646 = vrot.slane %v641, %v645
        %v647 = vlaneseq
        %v648 = vshrl.u32 %v647, 7
        %v649 = vsub.s32 1, %v648
        %v650 = vrot.slane %v641, %v649
        %v651 = vlaneseq
        %v652 = vshrl.u32 %v651, 7
        %v653 = vsub.s32 2, %v652
        %v654 = vrot.slane %v641, %v653
        %v658 = vand.u32 %v594, 4294901760
        %659 = vmatprep.subr.mxu0 %v658
        %v660 = vand.u32 %v593, 4294901760
        %661 = vmatpush1.msra.mxu0 %v660
        %v662 = vand.u32 %v597, 4294901760
        %663 = vmatprep.subr.mxu0 %v662
        %v664 = vand.u32 %v596, 4294901760
        %665 = vmatpush1.msra.mxu0 %v664
        %v666 = vand.u32 %v600, 4294901760
        %667 = vmatprep.subr.mxu0 %v666
        %v668 = vand.u32 %v599, 4294901760
        %669 = vmatpush1.msra.mxu0 %v668
        %v670 = vand.u32 %v603, 4294901760
        %671 = vmatprep.subr.mxu0 %v670
        %v672 = vand.u32 %v602, 4294901760
        %673 = vmatpush1.msra.mxu0 %v672
        %v674 = vand.u32 %v606, 4294901760
        %675 = vmatprep.subr.mxu0 %v674
        %v676 = vand.u32 %v605, 4294901760
        %677 = vmatpush1.msra.mxu0 %v676
        %v678 = vand.u32 %v609, 4294901760
        %679 = vmatprep.subr.mxu0 %v678
        %v680 = vand.u32 %v608, 4294901760
        %681 = vmatpush1.msra.mxu0 %v680
        %v682 = vand.u32 %v612, 4294901760
        %683 = vmatprep.subr.mxu0 %v682
        %v684 = vand.u32 %v611, 4294901760
        %685 = vmatpush1.msra.mxu0 %v684
        %v686 = vand.u32 %v615, 4294901760
        %687 = vmatprep.subr.mxu0 %v686
        %v688 = vand.u32 %v614, 4294901760
        %689 = vmatpush1.msra.mxu0 %v688
        %v690 = vand.u32 %v618, 4294901760
        %691 = vmatprep.subr.mxu0 %v690
        %v692 = vand.u32 %v617, 4294901760
        %693 = vmatpush1.msra.mxu0 %v692
        %v694 = vand.u32 %v621, 4294901760
        %695 = vmatprep.subr.mxu0 %v694
        %v696 = vand.u32 %v620, 4294901760
        %697 = vmatpush1.msra.mxu0 %v696
        %v698 = vand.u32 %v624, 4294901760
        %699 = vmatprep.subr.mxu0 %v698
        %v700 = vand.u32 %v623, 4294901760
        %701 = vmatpush1.msra.mxu0 %v700
        %v702 = vand.u32 %v627, 4294901760
        %703 = vmatprep.subr.mxu0 %v702
        %v704 = vand.u32 %v626, 4294901760
        %705 = vmatpush1.msra.mxu0 %v704
        %v706 = vand.u32 %v630, 4294901760
        %707 = vmatprep.subr.mxu0 %v706
        %v708 = vand.u32 %v629, 4294901760
        %709 = vmatpush1.msra.mxu0 %v708
        %v710 = vand.u32 %v633, 4294901760
        %711 = vmatprep.subr.mxu0 %v710
        %v712 = vand.u32 %v632, 4294901760
        %713 = vmatpush1.msra.mxu0 %v712
        %v714 = vand.u32 %v636, 4294901760
        %715 = vmatprep.subr.mxu0 %v714
        %v716 = vand.u32 %v635, 4294901760
        %717 = vmatpush1.msra.mxu0 %v716
        %v718 = vand.u32 %v639, 4294901760
        %719 = vmatprep.subr.mxu0 %v718
        %v720 = vand.u32 %v638, 4294901760
        %721 = vmatpush1.msra.mxu0 %v720
        %722 = vmatprep.subr.mxu0 0.0
        %723 = vmatpush1.msra.mxu0 0.0
        %724 = vmatprep.subr.mxu0 0.0
        %725 = vmatpush1.msra.mxu0 0.0
        %726 = vmatprep.subr.mxu0 0.0
        %727 = vmatpush1.msra.mxu0 0.0
        %728 = vmatprep.subr.mxu0 0.0
        %729 = vmatpush1.msra.mxu0 0.0
        %730 = vmatprep.subr.mxu0 0.0
        %731 = vmatpush1.msra.mxu0 0.0
        %732 = vmatprep.subr.mxu0 0.0
        %733 = vmatpush1.msra.mxu0 0.0
        %734 = vmatprep.subr.mxu0 0.0
        %735 = vmatpush1.msra.mxu0 0.0
        %736 = vmatprep.subr.mxu0 0.0
        %737 = vmatpush1.msra.mxu0 0.0
        %738 = vmatprep.subr.mxu0 0.0
        %739 = vmatpush1.msra.mxu0 0.0
        %740 = vmatprep.subr.mxu0 0.0
        %741 = vmatpush1.msra.mxu0 0.0
        %742 = vmatprep.subr.mxu0 0.0
        %743 = vmatpush1.msra.mxu0 0.0
        %744 = vmatprep.subr.mxu0 0.0
        %745 = vmatpush1.msra.mxu0 0.0
        %746 = vmatprep.subr.mxu0 0.0
        %747 = vmatpush1.msra.mxu0 0.0
        %748 = vmatprep.subr.mxu0 0.0
        %749 = vmatpush1.msra.mxu0 0.0
        %750 = vmatprep.subr.mxu0 0.0
        %751 = vmatpush1.msra.mxu0 0.0
        %752 = vmatprep.subr.mxu0 0.0
        %753 = vmatpush1.msra.mxu0 0.0
        %754 = vmatprep.mubr.f32.mxu0 0.0
        %v755 = vand.u32 %v592, 4294901760
        %v756 = vsub.f32 %v592, %v755
        %v757 = vand.u32 %v756, 4294901760
        %v758 = vsub.f32 %v756, %v757
        %v759 = vand.u32 %v758, 4294901760
        %760 = vmatmul.mubr.f32.gmra.mrb[0].mxu0 %v759
        %v761 = vpop.f32.mrb[0].mxu0
        %v762 = vadd.f32 %v646, %v761
        %v763 = vpop.f32.mrb[0].mxu0
        %v764 = vadd.f32 %v650, %v763
        %765 = vdwg.mxu0
        %v766 = vand.u32 %v594, 4294901760
        %v767 = vsub.f32 %v594, %v766
        %v768 = vand.u32 %v767, 4294901760
        %v769 = vsub.f32 %v767, %v768
        %v770 = vand.u32 %v769, 4294901760
        %771 = vmatprep.subr.mxu0 %v770
        %v772 = vand.u32 %v593, 4294901760
        %v773 = vsub.f32 %v593, %v772
        %v774 = vand.u32 %v773, 4294901760
        %v775 = vsub.f32 %v773, %v774
        %v776 = vand.u32 %v775, 4294901760
        %777 = vmatpush1.msra.mxu0 %v776
        %v778 = vand.u32 %v597, 4294901760
        %v779 = vsub.f32 %v597, %v778
        %v780 = vand.u32 %v779, 4294901760
        %v781 = vsub.f32 %v779, %v780
        %v782 = vand.u32 %v781, 4294901760
        %783 = vmatprep.subr.mxu0 %v782
        %v784 = vand.u32 %v596, 4294901760
        %v785 = vsub.f32 %v596, %v784
        %v786 = vand.u32 %v785, 4294901760
        %v787 = vsub.f32 %v785, %v786
        %v788 = vand.u32 %v787, 4294901760
        %789 = vmatpush1.msra.mxu0 %v788
        %v790 = vand.u32 %v600, 4294901760
        %v791 = vsub.f32 %v600, %v790
        %v792 = vand.u32 %v791, 4294901760
        %v793 = vsub.f32 %v791, %v792
        %v794 = vand.u32 %v793, 4294901760
        %795 = vmatprep.subr.mxu0 %v794
        %v796 = vand.u32 %v599, 4294901760
        %v797 = vsub.f32 %v599, %v796
        %v798 = vand.u32 %v797, 4294901760
        %v799 = vsub.f32 %v797, %v798
        %v800 = vand.u32 %v799, 4294901760
        %801 = vmatpush1.msra.mxu0 %v800
        %v802 = vand.u32 %v603, 4294901760
        %v803 = vsub.f32 %v603, %v802
        %v804 = vand.u32 %v803, 4294901760
        %v805 = vsub.f32 %v803, %v804
        %v806 = vand.u32 %v805, 4294901760
        %807 = vmatprep.subr.mxu0 %v806
        %v808 = vand.u32 %v602, 4294901760
        %v809 = vsub.f32 %v602, %v808
        %v810 = vand.u32 %v809, 4294901760
        %v811 = vsub.f32 %v809, %v810
        %v812 = vand.u32 %v811, 4294901760
        %813 = vmatpush1.msra.mxu0 %v812
        %v814 = vand.u32 %v606, 4294901760
        %v815 = vsub.f32 %v606, %v814
        %v816 = vand.u32 %v815, 4294901760
        %v817 = vsub.f32 %v815, %v816
        %v818 = vand.u32 %v817, 4294901760
        %819 = vmatprep.subr.mxu0 %v818
        %v820 = vand.u32 %v605, 4294901760
        %v821 = vsub.f32 %v605, %v820
        %v822 = vand.u32 %v821, 4294901760
        %v823 = vsub.f32 %v821, %v822
        %v824 = vand.u32 %v823, 4294901760
        %825 = vmatpush1.msra.mxu0 %v824
        %v826 = vand.u32 %v609, 4294901760
        %v827 = vsub.f32 %v609, %v826
        %v828 = vand.u32 %v827, 4294901760
        %v829 = vsub.f32 %v827, %v828
        %v830 = vand.u32 %v829, 4294901760
        %831 = vmatprep.subr.mxu0 %v830
        %v832 = vand.u32 %v608, 4294901760
        %v833 = vsub.f32 %v608, %v832
        %v834 = vand.u32 %v833, 4294901760
        %v835 = vsub.f32 %v833, %v834
        %v836 = vand.u32 %v835, 4294901760
        %837 = vmatpush1.msra.mxu0 %v836
        %v838 = vand.u32 %v612, 4294901760
        %v839 = vsub.f32 %v612, %v838
        %v840 = vand.u32 %v839, 4294901760
        %v841 = vsub.f32 %v839, %v840
        %v842 = vand.u32 %v841, 4294901760
        %843 = vmatprep.subr.mxu0 %v842
        %v844 = vand.u32 %v611, 4294901760
        %v845 = vsub.f32 %v611, %v844
        %v846 = vand.u32 %v845, 4294901760
        %v847 = vsub.f32 %v845, %v846
        %v848 = vand.u32 %v847, 4294901760
        %849 = vmatpush1.msra.mxu0 %v848
        %v850 = vand.u32 %v615, 4294901760
        %v851 = vsub.f32 %v615, %v850
        %v852 = vand.u32 %v851, 4294901760
        %v853 = vsub.f32 %v851, %v852
        %v854 = vand.u32 %v853, 4294901760
        %855 = vmatprep.subr.mxu0 %v854
        %v856 = vand.u32 %v614, 4294901760
        %v857 = vsub.f32 %v614, %v856
        %v858 = vand.u32 %v857, 4294901760
        %v859 = vsub.f32 %v857, %v858
        %v860 = vand.u32 %v859, 4294901760
        %861 = vmatpush1.msra.mxu0 %v860
        %v862 = vand.u32 %v618, 4294901760
        %v863 = vsub.f32 %v618, %v862
        %v864 = vand.u32 %v863, 4294901760
        %v865 = vsub.f32 %v863, %v864
        %v866 = vand.u32 %v865, 4294901760
        %867 = vmatprep.subr.mxu0 %v866
        %v868 = vand.u32 %v617, 4294901760
        %v869 = vsub.f32 %v617, %v868
        %v870 = vand.u32 %v869, 4294901760
        %v871 = vsub.f32 %v869, %v870
        %v872 = vand.u32 %v871, 4294901760
        %873 = vmatpush1.msra.mxu0 %v872
        %v874 = vand.u32 %v621, 4294901760
        %v875 = vsub.f32 %v621, %v874
        %v876 = vand.u32 %v875, 4294901760
        %v877 = vsub.f32 %v875, %v876
        %v878 = vand.u32 %v877, 4294901760
        %879 = vmatprep.subr.mxu0 %v878
        %v880 = vand.u32 %v620, 4294901760
        %v881 = vsub.f32 %v620, %v880
        %v882 = vand.u32 %v881, 4294901760
        %v883 = vsub.f32 %v881, %v882
        %v884 = vand.u32 %v883, 4294901760
        %885 = vmatpush1.msra.mxu0 %v884
        %v886 = vand.u32 %v624, 4294901760
        %v887 = vsub.f32 %v624, %v886
        %v888 = vand.u32 %v887, 4294901760
        %v889 = vsub.f32 %v887, %v888
        %v890 = vand.u32 %v889, 4294901760
        %891 = vmatprep.subr.mxu0 %v890
        %v892 = vand.u32 %v623, 4294901760
        %v893 = vsub.f32 %v623, %v892
        %v894 = vand.u32 %v893, 4294901760
        %v895 = vsub.f32 %v893, %v894
        %v896 = vand.u32 %v895, 4294901760
        %897 = vmatpush1.msra.mxu0 %v896
        %v898 = vand.u32 %v627, 4294901760
        %v899 = vsub.f32 %v627, %v898
        %v900 = vand.u32 %v899, 4294901760
        %v901 = vsub.f32 %v899, %v900
        %v902 = vand.u32 %v901, 4294901760
        %903 = vmatprep.subr.mxu0 %v902
        %v904 = vand.u32 %v626, 4294901760
        %v905 = vsub.f32 %v626, %v904
        %v906 = vand.u32 %v905, 4294901760
        %v907 = vsub.f32 %v905, %v906
        %v908 = vand.u32 %v907, 4294901760
        %909 = vmatpush1.msra.mxu0 %v908
        %v910 = vand.u32 %v630, 4294901760
        %v911 = vsub.f32 %v630, %v910
        %v912 = vand.u32 %v911, 4294901760
        %v913 = vsub.f32 %v911, %v912
        %v914 = vand.u32 %v913, 4294901760
        %915 = vmatprep.subr.mxu0 %v914
        %v916 = vand.u32 %v629, 4294901760
        %v917 = vsub.f32 %v629, %v916
        %v918 = vand.u32 %v917, 4294901760
        %v919 = vsub.f32 %v917, %v918
        %v920 = vand.u32 %v919, 4294901760
        %921 = vmatpush1.msra.mxu0 %v920
        %v922 = vand.u32 %v633, 4294901760
        %v923 = vsub.f32 %v633, %v922
        %v924 = vand.u32 %v923, 4294901760
        %v925 = vsub.f32 %v923, %v924
        %v926 = vand.u32 %v925, 4294901760
        %927 = vmatprep.subr.mxu0 %v926
        %v928 = vand.u32 %v632, 4294901760
        %v929 = vsub.f32 %v632, %v928
        %v930 = vand.u32 %v929, 4294901760
        %v931 = vsub.f32 %v929, %v930
        %v932 = vand.u32 %v931, 4294901760
        %933 = vmatpush1.msra.mxu0 %v932
        %v934 = vand.u32 %v636, 4294901760
        %v935 = vsub.f32 %v636, %v934
        %v936 = vand.u32 %v935, 4294901760
        %v937 = vsub.f32 %v935, %v936
        %v938 = vand.u32 %v937, 4294901760
        %939 = vmatprep.subr.mxu0 %v938
        %v940 = vand.u32 %v635, 4294901760
        %v941 = vsub.f32 %v635, %v940
        %v942 = vand.u32 %v941, 4294901760
        %v943 = vsub.f32 %v941, %v942
        %v944 = vand.u32 %v943, 4294901760
        %945 = vmatpush1.msra.mxu0 %v944
        %v946 = vand.u32 %v639, 4294901760
        %v947 = vsub.f32 %v639, %v946
        %v948 = vand.u32 %v947, 4294901760
        %v949 = vsub.f32 %v947, %v948
        %v950 = vand.u32 %v949, 4294901760
        %951 = vmatprep.subr.mxu0 %v950
        %v952 = vand.u32 %v638, 4294901760
        %v953 = vsub.f32 %v638, %v952
        %v954 = vand.u32 %v953, 4294901760
        %v955 = vsub.f32 %v953, %v954
        %v956 = vand.u32 %v955, 4294901760
        %957 = vmatpush1.msra.mxu0 %v956
        %958 = vmatprep.subr.mxu0 0.0
        %959 = vmatpush1.msra.mxu0 0.0
        %960 = vmatprep.subr.mxu0 0.0
        %961 = vmatpush1.msra.mxu0 0.0
        %962 = vmatprep.subr.mxu0 0.0
        %963 = vmatpush1.msra.mxu0 0.0
        %964 = vmatprep.subr.mxu0 0.0
        %965 = vmatpush1.msra.mxu0 0.0
        %966 = vmatprep.subr.mxu0 0.0
        %967 = vmatpush1.msra.mxu0 0.0
        %968 = vmatprep.subr.mxu0 0.0
        %969 = vmatpush1.msra.mxu0 0.0
        %970 = vmatprep.subr.mxu0 0.0
        %971 = vmatpush1.msra.mxu0 0.0
        %972 = vmatprep.subr.mxu0 0.0
        %973 = vmatpush1.msra.mxu0 0.0
        %974 = vmatprep.subr.mxu0 0.0
        %975 = vmatpush1.msra.mxu0 0.0
        %976 = vmatprep.subr.mxu0 0.0
        %977 = vmatpush1.msra.mxu0 0.0
        %978 = vmatprep.subr.mxu0 0.0
        %979 = vmatpush1.msra.mxu0 0.0
        %980 = vmatprep.subr.mxu0 0.0
        %981 = vmatpush1.msra.mxu0 0.0
        %982 = vmatprep.subr.mxu0 0.0
        %983 = vmatpush1.msra.mxu0 0.0
        %984 = vmatprep.subr.mxu0 0.0
        %985 = vmatpush1.msra.mxu0 0.0
        %986 = vmatprep.subr.mxu0 0.0
        %987 = vmatpush1.msra.mxu0 0.0
        %988 = vmatprep.subr.mxu0 0.0
        %989 = vmatpush1.msra.mxu0 0.0
        %990 = vmatprep.mubr.f32.mxu0 0.0
        %v991 = vand.u32 %v592, 4294901760
        %992 = vmatmul.mubr.f32.gmra.mrb[0].mxu0 %v991
        %v993 = vpop.f32.mrb[0].mxu0
        %v994 = vadd.f32 %v762, %v993
        %v995 = vpop.f32.mrb[0].mxu0
        %v996 = vadd.f32 %v764, %v995
        %997 = vdwg.mxu0
        %v998 = vand.u32 %v594, 4294901760
        %v999 = vsub.f32 %v594, %v998
        %1000 = vmatprep.subr.mxu0 %v999
        %v1001 = vand.u32 %v593, 4294901760
        %v1002 = vsub.f32 %v593, %v1001
        %1003 = vmatpush1.msra.mxu0 %v1002
        %v1004 = vand.u32 %v597, 4294901760
        %v1005 = vsub.f32 %v597, %v1004
        %1006 = vmatprep.subr.mxu0 %v1005
        %v1007 = vand.u32 %v596, 4294901760
        %v1008 = vsub.f32 %v596, %v1007
        %1009 = vmatpush1.msra.mxu0 %v1008
        %v1010 = vand.u32 %v600, 4294901760
        %v1011 = vsub.f32 %v600, %v1010
        %1012 = vmatprep.subr.mxu0 %v1011
        %v1013 = vand.u32 %v599, 4294901760
        %v1014 = vsub.f32 %v599, %v1013
        %1015 = vmatpush1.msra.mxu0 %v1014
        %v1016 = vand.u32 %v603, 4294901760
        %v1017 = vsub.f32 %v603, %v1016
        %1018 = vmatprep.subr.mxu0 %v1017
        %v1019 = vand.u32 %v602, 4294901760
        %v1020 = vsub.f32 %v602, %v1019
        %1021 = vmatpush1.msra.mxu0 %v1020
        %v1022 = vand.u32 %v606, 4294901760
        %v1023 = vsub.f32 %v606, %v1022
        %1024 = vmatprep.subr.mxu0 %v1023
        %v1025 = vand.u32 %v605, 4294901760
        %v1026 = vsub.f32 %v605, %v1025
        %1027 = vmatpush1.msra.mxu0 %v1026
        %v1028 = vand.u32 %v609, 4294901760
        %v1029 = vsub.f32 %v609, %v1028
        %1030 = vmatprep.subr.mxu0 %v1029
        %v1031 = vand.u32 %v608, 4294901760
        %v1032 = vsub.f32 %v608, %v1031
        %1033 = vmatpush1.msra.mxu0 %v1032
        %v1034 = vand.u32 %v612, 4294901760
        %v1035 = vsub.f32 %v612, %v1034
        %1036 = vmatprep.subr.mxu0 %v1035
        %v1037 = vand.u32 %v611, 4294901760
        %v1038 = vsub.f32 %v611, %v1037
        %1039 = vmatpush1.msra.mxu0 %v1038
        %v1040 = vand.u32 %v615, 4294901760
        %v1041 = vsub.f32 %v615, %v1040
        %1042 = vmatprep.subr.mxu0 %v1041
        %v1043 = vand.u32 %v614, 4294901760
        %v1044 = vsub.f32 %v614, %v1043
        %1045 = vmatpush1.msra.mxu0 %v1044
        %v1046 = vand.u32 %v618, 4294901760
        %v1047 = vsub.f32 %v618, %v1046
        %1048 = vmatprep.subr.mxu0 %v1047
        %v1049 = vand.u32 %v617, 4294901760
        %v1050 = vsub.f32 %v617, %v1049
        %1051 = vmatpush1.msra.mxu0 %v1050
        %v1052 = vand.u32 %v621, 4294901760
        %v1053 = vsub.f32 %v621, %v1052
        %1054 = vmatprep.subr.mxu0 %v1053
        %v1055 = vand.u32 %v620, 4294901760
        %v1056 = vsub.f32 %v620, %v1055
        %1057 = vmatpush1.msra.mxu0 %v1056
        %v1058 = vand.u32 %v624, 4294901760
        %v1059 = vsub.f32 %v624, %v1058
        %1060 = vmatprep.subr.mxu0 %v1059
        %v1061 = vand.u32 %v623, 4294901760
        %v1062 = vsub.f32 %v623, %v1061
        %1063 = vmatpush1.msra.mxu0 %v1062
        %v1064 = vand.u32 %v627, 4294901760
        %v1065 = vsub.f32 %v627, %v1064
        %1066 = vmatprep.subr.mxu0 %v1065
        %v1067 = vand.u32 %v626, 4294901760
        %v1068 = vsub.f32 %v626, %v1067
        %1069 = vmatpush1.msra.mxu0 %v1068
        %v1070 = vand.u32 %v630, 4294901760
        %v1071 = vsub.f32 %v630, %v1070
        %1072 = vmatprep.subr.mxu0 %v1071
        %v1073 = vand.u32 %v629, 4294901760
        %v1074 = vsub.f32 %v629, %v1073
        %1075 = vmatpush1.msra.mxu0 %v1074
        %v1076 = vand.u32 %v633, 4294901760
        %v1077 = vsub.f32 %v633, %v1076
        %1078 = vmatprep.subr.mxu0 %v1077
        %v1079 = vand.u32 %v632, 4294901760
        %v1080 = vsub.f32 %v632, %v1079
        %1081 = vmatpush1.msra.mxu0 %v1080
        %v1082 = vand.u32 %v636, 4294901760
        %v1083 = vsub.f32 %v636, %v1082
        %1084 = vmatprep.subr.mxu0 %v1083
        %v1085 = vand.u32 %v635, 4294901760
        %v1086 = vsub.f32 %v635, %v1085
        %1087 = vmatpush1.msra.mxu0 %v1086
        %v1088 = vand.u32 %v639, 4294901760
        %v1089 = vsub.f32 %v639, %v1088
        %1090 = vmatprep.subr.mxu0 %v1089
        %v1091 = vand.u32 %v638, 4294901760
        %v1092 = vsub.f32 %v638, %v1091
        %1093 = vmatpush1.msra.mxu0 %v1092
        %1094 = vmatprep.subr.mxu0 0.0
        %1095 = vmatpush1.msra.mxu0 0.0
        %1096 = vmatprep.subr.mxu0 0.0
        %1097 = vmatpush1.msra.mxu0 0.0
        %1098 = vmatprep.subr.mxu0 0.0
        %1099 = vmatpush1.msra.mxu0 0.0
        %1100 = vmatprep.subr.mxu0 0.0
        %1101 = vmatpush1.msra.mxu0 0.0
        %1102 = vmatprep.subr.mxu0 0.0
        %1103 = vmatpush1.msra.mxu0 0.0
        %1104 = vmatprep.subr.mxu0 0.0
        %1105 = vmatpush1.msra.mxu0 0.0
        %1106 = vmatprep.subr.mxu0 0.0
        %1107 = vmatpush1.msra.mxu0 0.0
        %1108 = vmatprep.subr.mxu0 0.0
        %1109 = vmatpush1.msra.mxu0 0.0
        %1110 = vmatprep.subr.mxu0 0.0
        %1111 = vmatpush1.msra.mxu0 0.0
        %1112 = vmatprep.subr.mxu0 0.0
        %1113 = vmatpush1.msra.mxu0 0.0
        %1114 = vmatprep.subr.mxu0 0.0
        %1115 = vmatpush1.msra.mxu0 0.0
        %1116 = vmatprep.subr.mxu0 0.0
        %1117 = vmatpush1.msra.mxu0 0.0
        %1118 = vmatprep.subr.mxu0 0.0
        %1119 = vmatpush1.msra.mxu0 0.0
        %1120 = vmatprep.subr.mxu0 0.0
        %1121 = vmatpush1.msra.mxu0 0.0
        %1122 = vmatprep.subr.mxu0 0.0
        %1123 = vmatpush1.msra.mxu0 0.0
        %1124 = vmatprep.subr.mxu0 0.0
        %1125 = vmatpush1.msra.mxu0 0.0
        %1126 = vmatprep.mubr.f32.mxu0 0.0
        %v1127 = vand.u32 %v592, 4294901760
        %v1128 = vsub.f32 %v592, %v1127
        %1129 = vmatmul.mubr.f32.gmra.mrb[0].mxu0 %v1128
        %v1130 = vpop.f32.mrb[0].mxu0
        %v1131 = vadd.f32 %v994, %v1130
        %v1132 = vpop.f32.mrb[0].mxu0
        %v1133 = vadd.f32 %v996, %v1132
        %1134 = vdwg.mxu0
        %v1135 = vand.u32 %v594, 4294901760
        %1136 = vmatprep.subr.mxu0 %v1135
        %v1137 = vand.u32 %v593, 4294901760
        %1138 = vmatpush1.msra.mxu0 %v1137
        %v1139 = vand.u32 %v597, 4294901760
        %1140 = vmatprep.subr.mxu0 %v1139
        %v1141 = vand.u32 %v596, 4294901760
        %1142 = vmatpush1.msra.mxu0 %v1141
        %v1143 = vand.u32 %v600, 4294901760
        %1144 = vmatprep.subr.mxu0 %v1143
        %v1145 = vand.u32 %v599, 4294901760
        %1146 = vmatpush1.msra.mxu0 %v1145
        %v1147 = vand.u32 %v603, 4294901760
        %1148 = vmatprep.subr.mxu0 %v1147
        %v1149 = vand.u32 %v602, 4294901760
        %1150 = vmatpush1.msra.mxu0 %v1149
        %v1151 = vand.u32 %v606, 4294901760
        %1152 = vmatprep.subr.mxu0 %v1151
        %v1153 = vand.u32 %v605, 4294901760
        %1154 = vmatpush1.msra.mxu0 %v1153
        %v1155 = vand.u32 %v609, 4294901760
        %1156 = vmatprep.subr.mxu0 %v1155
        %v1157 = vand.u32 %v608, 4294901760
        %1158 = vmatpush1.msra.mxu0 %v1157
        %v1159 = vand.u32 %v612, 4294901760
        %1160 = vmatprep.subr.mxu0 %v1159
        %v1161 = vand.u32 %v611, 4294901760
        %1162 = vmatpush1.msra.mxu0 %v1161
        %v1163 = vand.u32 %v615, 4294901760
        %1164 = vmatprep.subr.mxu0 %v1163
        %v1165 = vand.u32 %v614, 4294901760
        %1166 = vmatpush1.msra.mxu0 %v1165
        %v1167 = vand.u32 %v618, 4294901760
        %1168 = vmatprep.subr.mxu0 %v1167
        %v1169 = vand.u32 %v617, 4294901760
        %1170 = vmatpush1.msra.mxu0 %v1169
        %v1171 = vand.u32 %v621, 4294901760
        %1172 = vmatprep.subr.mxu0 %v1171
        %v1173 = vand.u32 %v620, 4294901760
        %1174 = vmatpush1.msra.mxu0 %v1173
        %v1175 = vand.u32 %v624, 4294901760
        %1176 = vmatprep.subr.mxu0 %v1175
        %v1177 = vand.u32 %v623, 4294901760
        %1178 = vmatpush1.msra.mxu0 %v1177
        %v1179 = vand.u32 %v627, 4294901760
        %1180 = vmatprep.subr.mxu0 %v1179
        %v1181 = vand.u32 %v626, 4294901760
        %1182 = vmatpush1.msra.mxu0 %v1181
        %v1183 = vand.u32 %v630, 4294901760
        %1184 = vmatprep.subr.mxu0 %v1183
        %v1185 = vand.u32 %v629, 4294901760
        %1186 = vmatpush1.msra.mxu0 %v1185
        %v1187 = vand.u32 %v633, 4294901760
        %1188 = vmatprep.subr.mxu0 %v1187
        %v1189 = vand.u32 %v632, 4294901760
        %1190 = vmatpush1.msra.mxu0 %v1189
        %v1191 = vand.u32 %v636, 4294901760
        %1192 = vmatprep.subr.mxu0 %v1191
        %v1193 = vand.u32 %v635, 4294901760
        %1194 = vmatpush1.msra.mxu0 %v1193
        %v1195 = vand.u32 %v639, 4294901760
        %1196 = vmatprep.subr.mxu0 %v1195
        %v1197 = vand.u32 %v638, 4294901760
        %1198 = vmatpush1.msra.mxu0 %v1197
        %1199 = vmatprep.subr.mxu0 0.0
        %1200 = vmatpush1.msra.mxu0 0.0
        %1201 = vmatprep.subr.mxu0 0.0
        %1202 = vmatpush1.msra.mxu0 0.0
        %1203 = vmatprep.subr.mxu0 0.0
        %1204 = vmatpush1.msra.mxu0 0.0
        %1205 = vmatprep.subr.mxu0 0.0
        %1206 = vmatpush1.msra.mxu0 0.0
        %1207 = vmatprep.subr.mxu0 0.0
        %1208 = vmatpush1.msra.mxu0 0.0
        %1209 = vmatprep.subr.mxu0 0.0
        %1210 = vmatpush1.msra.mxu0 0.0
        %1211 = vmatprep.subr.mxu0 0.0
        %1212 = vmatpush1.msra.mxu0 0.0
        %1213 = vmatprep.subr.mxu0 0.0
        %1214 = vmatpush1.msra.mxu0 0.0
        %1215 = vmatprep.subr.mxu0 0.0
        %1216 = vmatpush1.msra.mxu0 0.0
        %1217 = vmatprep.subr.mxu0 0.0
        %1218 = vmatpush1.msra.mxu0 0.0
        %1219 = vmatprep.subr.mxu0 0.0
        %1220 = vmatpush1.msra.mxu0 0.0
        %1221 = vmatprep.subr.mxu0 0.0
        %1222 = vmatpush1.msra.mxu0 0.0
        %1223 = vmatprep.subr.mxu0 0.0
        %1224 = vmatpush1.msra.mxu0 0.0
        %1225 = vmatprep.subr.mxu0 0.0
        %1226 = vmatpush1.msra.mxu0 0.0
        %1227 = vmatprep.subr.mxu0 0.0
        %1228 = vmatpush1.msra.mxu0 0.0
        %1229 = vmatprep.subr.mxu0 0.0
        %1230 = vmatpush1.msra.mxu0 0.0
        %1231 = vmatprep.mubr.f32.mxu0 0.0
        %v1232 = vand.u32 %v592, 4294901760
        %v1233 = vsub.f32 %v592, %v1232
        %v1234 = vand.u32 %v1233, 4294901760
        %1235 = vmatmul.mubr.f32.gmra.mrb[0].mxu0 %v1234
        %v1236 = vpop.f32.mrb[0].mxu0
        %v1237 = vadd.f32 %v1131, %v1236
        %v1238 = vpop.f32.mrb[0].mxu0
        %v1239 = vadd.f32 %v1133, %v1238
        %1240 = vdwg.mxu0
        %v1241 = vand.u32 %v594, 4294901760
        %v1242 = vsub.f32 %v594, %v1241
        %v1243 = vand.u32 %v1242, 4294901760
        %1244 = vmatprep.subr.mxu0 %v1243
        %v1245 = vand.u32 %v593, 4294901760
        %v1246 = vsub.f32 %v593, %v1245
        %v1247 = vand.u32 %v1246, 4294901760
        %1248 = vmatpush1.msra.mxu0 %v1247
        %v1249 = vand.u32 %v597, 4294901760
        %v1250 = vsub.f32 %v597, %v1249
        %v1251 = vand.u32 %v1250, 4294901760
        %1252 = vmatprep.subr.mxu0 %v1251
        %v1253 = vand.u32 %v596, 4294901760
        %v1254 = vsub.f32 %v596, %v1253
        %v1255 = vand.u32 %v1254, 4294901760
        %1256 = vmatpush1.msra.mxu0 %v1255
        %v1257 = vand.u32 %v600, 4294901760
        %v1258 = vsub.f32 %v600, %v1257
        %v1259 = vand.u32 %v1258, 4294901760
        %1260 = vmatprep.subr.mxu0 %v1259
        %v1261 = vand.u32 %v599, 4294901760
        %v1262 = vsub.f32 %v599, %v1261
        %v1263 = vand.u32 %v1262, 4294901760
        %1264 = vmatpush1.msra.mxu0 %v1263
        %v1265 = vand.u32 %v603, 4294901760
        %v1266 = vsub.f32 %v603, %v1265
        %v1267 = vand.u32 %v1266, 4294901760
        %1268 = vmatprep.subr.mxu0 %v1267
        %v1269 = vand.u32 %v602, 4294901760
        %v1270 = vsub.f32 %v602, %v1269
        %v1271 = vand.u32 %v1270, 4294901760
        %1272 = vmatpush1.msra.mxu0 %v1271
        %v1273 = vand.u32 %v606, 4294901760
        %v1274 = vsub.f32 %v606, %v1273
        %v1275 = vand.u32 %v1274, 4294901760
        %1276 = vmatprep.subr.mxu0 %v1275
        %v1277 = vand.u32 %v605, 4294901760
        %v1278 = vsub.f32 %v605, %v1277
        %v1279 = vand.u32 %v1278, 4294901760
        %1280 = vmatpush1.msra.mxu0 %v1279
        %v1281 = vand.u32 %v609, 4294901760
        %v1282 = vsub.f32 %v609, %v1281
        %v1283 = vand.u32 %v1282, 4294901760
        %1284 = vmatprep.subr.mxu0 %v1283
        %v1285 = vand.u32 %v608, 4294901760
        %v1286 = vsub.f32 %v608, %v1285
        %v1287 = vand.u32 %v1286, 4294901760
        %1288 = vmatpush1.msra.mxu0 %v1287
        %v1289 = vand.u32 %v612, 4294901760
        %v1290 = vsub.f32 %v612, %v1289
        %v1291 = vand.u32 %v1290, 4294901760
        %1292 = vmatprep.subr.mxu0 %v1291
        %v1293 = vand.u32 %v611, 4294901760
        %v1294 = vsub.f32 %v611, %v1293
        %v1295 = vand.u32 %v1294, 4294901760
        %1296 = vmatpush1.msra.mxu0 %v1295
        %v1297 = vand.u32 %v615, 4294901760
        %v1298 = vsub.f32 %v615, %v1297
        %v1299 = vand.u32 %v1298, 4294901760
        %1300 = vmatprep.subr.mxu0 %v1299
        %v1301 = vand.u32 %v614, 4294901760
        %v1302 = vsub.f32 %v614, %v1301
        %v1303 = vand.u32 %v1302, 4294901760
        %1304 = vmatpush1.msra.mxu0 %v1303
        %v1305 = vand.u32 %v618, 4294901760
        %v1306 = vsub.f32 %v618, %v1305
        %v1307 = vand.u32 %v1306, 4294901760
        %1308 = vmatprep.subr.mxu0 %v1307
        %v1309 = vand.u32 %v617, 4294901760
        %v1310 = vsub.f32 %v617, %v1309
        %v1311 = vand.u32 %v1310, 4294901760
        %1312 = vmatpush1.msra.mxu0 %v1311
        %v1313 = vand.u32 %v621, 4294901760
        %v1314 = vsub.f32 %v621, %v1313
        %v1315 = vand.u32 %v1314, 4294901760
        %1316 = vmatprep.subr.mxu0 %v1315
        %v1317 = vand.u32 %v620, 4294901760
        %v1318 = vsub.f32 %v620, %v1317
        %v1319 = vand.u32 %v1318, 4294901760
        %1320 = vmatpush1.msra.mxu0 %v1319
        %v1321 = vand.u32 %v624, 4294901760
        %v1322 = vsub.f32 %v624, %v1321
        %v1323 = vand.u32 %v1322, 4294901760
        %1324 = vmatprep.subr.mxu0 %v1323
        %v1325 = vand.u32 %v623, 4294901760
        %v1326 = vsub.f32 %v623, %v1325
        %v1327 = vand.u32 %v1326, 4294901760
        %1328 = vmatpush1.msra.mxu0 %v1327
        %v1329 = vand.u32 %v627, 4294901760
        %v1330 = vsub.f32 %v627, %v1329
        %v1331 = vand.u32 %v1330, 4294901760
        %1332 = vmatprep.subr.mxu0 %v1331
        %v1333 = vand.u32 %v626, 4294901760
        %v1334 = vsub.f32 %v626, %v1333
        %v1335 = vand.u32 %v1334, 4294901760
        %1336 = vmatpush1.msra.mxu0 %v1335
        %v1337 = vand.u32 %v630, 4294901760
        %v1338 = vsub.f32 %v630, %v1337
        %v1339 = vand.u32 %v1338, 4294901760
        %1340 = vmatprep.subr.mxu0 %v1339
        %v1341 = vand.u32 %v629, 4294901760
        %v1342 = vsub.f32 %v629, %v1341
        %v1343 = vand.u32 %v1342, 4294901760
        %1344 = vmatpush1.msra.mxu0 %v1343
        %v1345 = vand.u32 %v633, 4294901760
        %v1346 = vsub.f32 %v633, %v1345
        %v1347 = vand.u32 %v1346, 4294901760
        %1348 = vmatprep.subr.mxu0 %v1347
        %v1349 = vand.u32 %v632, 4294901760
        %v1350 = vsub.f32 %v632, %v1349
        %v1351 = vand.u32 %v1350, 4294901760
        %1352 = vmatpush1.msra.mxu0 %v1351
        %v1353 = vand.u32 %v636, 4294901760
        %v1354 = vsub.f32 %v636, %v1353
        %v1355 = vand.u32 %v1354, 4294901760
        %1356 = vmatprep.subr.mxu0 %v1355
        %v1357 = vand.u32 %v635, 4294901760
        %v1358 = vsub.f32 %v635, %v1357
        %v1359 = vand.u32 %v1358, 4294901760
        %1360 = vmatpush1.msra.mxu0 %v1359
        %v1361 = vand.u32 %v639, 4294901760
        %v1362 = vsub.f32 %v639, %v1361
        %v1363 = vand.u32 %v1362, 4294901760
        %1364 = vmatprep.subr.mxu0 %v1363
        %v1365 = vand.u32 %v638, 4294901760
        %v1366 = vsub.f32 %v638, %v1365
        %v1367 = vand.u32 %v1366, 4294901760
        %1368 = vmatpush1.msra.mxu0 %v1367
        %1369 = vmatprep.subr.mxu0 0.0
        %1370 = vmatpush1.msra.mxu0 0.0
        %1371 = vmatprep.subr.mxu0 0.0
        %1372 = vmatpush1.msra.mxu0 0.0
        %1373 = vmatprep.subr.mxu0 0.0
        %1374 = vmatpush1.msra.mxu0 0.0
        %1375 = vmatprep.subr.mxu0 0.0
        %1376 = vmatpush1.msra.mxu0 0.0
        %1377 = vmatprep.subr.mxu0 0.0
        %1378 = vmatpush1.msra.mxu0 0.0
        %1379 = vmatprep.subr.mxu0 0.0
        %1380 = vmatpush1.msra.mxu0 0.0
        %1381 = vmatprep.subr.mxu0 0.0
        %1382 = vmatpush1.msra.mxu0 0.0
        %1383 = vmatprep.subr.mxu0 0.0
        %1384 = vmatpush1.msra.mxu0 0.0
        %1385 = vmatprep.subr.mxu0 0.0
        %1386 = vmatpush1.msra.mxu0 0.0
        %1387 = vmatprep.subr.mxu0 0.0
        %1388 = vmatpush1.msra.mxu0 0.0
        %1389 = vmatprep.subr.mxu0 0.0
        %1390 = vmatpush1.msra.mxu0 0.0
        %1391 = vmatprep.subr.mxu0 0.0
        %1392 = vmatpush1.msra.mxu0 0.0
        %1393 = vmatprep.subr.mxu0 0.0
        %1394 = vmatpush1.msra.mxu0 0.0
        %1395 = vmatprep.subr.mxu0 0.0
        %1396 = vmatpush1.msra.mxu0 0.0
        %1397 = vmatprep.subr.mxu0 0.0
        %1398 = vmatpush1.msra.mxu0 0.0
        %1399 = vmatprep.subr.mxu0 0.0
        %1400 = vmatpush1.msra.mxu0 0.0
        %1401 = vmatprep.mubr.f32.mxu0 0.0
        %v1402 = vand.u32 %v592, 4294901760
        %1403 = vmatmul.mubr.f32.gmra.mrb[0].mxu0 %v1402
        %v1404 = vpop.f32.mrb[0].mxu0
        %v1405 = vadd.f32 %v1237, %v1404
        %v1406 = vpop.f32.mrb[0].mxu0
        %v1407 = vadd.f32 %v1239, %v1406
        %1408 = vdwg.mxu0
        %v1409 = vand.u32 %v594, 4294901760
        %1410 = vmatprep.subr.mxu0 %v1409
        %v1411 = vand.u32 %v593, 4294901760
        %1412 = vmatpush1.msra.mxu0 %v1411
        %v1413 = vand.u32 %v597, 4294901760
        %1414 = vmatprep.subr.mxu0 %v1413
        %v1415 = vand.u32 %v596, 4294901760
        %1416 = vmatpush1.msra.mxu0 %v1415
        %v1417 = vand.u32 %v600, 4294901760
        %1418 = vmatprep.subr.mxu0 %v1417
        %v1419 = vand.u32 %v599, 4294901760
        %1420 = vmatpush1.msra.mxu0 %v1419
        %v1421 = vand.u32 %v603, 4294901760
        %1422 = vmatprep.subr.mxu0 %v1421
        %v1423 = vand.u32 %v602, 4294901760
        %1424 = vmatpush1.msra.mxu0 %v1423
        %v1425 = vand.u32 %v606, 4294901760
        %1426 = vmatprep.subr.mxu0 %v1425
        %v1427 = vand.u32 %v605, 4294901760
        %1428 = vmatpush1.msra.mxu0 %v1427
        %v1429 = vand.u32 %v609, 4294901760
        %1430 = vmatprep.subr.mxu0 %v1429
        %v1431 = vand.u32 %v608, 4294901760
        %1432 = vmatpush1.msra.mxu0 %v1431
        %v1433 = vand.u32 %v612, 4294901760
        %1434 = vmatprep.subr.mxu0 %v1433
        %v1435 = vand.u32 %v611, 4294901760
        %1436 = vmatpush1.msra.mxu0 %v1435
        %v1437 = vand.u32 %v615, 4294901760
        %1438 = vmatprep.subr.mxu0 %v1437
        %v1439 = vand.u32 %v614, 4294901760
        %1440 = vmatpush1.msra.mxu0 %v1439
        %v1441 = vand.u32 %v618, 4294901760
        %1442 = vmatprep.subr.mxu0 %v1441
        %v1443 = vand.u32 %v617, 4294901760
        %1444 = vmatpush1.msra.mxu0 %v1443
        %v1445 = vand.u32 %v621, 4294901760
        %1446 = vmatprep.subr.mxu0 %v1445
        %v1447 = vand.u32 %v620, 4294901760
        %1448 = vmatpush1.msra.mxu0 %v1447
        %v1449 = vand.u32 %v624, 4294901760
        %1450 = vmatprep.subr.mxu0 %v1449
        %v1451 = vand.u32 %v623, 4294901760
        %1452 = vmatpush1.msra.mxu0 %v1451
        %v1453 = vand.u32 %v627, 4294901760
        %1454 = vmatprep.subr.mxu0 %v1453
        %v1455 = vand.u32 %v626, 4294901760
        %1456 = vmatpush1.msra.mxu0 %v1455
        %v1457 = vand.u32 %v630, 4294901760
        %1458 = vmatprep.subr.mxu0 %v1457
        %v1459 = vand.u32 %v629, 4294901760
        %1460 = vmatpush1.msra.mxu0 %v1459
        %v1461 = vand.u32 %v633, 4294901760
        %1462 = vmatprep.subr.mxu0 %v1461
        %v1463 = vand.u32 %v632, 4294901760
        %1464 = vmatpush1.msra.mxu0 %v1463
        %v1465 = vand.u32 %v636, 4294901760
        %1466 = vmatprep.subr.mxu0 %v1465
        %v1467 = vand.u32 %v635, 4294901760
        %1468 = vmatpush1.msra.mxu0 %v1467
        %v1469 = vand.u32 %v639, 4294901760
        %1470 = vmatprep.subr.mxu0 %v1469
        %v1471 = vand.u32 %v638, 4294901760
        %1472 = vmatpush1.msra.mxu0 %v1471
        %1473 = vmatprep.subr.mxu0 0.0
        %1474 = vmatpush1.msra.mxu0 0.0
        %1475 = vmatprep.subr.mxu0 0.0
        %1476 = vmatpush1.msra.mxu0 0.0
        %1477 = vmatprep.subr.mxu0 0.0
        %1478 = vmatpush1.msra.mxu0 0.0
        %1479 = vmatprep.subr.mxu0 0.0
        %1480 = vmatpush1.msra.mxu0 0.0
        %1481 = vmatprep.subr.mxu0 0.0
        %1482 = vmatpush1.msra.mxu0 0.0
        %1483 = vmatprep.subr.mxu0 0.0
        %1484 = vmatpush1.msra.mxu0 0.0
        %1485 = vmatprep.subr.mxu0 0.0
        %1486 = vmatpush1.msra.mxu0 0.0
        %1487 = vmatprep.subr.mxu0 0.0
        %1488 = vmatpush1.msra.mxu0 0.0
        %1489 = vmatprep.subr.mxu0 0.0
        %1490 = vmatpush1.msra.mxu0 0.0
        %1491 = vmatprep.subr.mxu0 0.0
        %1492 = vmatpush1.msra.mxu0 0.0
        %1493 = vmatprep.subr.mxu0 0.0
        %1494 = vmatpush1.msra.mxu0 0.0
        %1495 = vmatprep.subr.mxu0 0.0
        %1496 = vmatpush1.msra.mxu0 0.0
        %1497 = vmatprep.subr.mxu0 0.0
        %1498 = vmatpush1.msra.mxu0 0.0
        %1499 = vmatprep.subr.mxu0 0.0
        %1500 = vmatpush1.msra.mxu0 0.0
        %1501 = vmatprep.subr.mxu0 0.0
        %1502 = vmatpush1.msra.mxu0 0.0
        %1503 = vmatprep.subr.mxu0 0.0
        %1504 = vmatpush1.msra.mxu0 0.0
        %1505 = vmatprep.mubr.f32.mxu0 0.0
        %v1506 = vand.u32 %v592, 4294901760
        %1507 = vmatmul.mubr.f32.gmra.mrb[0].mxu0 %v1506
        %v1508 = vpop.f32.mrb[0].mxu0
        %v1509 = vadd.f32 %v1405, %v1508
        %v1510 = vpop.f32.mrb[0].mxu0
        %v1511 = vadd.f32 %v1407, %v1510
        %1512 = vdwg.mxu0
        %1513 = vmatprep.subr.mxu0 0.0
        %v1514 = vand.u32 %v595, 4294901760
        %1515 = vmatpush1.msra.mxu0 %v1514
        %1516 = vmatprep.subr.mxu0 0.0
        %v1517 = vand.u32 %v598, 4294901760
        %1518 = vmatpush1.msra.mxu0 %v1517
        %1519 = vmatprep.subr.mxu0 0.0
        %v1520 = vand.u32 %v601, 4294901760
        %1521 = vmatpush1.msra.mxu0 %v1520
        %1522 = vmatprep.subr.mxu0 0.0
        %v1523 = vand.u32 %v604, 4294901760
        %1524 = vmatpush1.msra.mxu0 %v1523
        %1525 = vmatprep.subr.mxu0 0.0
        %v1526 = vand.u32 %v607, 4294901760
        %1527 = vmatpush1.msra.mxu0 %v1526
        %1528 = vmatprep.subr.mxu0 0.0
        %v1529 = vand.u32 %v610, 4294901760
        %1530 = vmatpush1.msra.mxu0 %v1529
        %1531 = vmatprep.subr.mxu0 0.0
        %v1532 = vand.u32 %v613, 4294901760
        %1533 = vmatpush1.msra.mxu0 %v1532
        %1534 = vmatprep.subr.mxu0 0.0
        %v1535 = vand.u32 %v616, 4294901760
        %1536 = vmatpush1.msra.mxu0 %v1535
        %1537 = vmatprep.subr.mxu0 0.0
        %v1538 = vand.u32 %v619, 4294901760
        %1539 = vmatpush1.msra.mxu0 %v1538
        %1540 = vmatprep.subr.mxu0 0.0
        %v1541 = vand.u32 %v622, 4294901760
        %1542 = vmatpush1.msra.mxu0 %v1541
        %1543 = vmatprep.subr.mxu0 0.0
        %v1544 = vand.u32 %v625, 4294901760
        %1545 = vmatpush1.msra.mxu0 %v1544
        %1546 = vmatprep.subr.mxu0 0.0
        %v1547 = vand.u32 %v628, 4294901760
        %1548 = vmatpush1.msra.mxu0 %v1547
        %1549 = vmatprep.subr.mxu0 0.0
        %v1550 = vand.u32 %v631, 4294901760
        %1551 = vmatpush1.msra.mxu0 %v1550
        %1552 = vmatprep.subr.mxu0 0.0
        %v1553 = vand.u32 %v634, 4294901760
        %1554 = vmatpush1.msra.mxu0 %v1553
        %1555 = vmatprep.subr.mxu0 0.0
        %v1556 = vand.u32 %v637, 4294901760
        %1557 = vmatpush1.msra.mxu0 %v1556
        %1558 = vmatprep.subr.mxu0 0.0
        %v1559 = vand.u32 %v640, 4294901760
        %1560 = vmatpush1.msra.mxu0 %v1559
        %1561 = vmatprep.subr.mxu0 0.0
        %1562 = vmatpush1.msra.mxu0 0.0
        %1563 = vmatprep.subr.mxu0 0.0
        %1564 = vmatpush1.msra.mxu0 0.0
        %1565 = vmatprep.subr.mxu0 0.0
        %1566 = vmatpush1.msra.mxu0 0.0
        %1567 = vmatprep.subr.mxu0 0.0
        %1568 = vmatpush1.msra.mxu0 0.0
        %1569 = vmatprep.subr.mxu0 0.0
        %1570 = vmatpush1.msra.mxu0 0.0
        %1571 = vmatprep.subr.mxu0 0.0
        %1572 = vmatpush1.msra.mxu0 0.0
        %1573 = vmatprep.subr.mxu0 0.0
        %1574 = vmatpush1.msra.mxu0 0.0
        %1575 = vmatprep.subr.mxu0 0.0
        %1576 = vmatpush1.msra.mxu0 0.0
        %1577 = vmatprep.subr.mxu0 0.0
        %1578 = vmatpush1.msra.mxu0 0.0
        %1579 = vmatprep.subr.mxu0 0.0
        %1580 = vmatpush1.msra.mxu0 0.0
        %1581 = vmatprep.subr.mxu0 0.0
        %1582 = vmatpush1.msra.mxu0 0.0
        %1583 = vmatprep.subr.mxu0 0.0
        %1584 = vmatpush1.msra.mxu0 0.0
        %1585 = vmatprep.subr.mxu0 0.0
        %1586 = vmatpush1.msra.mxu0 0.0
        %1587 = vmatprep.subr.mxu0 0.0
        %1588 = vmatpush1.msra.mxu0 0.0
        %1589 = vmatprep.subr.mxu0 0.0
        %1590 = vmatpush1.msra.mxu0 0.0
        %1591 = vmatprep.subr.mxu0 0.0
        %1592 = vmatpush1.msra.mxu0 0.0
        %1593 = vmatprep.mubr.f32.mxu0 0.0
        %v1594 = vand.u32 %v592, 4294901760
        %v1595 = vsub.f32 %v592, %v1594
        %v1596 = vand.u32 %v1595, 4294901760
        %v1597 = vsub.f32 %v1595, %v1596
        %v1598 = vand.u32 %v1597, 4294901760
        %1599 = vmatmul.mubr.f32.gmra.mrb[0].mxu0 %v1598
        %v1600 = vpop.f32.mrb[0].mxu0
        %v1601 = vadd.f32 %v654, %v1600
        %v1602 = vpop.f32.mrb[0].mxu0
        %1603 = vdwg.mxu0
        %1604 = vmatprep.subr.mxu0 0.0
        %v1605 = vand.u32 %v595, 4294901760
        %v1606 = vsub.f32 %v595, %v1605
        %v1607 = vand.u32 %v1606, 4294901760
        %v1608 = vsub.f32 %v1606, %v1607
        %v1609 = vand.u32 %v1608, 4294901760
        %1610 = vmatpush1.msra.mxu0 %v1609
        %1611 = vmatprep.subr.mxu0 0.0
        %v1612 = vand.u32 %v598, 4294901760
        %v1613 = vsub.f32 %v598, %v1612
        %v1614 = vand.u32 %v1613, 4294901760
        %v1615 = vsub.f32 %v1613, %v1614
        %v1616 = vand.u32 %v1615, 4294901760
        %1617 = vmatpush1.msra.mxu0 %v1616
        %1618 = vmatprep.subr.mxu0 0.0
        %v1619 = vand.u32 %v601, 4294901760
        %v1620 = vsub.f32 %v601, %v1619
        %v1621 = vand.u32 %v1620, 4294901760
        %v1622 = vsub.f32 %v1620, %v1621
        %v1623 = vand.u32 %v1622, 4294901760
        %1624 = vmatpush1.msra.mxu0 %v1623
        %1625 = vmatprep.subr.mxu0 0.0
        %v1626 = vand.u32 %v604, 4294901760
        %v1627 = vsub.f32 %v604, %v1626
        %v1628 = vand.u32 %v1627, 4294901760
        %v1629 = vsub.f32 %v1627, %v1628
        %v1630 = vand.u32 %v1629, 4294901760
        %1631 = vmatpush1.msra.mxu0 %v1630
        %1632 = vmatprep.subr.mxu0 0.0
        %v1633 = vand.u32 %v607, 4294901760
        %v1634 = vsub.f32 %v607, %v1633
        %v1635 = vand.u32 %v1634, 4294901760
        %v1636 = vsub.f32 %v1634, %v1635
        %v1637 = vand.u32 %v1636, 4294901760
        %1638 = vmatpush1.msra.mxu0 %v1637
        %1639 = vmatprep.subr.mxu0 0.0
        %v1640 = vand.u32 %v610, 4294901760
        %v1641 = vsub.f32 %v610, %v1640
        %v1642 = vand.u32 %v1641, 4294901760
        %v1643 = vsub.f32 %v1641, %v1642
        %v1644 = vand.u32 %v1643, 4294901760
        %1645 = vmatpush1.msra.mxu0 %v1644
        %1646 = vmatprep.subr.mxu0 0.0
        %v1647 = vand.u32 %v613, 4294901760
        %v1648 = vsub.f32 %v613, %v1647
        %v1649 = vand.u32 %v1648, 4294901760
        %v1650 = vsub.f32 %v1648, %v1649
        %v1651 = vand.u32 %v1650, 4294901760
        %1652 = vmatpush1.msra.mxu0 %v1651
        %1653 = vmatprep.subr.mxu0 0.0
        %v1654 = vand.u32 %v616, 4294901760
        %v1655 = vsub.f32 %v616, %v1654
        %v1656 = vand.u32 %v1655, 4294901760
        %v1657 = vsub.f32 %v1655, %v1656
        %v1658 = vand.u32 %v1657, 4294901760
        %1659 = vmatpush1.msra.mxu0 %v1658
        %1660 = vmatprep.subr.mxu0 0.0
        %v1661 = vand.u32 %v619, 4294901760
        %v1662 = vsub.f32 %v619, %v1661
        %v1663 = vand.u32 %v1662, 4294901760
        %v1664 = vsub.f32 %v1662, %v1663
        %v1665 = vand.u32 %v1664, 4294901760
        %1666 = vmatpush1.msra.mxu0 %v1665
        %1667 = vmatprep.subr.mxu0 0.0
        %v1668 = vand.u32 %v622, 4294901760
        %v1669 = vsub.f32 %v622, %v1668
        %v1670 = vand.u32 %v1669, 4294901760
        %v1671 = vsub.f32 %v1669, %v1670
        %v1672 = vand.u32 %v1671, 4294901760
        %1673 = vmatpush1.msra.mxu0 %v1672
        %1674 = vmatprep.subr.mxu0 0.0
        %v1675 = vand.u32 %v625, 4294901760
        %v1676 = vsub.f32 %v625, %v1675
        %v1677 = vand.u32 %v1676, 4294901760
        %v1678 = vsub.f32 %v1676, %v1677
        %v1679 = vand.u32 %v1678, 4294901760
        %1680 = vmatpush1.msra.mxu0 %v1679
        %1681 = vmatprep.subr.mxu0 0.0
        %v1682 = vand.u32 %v628, 4294901760
        %v1683 = vsub.f32 %v628, %v1682
        %v1684 = vand.u32 %v1683, 4294901760
        %v1685 = vsub.f32 %v1683, %v1684
        %v1686 = vand.u32 %v1685, 4294901760
        %1687 = vmatpush1.msra.mxu0 %v1686
        %1688 = vmatprep.subr.mxu0 0.0
        %v1689 = vand.u32 %v631, 4294901760
        %v1690 = vsub.f32 %v631, %v1689
        %v1691 = vand.u32 %v1690, 4294901760
        %v1692 = vsub.f32 %v1690, %v1691
        %v1693 = vand.u32 %v1692, 4294901760
        %1694 = vmatpush1.msra.mxu0 %v1693
        %1695 = vmatprep.subr.mxu0 0.0
        %v1696 = vand.u32 %v634, 4294901760
        %v1697 = vsub.f32 %v634, %v1696
        %v1698 = vand.u32 %v1697, 4294901760
        %v1699 = vsub.f32 %v1697, %v1698
        %v1700 = vand.u32 %v1699, 4294901760
        %1701 = vmatpush1.msra.mxu0 %v1700
        %1702 = vmatprep.subr.mxu0 0.0
        %v1703 = vand.u32 %v637, 4294901760
        %v1704 = vsub.f32 %v637, %v1703
        %v1705 = vand.u32 %v1704, 4294901760
        %v1706 = vsub.f32 %v1704, %v1705
        %v1707 = vand.u32 %v1706, 4294901760
        %1708 = vmatpush1.msra.mxu0 %v1707
        %1709 = vmatprep.subr.mxu0 0.0
        %v1710 = vand.u32 %v640, 4294901760
        %v1711 = vsub.f32 %v640, %v1710
        %v1712 = vand.u32 %v1711, 4294901760
        %v1713 = vsub.f32 %v1711, %v1712
        %v1714 = vand.u32 %v1713, 4294901760
        %1715 = vmatpush1.msra.mxu0 %v1714
        %1716 = vmatprep.subr.mxu0 0.0
        %1717 = vmatpush1.msra.mxu0 0.0
        %1718 = vmatprep.subr.mxu0 0.0
        %1719 = vmatpush1.msra.mxu0 0.0
        %1720 = vmatprep.subr.mxu0 0.0
        %1721 = vmatpush1.msra.mxu0 0.0
        %1722 = vmatprep.subr.mxu0 0.0
        %1723 = vmatpush1.msra.mxu0 0.0
        %1724 = vmatprep.subr.mxu0 0.0
        %1725 = vmatpush1.msra.mxu0 0.0
        %1726 = vmatprep.subr.mxu0 0.0
        %1727 = vmatpush1.msra.mxu0 0.0
        %1728 = vmatprep.subr.mxu0 0.0
        %1729 = vmatpush1.msra.mxu0 0.0
        %1730 = vmatprep.subr.mxu0 0.0
        %1731 = vmatpush1.msra.mxu0 0.0
        %1732 = vmatprep.subr.mxu0 0.0
        %1733 = vmatpush1.msra.mxu0 0.0
        %1734 = vmatprep.subr.mxu0 0.0
        %1735 = vmatpush1.msra.mxu0 0.0
        %1736 = vmatprep.subr.mxu0 0.0
        %1737 = vmatpush1.msra.mxu0 0.0
        %1738 = vmatprep.subr.mxu0 0.0
        %1739 = vmatpush1.msra.mxu0 0.0
        %1740 = vmatprep.subr.mxu0 0.0
        %1741 = vmatpush1.msra.mxu0 0.0
        %1742 = vmatprep.subr.mxu0 0.0
        %1743 = vmatpush1.msra.mxu0 0.0
        %1744 = vmatprep.subr.mxu0 0.0
        %1745 = vmatpush1.msra.mxu0 0.0
        %1746 = vmatprep.subr.mxu0 0.0
        %1747 = vmatpush1.msra.mxu0 0.0
        %1748 = vmatprep.mubr.f32.mxu0 0.0
        %v1749 = vand.u32 %v592, 4294901760
        %1750 = vmatmul.mubr.f32.gmra.mrb[0].mxu0 %v1749
        %v1751 = vpop.f32.mrb[0].mxu0
        %v1752 = vadd.f32 %v1601, %v1751
        %v1753 = vpop.f32.mrb[0].mxu0
        %1754 = vdwg.mxu0
        %1755 = vmatprep.subr.mxu0 0.0
        %v1756 = vand.u32 %v595, 4294901760
        %v1757 = vsub.f32 %v595, %v1756
        %1758 = vmatpush1.msra.mxu0 %v1757
        %1759 = vmatprep.subr.mxu0 0.0
        %v1760 = vand.u32 %v598, 4294901760
        %v1761 = vsub.f32 %v598, %v1760
        %1762 = vmatpush1.msra.mxu0 %v1761
        %1763 = vmatprep.subr.mxu0 0.0
        %v1764 = vand.u32 %v601, 4294901760
        %v1765 = vsub.f32 %v601, %v1764
        %1766 = vmatpush1.msra.mxu0 %v1765
        %1767 = vmatprep.subr.mxu0 0.0
        %v1768 = vand.u32 %v604, 4294901760
        %v1769 = vsub.f32 %v604, %v1768
        %1770 = vmatpush1.msra.mxu0 %v1769
        %1771 = vmatprep.subr.mxu0 0.0
        %v1772 = vand.u32 %v607, 4294901760
        %v1773 = vsub.f32 %v607, %v1772
        %1774 = vmatpush1.msra.mxu0 %v1773
        %1775 = vmatprep.subr.mxu0 0.0
        %v1776 = vand.u32 %v610, 4294901760
        %v1777 = vsub.f32 %v610, %v1776
        %1778 = vmatpush1.msra.mxu0 %v1777
        %1779 = vmatprep.subr.mxu0 0.0
        %v1780 = vand.u32 %v613, 4294901760
        %v1781 = vsub.f32 %v613, %v1780
        %1782 = vmatpush1.msra.mxu0 %v1781
        %1783 = vmatprep.subr.mxu0 0.0
        %v1784 = vand.u32 %v616, 4294901760
        %v1785 = vsub.f32 %v616, %v1784
        %1786 = vmatpush1.msra.mxu0 %v1785
        %1787 = vmatprep.subr.mxu0 0.0
        %v1788 = vand.u32 %v619, 4294901760
        %v1789 = vsub.f32 %v619, %v1788
        %1790 = vmatpush1.msra.mxu0 %v1789
        %1791 = vmatprep.subr.mxu0 0.0
        %v1792 = vand.u32 %v622, 4294901760
        %v1793 = vsub.f32 %v622, %v1792
        %1794 = vmatpush1.msra.mxu0 %v1793
        %1795 = vmatprep.subr.mxu0 0.0
        %v1796 = vand.u32 %v625, 4294901760
        %v1797 = vsub.f32 %v625, %v1796
        %1798 = vmatpush1.msra.mxu0 %v1797
        %1799 = vmatprep.subr.mxu0 0.0
        %v1800 = vand.u32 %v628, 4294901760
        %v1801 = vsub.f32 %v628, %v1800
        %1802 = vmatpush1.msra.mxu0 %v1801
        %1803 = vmatprep.subr.mxu0 0.0
        %v1804 = vand.u32 %v631, 4294901760
        %v1805 = vsub.f32 %v631, %v1804
        %1806 = vmatpush1.msra.mxu0 %v1805
        %1807 = vmatprep.subr.mxu0 0.0
        %v1808 = vand.u32 %v634, 4294901760
        %v1809 = vsub.f32 %v634, %v1808
        %1810 = vmatpush1.msra.mxu0 %v1809
        %1811 = vmatprep.subr.mxu0 0.0
        %v1812 = vand.u32 %v637, 4294901760
        %v1813 = vsub.f32 %v637, %v1812
        %1814 = vmatpush1.msra.mxu0 %v1813
        %1815 = vmatprep.subr.mxu0 0.0
        %v1816 = vand.u32 %v640, 4294901760
        %v1817 = vsub.f32 %v640, %v1816
        %1818 = vmatpush1.msra.mxu0 %v1817
        %1819 = vmatprep.subr.mxu0 0.0
        %1820 = vmatpush1.msra.mxu0 0.0
        %1821 = vmatprep.subr.mxu0 0.0
        %1822 = vmatpush1.msra.mxu0 0.0
        %1823 = vmatprep.subr.mxu0 0.0
        %1824 = vmatpush1.msra.mxu0 0.0
        %1825 = vmatprep.subr.mxu0 0.0
        %1826 = vmatpush1.msra.mxu0 0.0
        %1827 = vmatprep.subr.mxu0 0.0
        %1828 = vmatpush1.msra.mxu0 0.0
        %1829 = vmatprep.subr.mxu0 0.0
        %1830 = vmatpush1.msra.mxu0 0.0
        %1831 = vmatprep.subr.mxu0 0.0
        %1832 = vmatpush1.msra.mxu0 0.0
        %1833 = vmatprep.subr.mxu0 0.0
        %1834 = vmatpush1.msra.mxu0 0.0
        %1835 = vmatprep.subr.mxu0 0.0
        %1836 = vmatpush1.msra.mxu0 0.0
        %1837 = vmatprep.subr.mxu0 0.0
        %1838 = vmatpush1.msra.mxu0 0.0
        %1839 = vmatprep.subr.mxu0 0.0
        %1840 = vmatpush1.msra.mxu0 0.0
        %1841 = vmatprep.subr.mxu0 0.0
        %1842 = vmatpush1.msra.mxu0 0.0
        %1843 = vmatprep.subr.mxu0 0.0
        %1844 = vmatpush1.msra.mxu0 0.0
        %1845 = vmatprep.subr.mxu0 0.0
        %1846 = vmatpush1.msra.mxu0 0.0
        %1847 = vmatprep.subr.mxu0 0.0
        %1848 = vmatpush1.msra.mxu0 0.0
        %1849 = vmatprep.subr.mxu0 0.0
        %1850 = vmatpush1.msra.mxu0 0.0
        %1851 = vmatprep.mubr.f32.mxu0 0.0
        %v1852 = vand.u32 %v592, 4294901760
        %v1853 = vsub.f32 %v592, %v1852
        %1854 = vmatmul.mubr.f32.gmra.mrb[0].mxu0 %v1853
        %v1855 = vpop.f32.mrb[0].mxu0
        %v1856 = vadd.f32 %v1752, %v1855
        %v1857 = vpop.f32.mrb[0].mxu0
        %1858 = vdwg.mxu0
        %1859 = vmatprep.subr.mxu0 0.0
        %v1860 = vand.u32 %v595, 4294901760
        %1861 = vmatpush1.msra.mxu0 %v1860
        %1862 = vmatprep.subr.mxu0 0.0
        %v1863 = vand.u32 %v598, 4294901760
        %1864 = vmatpush1.msra.mxu0 %v1863
        %1865 = vmatprep.subr.mxu0 0.0
        %v1866 = vand.u32 %v601, 4294901760
        %1867 = vmatpush1.msra.mxu0 %v1866
        %1868 = vmatprep.subr.mxu0 0.0
        %v1869 = vand.u32 %v604, 4294901760
        %1870 = vmatpush1.msra.mxu0 %v1869
        %1871 = vmatprep.subr.mxu0 0.0
        %v1872 = vand.u32 %v607, 4294901760
        %1873 = vmatpush1.msra.mxu0 %v1872
        %1874 = vmatprep.subr.mxu0 0.0
        %v1875 = vand.u32 %v610, 4294901760
        %1876 = vmatpush1.msra.mxu0 %v1875
        %1877 = vmatprep.subr.mxu0 0.0
        %v1878 = vand.u32 %v613, 4294901760
        %1879 = vmatpush1.msra.mxu0 %v1878
        %1880 = vmatprep.subr.mxu0 0.0
        %v1881 = vand.u32 %v616, 4294901760
        %1882 = vmatpush1.msra.mxu0 %v1881
        %1883 = vmatprep.subr.mxu0 0.0
        %v1884 = vand.u32 %v619, 4294901760
        %1885 = vmatpush1.msra.mxu0 %v1884
        %1886 = vmatprep.subr.mxu0 0.0
        %v1887 = vand.u32 %v622, 4294901760
        %1888 = vmatpush1.msra.mxu0 %v1887
        %1889 = vmatprep.subr.mxu0 0.0
        %v1890 = vand.u32 %v625, 4294901760
        %1891 = vmatpush1.msra.mxu0 %v1890
        %1892 = vmatprep.subr.mxu0 0.0
        %v1893 = vand.u32 %v628, 4294901760
        %1894 = vmatpush1.msra.mxu0 %v1893
        %1895 = vmatprep.subr.mxu0 0.0
        %v1896 = vand.u32 %v631, 4294901760
        %1897 = vmatpush1.msra.mxu0 %v1896
        %1898 = vmatprep.subr.mxu0 0.0
        %v1899 = vand.u32 %v634, 4294901760
        %1900 = vmatpush1.msra.mxu0 %v1899
        %1901 = vmatprep.subr.mxu0 0.0
        %v1902 = vand.u32 %v637, 4294901760
        %1903 = vmatpush1.msra.mxu0 %v1902
        %1904 = vmatprep.subr.mxu0 0.0
        %v1905 = vand.u32 %v640, 4294901760
        %1906 = vmatpush1.msra.mxu0 %v1905
        %1907 = vmatprep.subr.mxu0 0.0
        %1908 = vmatpush1.msra.mxu0 0.0
        %1909 = vmatprep.subr.mxu0 0.0
        %1910 = vmatpush1.msra.mxu0 0.0
        %1911 = vmatprep.subr.mxu0 0.0
        %1912 = vmatpush1.msra.mxu0 0.0
        %1913 = vmatprep.subr.mxu0 0.0
        %1914 = vmatpush1.msra.mxu0 0.0
        %1915 = vmatprep.subr.mxu0 0.0
        %1916 = vmatpush1.msra.mxu0 0.0
        %1917 = vmatprep.subr.mxu0 0.0
        %1918 = vmatpush1.msra.mxu0 0.0
        %1919 = vmatprep.subr.mxu0 0.0
        %1920 = vmatpush1.msra.mxu0 0.0
        %1921 = vmatprep.subr.mxu0 0.0
        %1922 = vmatpush1.msra.mxu0 0.0
        %1923 = vmatprep.subr.mxu0 0.0
        %1924 = vmatpush1.msra.mxu0 0.0
        %1925 = vmatprep.subr.mxu0 0.0
        %1926 = vmatpush1.msra.mxu0 0.0
        %1927 = vmatprep.subr.mxu0 0.0
        %1928 = vmatpush1.msra.mxu0 0.0
        %1929 = vmatprep.subr.mxu0 0.0
        %1930 = vmatpush1.msra.mxu0 0.0
        %1931 = vmatprep.subr.mxu0 0.0
        %1932 = vmatpush1.msra.mxu0 0.0
        %1933 = vmatprep.subr.mxu0 0.0
        %1934 = vmatpush1.msra.mxu0 0.0
        %1935 = vmatprep.subr.mxu0 0.0
        %1936 = vmatpush1.msra.mxu0 0.0
        %1937 = vmatprep.subr.mxu0 0.0
        %1938 = vmatpush1.msra.mxu0 0.0
        %1939 = vmatprep.mubr.f32.mxu0 0.0
        %v1940 = vand.u32 %v592, 4294901760
        %v1941 = vsub.f32 %v592, %v1940
        %v1942 = vand.u32 %v1941, 4294901760
        %1943 = vmatmul.mubr.f32.gmra.mrb[0].mxu0 %v1942
        %v1944 = vpop.f32.mrb[0].mxu0
        %v1945 = vadd.f32 %v1856, %v1944
        %v1946 = vpop.f32.mrb[0].mxu0
        %1947 = vdwg.mxu0
        %1948 = vmatprep.subr.mxu0 0.0
        %v1949 = vand.u32 %v595, 4294901760
        %v1950 = vsub.f32 %v595, %v1949
        %v1951 = vand.u32 %v1950, 4294901760
        %1952 = vmatpush1.msra.mxu0 %v1951
        %1953 = vmatprep.subr.mxu0 0.0
        %v1954 = vand.u32 %v598, 4294901760
        %v1955 = vsub.f32 %v598, %v1954
        %v1956 = vand.u32 %v1955, 4294901760
        %1957 = vmatpush1.msra.mxu0 %v1956
        %1958 = vmatprep.subr.mxu0 0.0
        %v1959 = vand.u32 %v601, 4294901760
        %v1960 = vsub.f32 %v601, %v1959
        %v1961 = vand.u32 %v1960, 4294901760
        %1962 = vmatpush1.msra.mxu0 %v1961
        %1963 = vmatprep.subr.mxu0 0.0
        %v1964 = vand.u32 %v604, 4294901760
        %v1965 = vsub.f32 %v604, %v1964
        %v1966 = vand.u32 %v1965, 4294901760
        %1967 = vmatpush1.msra.mxu0 %v1966
        %1968 = vmatprep.subr.mxu0 0.0
        %v1969 = vand.u32 %v607, 4294901760
        %v1970 = vsub.f32 %v607, %v1969
        %v1971 = vand.u32 %v1970, 4294901760
        %1972 = vmatpush1.msra.mxu0 %v1971
        %1973 = vmatprep.subr.mxu0 0.0
        %v1974 = vand.u32 %v610, 4294901760
        %v1975 = vsub.f32 %v610, %v1974
        %v1976 = vand.u32 %v1975, 4294901760
        %1977 = vmatpush1.msra.mxu0 %v1976
        %1978 = vmatprep.subr.mxu0 0.0
        %v1979 = vand.u32 %v613, 4294901760
        %v1980 = vsub.f32 %v613, %v1979
        %v1981 = vand.u32 %v1980, 4294901760
        %1982 = vmatpush1.msra.mxu0 %v1981
        %1983 = vmatprep.subr.mxu0 0.0
        %v1984 = vand.u32 %v616, 4294901760
        %v1985 = vsub.f32 %v616, %v1984
        %v1986 = vand.u32 %v1985, 4294901760
        %1987 = vmatpush1.msra.mxu0 %v1986
        %1988 = vmatprep.subr.mxu0 0.0
        %v1989 = vand.u32 %v619, 4294901760
        %v1990 = vsub.f32 %v619, %v1989
        %v1991 = vand.u32 %v1990, 4294901760
        %1992 = vmatpush1.msra.mxu0 %v1991
        %1993 = vmatprep.subr.mxu0 0.0
        %v1994 = vand.u32 %v622, 4294901760
        %v1995 = vsub.f32 %v622, %v1994
        %v1996 = vand.u32 %v1995, 4294901760
        %1997 = vmatpush1.msra.mxu0 %v1996
        %1998 = vmatprep.subr.mxu0 0.0
        %v1999 = vand.u32 %v625, 4294901760
        %v2000 = vsub.f32 %v625, %v1999
        %v2001 = vand.u32 %v2000, 4294901760
        %2002 = vmatpush1.msra.mxu0 %v2001
        %2003 = vmatprep.subr.mxu0 0.0
        %v2004 = vand.u32 %v628, 4294901760
        %v2005 = vsub.f32 %v628, %v2004
        %v2006 = vand.u32 %v2005, 4294901760
        %2007 = vmatpush1.msra.mxu0 %v2006
        %2008 = vmatprep.subr.mxu0 0.0
        %v2009 = vand.u32 %v631, 4294901760
        %v2010 = vsub.f32 %v631, %v2009
        %v2011 = vand.u32 %v2010, 4294901760
        %2012 = vmatpush1.msra.mxu0 %v2011
        %2013 = vmatprep.subr.mxu0 0.0
        %v2014 = vand.u32 %v634, 4294901760
        %v2015 = vsub.f32 %v634, %v2014
        %v2016 = vand.u32 %v2015, 4294901760
        %2017 = vmatpush1.msra.mxu0 %v2016
        %2018 = vmatprep.subr.mxu0 0.0
        %v2019 = vand.u32 %v637, 4294901760
        %v2020 = vsub.f32 %v637, %v2019
        %v2021 = vand.u32 %v2020, 4294901760
        %2022 = vmatpush1.msra.mxu0 %v2021
        %2023 = vmatprep.subr.mxu0 0.0
        %v2024 = vand.u32 %v640, 4294901760
        %v2025 = vsub.f32 %v640, %v2024
        %v2026 = vand.u32 %v2025, 4294901760
        %2027 = vmatpush1.msra.mxu0 %v2026
        %2028 = vmatprep.subr.mxu0 0.0
        %2029 = vmatpush1.msra.mxu0 0.0
        %2030 = vmatprep.subr.mxu0 0.0
        %2031 = vmatpush1.msra.mxu0 0.0
        %2032 = vmatprep.subr.mxu0 0.0
        %2033 = vmatpush1.msra.mxu0 0.0
        %2034 = vmatprep.subr.mxu0 0.0
        %2035 = vmatpush1.msra.mxu0 0.0
        %2036 = vmatprep.subr.mxu0 0.0
        %2037 = vmatpush1.msra.mxu0 0.0
        %2038 = vmatprep.subr.mxu0 0.0
        %2039 = vmatpush1.msra.mxu0 0.0
        %2040 = vmatprep.subr.mxu0 0.0
        %2041 = vmatpush1.msra.mxu0 0.0
        %2042 = vmatprep.subr.mxu0 0.0
        %2043 = vmatpush1.msra.mxu0 0.0
        %2044 = vmatprep.subr.mxu0 0.0
        %2045 = vmatpush1.msra.mxu0 0.0
        %2046 = vmatprep.subr.mxu0 0.0
        %2047 = vmatpush1.msra.mxu0 0.0
        %2048 = vmatprep.subr.mxu0 0.0
        %2049 = vmatpush1.msra.mxu0 0.0
        %2050 = vmatprep.subr.mxu0 0.0
        %2051 = vmatpush1.msra.mxu0 0.0
        %2052 = vmatprep.subr.mxu0 0.0
        %2053 = vmatpush1.msra.mxu0 0.0
        %2054 = vmatprep.subr.mxu0 0.0
        %2055 = vmatpush1.msra.mxu0 0.0
        %2056 = vmatprep.subr.mxu0 0.0
        %2057 = vmatpush1.msra.mxu0 0.0
        %2058 = vmatprep.subr.mxu0 0.0
        %2059 = vmatpush1.msra.mxu0 0.0
        %2060 = vmatprep.mubr.f32.mxu0 0.0
        %v2061 = vand.u32 %v592, 4294901760
        %2062 = vmatmul.mubr.f32.gmra.mrb[0].mxu0 %v2061
        %v2063 = vpop.f32.mrb[0].mxu0
        %v2064 = vadd.f32 %v1945, %v2063
        %v2065 = vpop.f32.mrb[0].mxu0
        %2066 = vdwg.mxu0
        %2067 = vmatprep.subr.mxu0 0.0
        %v2068 = vand.u32 %v595, 4294901760
        %2069 = vmatpush1.msra.mxu0 %v2068
        %2070 = vmatprep.subr.mxu0 0.0
        %v2071 = vand.u32 %v598, 4294901760
        %2072 = vmatpush1.msra.mxu0 %v2071
        %2073 = vmatprep.subr.mxu0 0.0
        %v2074 = vand.u32 %v601, 4294901760
        %2075 = vmatpush1.msra.mxu0 %v2074
        %2076 = vmatprep.subr.mxu0 0.0
        %v2077 = vand.u32 %v604, 4294901760
        %2078 = vmatpush1.msra.mxu0 %v2077
        %2079 = vmatprep.subr.mxu0 0.0
        %v2080 = vand.u32 %v607, 4294901760
        %2081 = vmatpush1.msra.mxu0 %v2080
        %2082 = vmatprep.subr.mxu0 0.0
        %v2083 = vand.u32 %v610, 4294901760
        %2084 = vmatpush1.msra.mxu0 %v2083
        %2085 = vmatprep.subr.mxu0 0.0
        %v2086 = vand.u32 %v613, 4294901760
        %2087 = vmatpush1.msra.mxu0 %v2086
        %2088 = vmatprep.subr.mxu0 0.0
        %v2089 = vand.u32 %v616, 4294901760
        %2090 = vmatpush1.msra.mxu0 %v2089
        %2091 = vmatprep.subr.mxu0 0.0
        %v2092 = vand.u32 %v619, 4294901760
        %2093 = vmatpush1.msra.mxu0 %v2092
        %2094 = vmatprep.subr.mxu0 0.0
        %v2095 = vand.u32 %v622, 4294901760
        %2096 = vmatpush1.msra.mxu0 %v2095
        %2097 = vmatprep.subr.mxu0 0.0
        %v2098 = vand.u32 %v625, 4294901760
        %2099 = vmatpush1.msra.mxu0 %v2098
        %2100 = vmatprep.subr.mxu0 0.0
        %v2101 = vand.u32 %v628, 4294901760
        %2102 = vmatpush1.msra.mxu0 %v2101
        %2103 = vmatprep.subr.mxu0 0.0
        %v2104 = vand.u32 %v631, 4294901760
        %2105 = vmatpush1.msra.mxu0 %v2104
        %2106 = vmatprep.subr.mxu0 0.0
        %v2107 = vand.u32 %v634, 4294901760
        %2108 = vmatpush1.msra.mxu0 %v2107
        %2109 = vmatprep.subr.mxu0 0.0
        %v2110 = vand.u32 %v637, 4294901760
        %2111 = vmatpush1.msra.mxu0 %v2110
        %2112 = vmatprep.subr.mxu0 0.0
        %v2113 = vand.u32 %v640, 4294901760
        %2114 = vmatpush1.msra.mxu0 %v2113
        %2115 = vmatprep.subr.mxu0 0.0
        %2116 = vmatpush1.msra.mxu0 0.0
        %2117 = vmatprep.subr.mxu0 0.0
        %2118 = vmatpush1.msra.mxu0 0.0
        %2119 = vmatprep.subr.mxu0 0.0
        %2120 = vmatpush1.msra.mxu0 0.0
        %2121 = vmatprep.subr.mxu0 0.0
        %2122 = vmatpush1.msra.mxu0 0.0
        %2123 = vmatprep.subr.mxu0 0.0
        %2124 = vmatpush1.msra.mxu0 0.0
        %2125 = vmatprep.subr.mxu0 0.0
        %2126 = vmatpush1.msra.mxu0 0.0
        %2127 = vmatprep.subr.mxu0 0.0
        %2128 = vmatpush1.msra.mxu0 0.0
        %2129 = vmatprep.subr.mxu0 0.0
        %2130 = vmatpush1.msra.mxu0 0.0
        %2131 = vmatprep.subr.mxu0 0.0
        %2132 = vmatpush1.msra.mxu0 0.0
        %2133 = vmatprep.subr.mxu0 0.0
        %2134 = vmatpush1.msra.mxu0 0.0
        %2135 = vmatprep.subr.mxu0 0.0
        %2136 = vmatpush1.msra.mxu0 0.0
        %2137 = vmatprep.subr.mxu0 0.0
        %2138 = vmatpush1.msra.mxu0 0.0
        %2139 = vmatprep.subr.mxu0 0.0
        %2140 = vmatpush1.msra.mxu0 0.0
        %2141 = vmatprep.subr.mxu0 0.0
        %2142 = vmatpush1.msra.mxu0 0.0
        %2143 = vmatprep.subr.mxu0 0.0
        %2144 = vmatpush1.msra.mxu0 0.0
        %2145 = vmatprep.subr.mxu0 0.0
        %2146 = vmatpush1.msra.mxu0 0.0
        %2147 = vmatprep.mubr.f32.mxu0 0.0
        %v2148 = vand.u32 %v592, 4294901760
        %2149 = vmatmul.mubr.f32.gmra.mrb[0].mxu0 %v2148
        %v2150 = vpop.f32.mrb[0].mxu0
        %v2151 = vadd.f32 %v2064, %v2150
        %v2152 = vpop.f32.mrb[0].mxu0
        %2153 = vdwg.mxu0
        %2154 = vmatprep.subr.mxu0 0.0
        %v2155 = vand.u32 %v1511, 4294901760
        %2156 = vmatpush1.xpose.msra.mxu0 %v2155
        %2157 = vmatprep.subr.mxu0 0.0
        %2158 = vmatpush1.xpose.msra.mxu0 0.0
        %2159 = vmatprep.subr.mxu0 0.0
        %2160 = vmatpush1.xpose.msra.mxu0 0.0
        %2161 = vmatprep.subr.mxu0 0.0
        %2162 = vmatpush1.xpose.msra.mxu0 0.0
        %2163 = vmatprep.subr.mxu0 0.0
        %2164 = vmatpush1.xpose.msra.mxu0 0.0
        %2165 = vmatprep.subr.mxu0 0.0
        %2166 = vmatpush1.xpose.msra.mxu0 0.0
        %2167 = vmatprep.subr.mxu0 0.0
        %2168 = vmatpush1.xpose.msra.mxu0 0.0
        %2169 = vmatprep.subr.mxu0 0.0
        %2170 = vmatpush1.xpose.msra.mxu0 0.0
        %2171 = vmatprep.subr.mxu0 0.0
        %2172 = vmatpush1.xpose.msra.mxu0 0.0
        %2173 = vmatprep.subr.mxu0 0.0
        %2174 = vmatpush1.xpose.msra.mxu0 0.0
        %2175 = vmatprep.subr.mxu0 0.0
        %2176 = vmatpush1.xpose.msra.mxu0 0.0
        %2177 = vmatprep.subr.mxu0 0.0
        %2178 = vmatpush1.xpose.msra.mxu0 0.0
        %2179 = vmatprep.subr.mxu0 0.0
        %2180 = vmatpush1.xpose.msra.mxu0 0.0
        %2181 = vmatprep.subr.mxu0 0.0
        %2182 = vmatpush1.xpose.msra.mxu0 0.0
        %2183 = vmatprep.subr.mxu0 0.0
        %2184 = vmatpush1.xpose.msra.mxu0 0.0
        %2185 = vmatprep.subr.mxu0 0.0
        %2186 = vmatpush1.xpose.msra.mxu0 0.0
        %2187 = vmatprep.subr.mxu0 0.0
        %2188 = vmatpush1.xpose.msra.mxu0 0.0
        %2189 = vmatprep.subr.mxu0 0.0
        %2190 = vmatpush1.xpose.msra.mxu0 0.0
        %2191 = vmatprep.subr.mxu0 0.0
        %2192 = vmatpush1.xpose.msra.mxu0 0.0
        %2193 = vmatprep.subr.mxu0 0.0
        %2194 = vmatpush1.xpose.msra.mxu0 0.0
        %2195 = vmatprep.subr.mxu0 0.0
        %2196 = vmatpush1.xpose.msra.mxu0 0.0
        %2197 = vmatprep.subr.mxu0 0.0
        %2198 = vmatpush1.xpose.msra.mxu0 0.0
        %2199 = vmatprep.subr.mxu0 0.0
        %2200 = vmatpush1.xpose.msra.mxu0 0.0
        %2201 = vmatprep.subr.mxu0 0.0
        %2202 = vmatpush1.xpose.msra.mxu0 0.0
        %2203 = vmatprep.subr.mxu0 0.0
        %2204 = vmatpush1.xpose.msra.mxu0 0.0
        %2205 = vmatprep.subr.mxu0 0.0
        %2206 = vmatpush1.xpose.msra.mxu0 0.0
        %2207 = vmatprep.subr.mxu0 0.0
        %2208 = vmatpush1.xpose.msra.mxu0 0.0
        %2209 = vmatprep.subr.mxu0 0.0
        %2210 = vmatpush1.xpose.msra.mxu0 0.0
        %2211 = vmatprep.subr.mxu0 0.0
        %2212 = vmatpush1.xpose.msra.mxu0 0.0
        %2213 = vmatprep.subr.mxu0 0.0
        %2214 = vmatpush1.xpose.msra.mxu0 0.0
        %2215 = vmatprep.subr.mxu0 0.0
        %2216 = vmatpush1.xpose.msra.mxu0 0.0
        %2217 = vmatprep.subr.mxu0 0.0
        %2218 = vmatpush1.xpose.msra.mxu0 0.0
        %2219 = vmatprep.mubr.f32.mxu0 0.0
        %v2220 = vand.u32 %v1509, 4294901760
        %v2221 = vsub.f32 %v1509, %v2220
        %v2222 = vand.u32 %v2221, 4294901760
        %v2223 = vsub.f32 %v2221, %v2222
        %v2224 = vand.u32 %v2223, 4294901760
        %2225 = vmatmul.mubr.f32.gmra.mrb[0].mxu0 %v2224
        %v2226 = vpop.f32.mrb[0].mxu0
        %v2227 = vadd.f32 0.0, %v2226
        %v2228 = vpop.f32.mrb[0].mxu0
        %2229 = vdwg.mxu0
        %2230 = vmatprep.subr.mxu0 0.0
        %v2231 = vand.u32 %v1511, 4294901760
        %v2232 = vsub.f32 %v1511, %v2231
        %v2233 = vand.u32 %v2232, 4294901760
        %v2234 = vsub.f32 %v2232, %v2233
        %v2235 = vand.u32 %v2234, 4294901760
        %2236 = vmatpush1.xpose.msra.mxu0 %v2235
        %2237 = vmatprep.subr.mxu0 0.0
        %2238 = vmatpush1.xpose.msra.mxu0 0.0
        %2239 = vmatprep.subr.mxu0 0.0
        %2240 = vmatpush1.xpose.msra.mxu0 0.0
        %2241 = vmatprep.subr.mxu0 0.0
        %2242 = vmatpush1.xpose.msra.mxu0 0.0
        %2243 = vmatprep.subr.mxu0 0.0
        %2244 = vmatpush1.xpose.msra.mxu0 0.0
        %2245 = vmatprep.subr.mxu0 0.0
        %2246 = vmatpush1.xpose.msra.mxu0 0.0
        %2247 = vmatprep.subr.mxu0 0.0
        %2248 = vmatpush1.xpose.msra.mxu0 0.0
        %2249 = vmatprep.subr.mxu0 0.0
        %2250 = vmatpush1.xpose.msra.mxu0 0.0
        %2251 = vmatprep.subr.mxu0 0.0
        %2252 = vmatpush1.xpose.msra.mxu0 0.0
        %2253 = vmatprep.subr.mxu0 0.0
        %2254 = vmatpush1.xpose.msra.mxu0 0.0
        %2255 = vmatprep.subr.mxu0 0.0
        %2256 = vmatpush1.xpose.msra.mxu0 0.0
        %2257 = vmatprep.subr.mxu0 0.0
        %2258 = vmatpush1.xpose.msra.mxu0 0.0
        %2259 = vmatprep.subr.mxu0 0.0
        %2260 = vmatpush1.xpose.msra.mxu0 0.0
        %2261 = vmatprep.subr.mxu0 0.0
        %2262 = vmatpush1.xpose.msra.mxu0 0.0
        %2263 = vmatprep.subr.mxu0 0.0
        %2264 = vmatpush1.xpose.msra.mxu0 0.0
        %2265 = vmatprep.subr.mxu0 0.0
        %2266 = vmatpush1.xpose.msra.mxu0 0.0
        %2267 = vmatprep.subr.mxu0 0.0
        %2268 = vmatpush1.xpose.msra.mxu0 0.0
        %2269 = vmatprep.subr.mxu0 0.0
        %2270 = vmatpush1.xpose.msra.mxu0 0.0
        %2271 = vmatprep.subr.mxu0 0.0
        %2272 = vmatpush1.xpose.msra.mxu0 0.0
        %2273 = vmatprep.subr.mxu0 0.0
        %2274 = vmatpush1.xpose.msra.mxu0 0.0
        %2275 = vmatprep.subr.mxu0 0.0
        %2276 = vmatpush1.xpose.msra.mxu0 0.0
        %2277 = vmatprep.subr.mxu0 0.0
        %2278 = vmatpush1.xpose.msra.mxu0 0.0
        %2279 = vmatprep.subr.mxu0 0.0
        %2280 = vmatpush1.xpose.msra.mxu0 0.0
        %2281 = vmatprep.subr.mxu0 0.0
        %2282 = vmatpush1.xpose.msra.mxu0 0.0
        %2283 = vmatprep.subr.mxu0 0.0
        %2284 = vmatpush1.xpose.msra.mxu0 0.0
        %2285 = vmatprep.subr.mxu0 0.0
        %2286 = vmatpush1.xpose.msra.mxu0 0.0
        %2287 = vmatprep.subr.mxu0 0.0
        %2288 = vmatpush1.xpose.msra.mxu0 0.0
        %2289 = vmatprep.subr.mxu0 0.0
        %2290 = vmatpush1.xpose.msra.mxu0 0.0
        %2291 = vmatprep.subr.mxu0 0.0
        %2292 = vmatpush1.xpose.msra.mxu0 0.0
        %2293 = vmatprep.subr.mxu0 0.0
        %2294 = vmatpush1.xpose.msra.mxu0 0.0
        %2295 = vmatprep.subr.mxu0 0.0
        %2296 = vmatpush1.xpose.msra.mxu0 0.0
        %2297 = vmatprep.subr.mxu0 0.0
        %2298 = vmatpush1.xpose.msra.mxu0 0.0
        %2299 = vmatprep.mubr.f32.mxu0 0.0
        %v2300 = vand.u32 %v1509, 4294901760
        %2301 = vmatmul.mubr.f32.gmra.mrb[0].mxu0 %v2300
        %v2302 = vpop.f32.mrb[0].mxu0
        %v2303 = vadd.f32 %v2227, %v2302
        %v2304 = vpop.f32.mrb[0].mxu0
        %2305 = vdwg.mxu0
        %2306 = vmatprep.subr.mxu0 0.0
        %v2307 = vand.u32 %v1511, 4294901760
        %v2308 = vsub.f32 %v1511, %v2307
        %2309 = vmatpush1.xpose.msra.mxu0 %v2308
        %2310 = vmatprep.subr.mxu0 0.0
        %2311 = vmatpush1.xpose.msra.mxu0 0.0
        %2312 = vmatprep.subr.mxu0 0.0
        %2313 = vmatpush1.xpose.msra.mxu0 0.0
        %2314 = vmatprep.subr.mxu0 0.0
        %2315 = vmatpush1.xpose.msra.mxu0 0.0
        %2316 = vmatprep.subr.mxu0 0.0
        %2317 = vmatpush1.xpose.msra.mxu0 0.0
        %2318 = vmatprep.subr.mxu0 0.0
        %2319 = vmatpush1.xpose.msra.mxu0 0.0
        %2320 = vmatprep.subr.mxu0 0.0
        %2321 = vmatpush1.xpose.msra.mxu0 0.0
        %2322 = vmatprep.subr.mxu0 0.0
        %2323 = vmatpush1.xpose.msra.mxu0 0.0
        %2324 = vmatprep.subr.mxu0 0.0
        %2325 = vmatpush1.xpose.msra.mxu0 0.0
        %2326 = vmatprep.subr.mxu0 0.0
        %2327 = vmatpush1.xpose.msra.mxu0 0.0
        %2328 = vmatprep.subr.mxu0 0.0
        %2329 = vmatpush1.xpose.msra.mxu0 0.0
        %2330 = vmatprep.subr.mxu0 0.0
        %2331 = vmatpush1.xpose.msra.mxu0 0.0
        %2332 = vmatprep.subr.mxu0 0.0
        %2333 = vmatpush1.xpose.msra.mxu0 0.0
        %2334 = vmatprep.subr.mxu0 0.0
        %2335 = vmatpush1.xpose.msra.mxu0 0.0
        %2336 = vmatprep.subr.mxu0 0.0
        %2337 = vmatpush1.xpose.msra.mxu0 0.0
        %2338 = vmatprep.subr.mxu0 0.0
        %2339 = vmatpush1.xpose.msra.mxu0 0.0
        %2340 = vmatprep.subr.mxu0 0.0
        %2341 = vmatpush1.xpose.msra.mxu0 0.0
        %2342 = vmatprep.subr.mxu0 0.0
        %2343 = vmatpush1.xpose.msra.mxu0 0.0
        %2344 = vmatprep.subr.mxu0 0.0
        %2345 = vmatpush1.xpose.msra.mxu0 0.0
        %2346 = vmatprep.subr.mxu0 0.0
        %2347 = vmatpush1.xpose.msra.mxu0 0.0
        %2348 = vmatprep.subr.mxu0 0.0
        %2349 = vmatpush1.xpose.msra.mxu0 0.0
        %2350 = vmatprep.subr.mxu0 0.0
        %2351 = vmatpush1.xpose.msra.mxu0 0.0
        %2352 = vmatprep.subr.mxu0 0.0
        %2353 = vmatpush1.xpose.msra.mxu0 0.0
        %2354 = vmatprep.subr.mxu0 0.0
        %2355 = vmatpush1.xpose.msra.mxu0 0.0
        %2356 = vmatprep.subr.mxu0 0.0
        %2357 = vmatpush1.xpose.msra.mxu0 0.0
        %2358 = vmatprep.subr.mxu0 0.0
        %2359 = vmatpush1.xpose.msra.mxu0 0.0
        %2360 = vmatprep.subr.mxu0 0.0
        %2361 = vmatpush1.xpose.msra.mxu0 0.0
        %2362 = vmatprep.subr.mxu0 0.0
        %2363 = vmatpush1.xpose.msra.mxu0 0.0
        %2364 = vmatprep.subr.mxu0 0.0
        %2365 = vmatpush1.xpose.msra.mxu0 0.0
        %2366 = vmatprep.subr.mxu0 0.0
        %2367 = vmatpush1.xpose.msra.mxu0 0.0
        %2368 = vmatprep.subr.mxu0 0.0
        %2369 = vmatpush1.xpose.msra.mxu0 0.0
        %2370 = vmatprep.subr.mxu0 0.0
        %2371 = vmatpush1.xpose.msra.mxu0 0.0
        %2372 = vmatprep.mubr.f32.mxu0 0.0
        %v2373 = vand.u32 %v1509, 4294901760
        %v2374 = vsub.f32 %v1509, %v2373
        %2375 = vmatmul.mubr.f32.gmra.mrb[0].mxu0 %v2374
        %v2376 = vpop.f32.mrb[0].mxu0
        %v2377 = vadd.f32 %v2303, %v2376
        %v2378 = vpop.f32.mrb[0].mxu0
        %2379 = vdwg.mxu0
        %2380 = vmatprep.subr.mxu0 0.0
        %v2381 = vand.u32 %v1511, 4294901760
        %2382 = vmatpush1.xpose.msra.mxu0 %v2381
        %2383 = vmatprep.subr.mxu0 0.0
        %2384 = vmatpush1.xpose.msra.mxu0 0.0
        %2385 = vmatprep.subr.mxu0 0.0
        %2386 = vmatpush1.xpose.msra.mxu0 0.0
        %2387 = vmatprep.subr.mxu0 0.0
        %2388 = vmatpush1.xpose.msra.mxu0 0.0
        %2389 = vmatprep.subr.mxu0 0.0
        %2390 = vmatpush1.xpose.msra.mxu0 0.0
        %2391 = vmatprep.subr.mxu0 0.0
        %2392 = vmatpush1.xpose.msra.mxu0 0.0
        %2393 = vmatprep.subr.mxu0 0.0
        %2394 = vmatpush1.xpose.msra.mxu0 0.0
        %2395 = vmatprep.subr.mxu0 0.0
        %2396 = vmatpush1.xpose.msra.mxu0 0.0
        %2397 = vmatprep.subr.mxu0 0.0
        %2398 = vmatpush1.xpose.msra.mxu0 0.0
        %2399 = vmatprep.subr.mxu0 0.0
        %2400 = vmatpush1.xpose.msra.mxu0 0.0
        %2401 = vmatprep.subr.mxu0 0.0
        %2402 = vmatpush1.xpose.msra.mxu0 0.0
        %2403 = vmatprep.subr.mxu0 0.0
        %2404 = vmatpush1.xpose.msra.mxu0 0.0
        %2405 = vmatprep.subr.mxu0 0.0
        %2406 = vmatpush1.xpose.msra.mxu0 0.0
        %2407 = vmatprep.subr.mxu0 0.0
        %2408 = vmatpush1.xpose.msra.mxu0 0.0
        %2409 = vmatprep.subr.mxu0 0.0
        %2410 = vmatpush1.xpose.msra.mxu0 0.0
        %2411 = vmatprep.subr.mxu0 0.0
        %2412 = vmatpush1.xpose.msra.mxu0 0.0
        %2413 = vmatprep.subr.mxu0 0.0
        %2414 = vmatpush1.xpose.msra.mxu0 0.0
        %2415 = vmatprep.subr.mxu0 0.0
        %2416 = vmatpush1.xpose.msra.mxu0 0.0
        %2417 = vmatprep.subr.mxu0 0.0
        %2418 = vmatpush1.xpose.msra.mxu0 0.0
        %2419 = vmatprep.subr.mxu0 0.0
        %2420 = vmatpush1.xpose.msra.mxu0 0.0
        %2421 = vmatprep.subr.mxu0 0.0
        %2422 = vmatpush1.xpose.msra.mxu0 0.0
        %2423 = vmatprep.subr.mxu0 0.0
        %2424 = vmatpush1.xpose.msra.mxu0 0.0
        %2425 = vmatprep.subr.mxu0 0.0
        %2426 = vmatpush1.xpose.msra.mxu0 0.0
        %2427 = vmatprep.subr.mxu0 0.0
        %2428 = vmatpush1.xpose.msra.mxu0 0.0
        %2429 = vmatprep.subr.mxu0 0.0
        %2430 = vmatpush1.xpose.msra.mxu0 0.0
        %2431 = vmatprep.subr.mxu0 0.0
        %2432 = vmatpush1.xpose.msra.mxu0 0.0
        %2433 = vmatprep.subr.mxu0 0.0
        %2434 = vmatpush1.xpose.msra.mxu0 0.0
        %2435 = vmatprep.subr.mxu0 0.0
        %2436 = vmatpush1.xpose.msra.mxu0 0.0
        %2437 = vmatprep.subr.mxu0 0.0
        %2438 = vmatpush1.xpose.msra.mxu0 0.0
        %2439 = vmatprep.subr.mxu0 0.0
        %2440 = vmatpush1.xpose.msra.mxu0 0.0
        %2441 = vmatprep.subr.mxu0 0.0
        %2442 = vmatpush1.xpose.msra.mxu0 0.0
        %2443 = vmatprep.subr.mxu0 0.0
        %2444 = vmatpush1.xpose.msra.mxu0 0.0
        %2445 = vmatprep.mubr.f32.mxu0 0.0
        %v2446 = vand.u32 %v1509, 4294901760
        %v2447 = vsub.f32 %v1509, %v2446
        %v2448 = vand.u32 %v2447, 4294901760
        %2449 = vmatmul.mubr.f32.gmra.mrb[0].mxu0 %v2448
        %v2450 = vpop.f32.mrb[0].mxu0
        %v2451 = vadd.f32 %v2377, %v2450
        %v2452 = vpop.f32.mrb[0].mxu0
        %2453 = vdwg.mxu0
        %2454 = vmatprep.subr.mxu0 0.0
        %v2455 = vand.u32 %v1511, 4294901760
        %v2456 = vsub.f32 %v1511, %v2455
        %v2457 = vand.u32 %v2456, 4294901760
        %2458 = vmatpush1.xpose.msra.mxu0 %v2457
        %2459 = vmatprep.subr.mxu0 0.0
        %2460 = vmatpush1.xpose.msra.mxu0 0.0
        %2461 = vmatprep.subr.mxu0 0.0
        %2462 = vmatpush1.xpose.msra.mxu0 0.0
        %2463 = vmatprep.subr.mxu0 0.0
        %2464 = vmatpush1.xpose.msra.mxu0 0.0
        %2465 = vmatprep.subr.mxu0 0.0
        %2466 = vmatpush1.xpose.msra.mxu0 0.0
        %2467 = vmatprep.subr.mxu0 0.0
        %2468 = vmatpush1.xpose.msra.mxu0 0.0
        %2469 = vmatprep.subr.mxu0 0.0
        %2470 = vmatpush1.xpose.msra.mxu0 0.0
        %2471 = vmatprep.subr.mxu0 0.0
        %2472 = vmatpush1.xpose.msra.mxu0 0.0
        %2473 = vmatprep.subr.mxu0 0.0
        %2474 = vmatpush1.xpose.msra.mxu0 0.0
        %2475 = vmatprep.subr.mxu0 0.0
        %2476 = vmatpush1.xpose.msra.mxu0 0.0
        %2477 = vmatprep.subr.mxu0 0.0
        %2478 = vmatpush1.xpose.msra.mxu0 0.0
        %2479 = vmatprep.subr.mxu0 0.0
        %2480 = vmatpush1.xpose.msra.mxu0 0.0
        %2481 = vmatprep.subr.mxu0 0.0
        %2482 = vmatpush1.xpose.msra.mxu0 0.0
        %2483 = vmatprep.subr.mxu0 0.0
        %2484 = vmatpush1.xpose.msra.mxu0 0.0
        %2485 = vmatprep.subr.mxu0 0.0
        %2486 = vmatpush1.xpose.msra.mxu0 0.0
        %2487 = vmatprep.subr.mxu0 0.0
        %2488 = vmatpush1.xpose.msra.mxu0 0.0
        %2489 = vmatprep.subr.mxu0 0.0
        %2490 = vmatpush1.xpose.msra.mxu0 0.0
        %2491 = vmatprep.subr.mxu0 0.0
        %2492 = vmatpush1.xpose.msra.mxu0 0.0
        %2493 = vmatprep.subr.mxu0 0.0
        %2494 = vmatpush1.xpose.msra.mxu0 0.0
        %2495 = vmatprep.subr.mxu0 0.0
        %2496 = vmatpush1.xpose.msra.mxu0 0.0
        %2497 = vmatprep.subr.mxu0 0.0
        %2498 = vmatpush1.xpose.msra.mxu0 0.0
        %2499 = vmatprep.subr.mxu0 0.0
        %2500 = vmatpush1.xpose.msra.mxu0 0.0
        %2501 = vmatprep.subr.mxu0 0.0
        %2502 = vmatpush1.xpose.msra.mxu0 0.0
        %2503 = vmatprep.subr.mxu0 0.0
        %2504 = vmatpush1.xpose.msra.mxu0 0.0
        %2505 = vmatprep.subr.mxu0 0.0
        %2506 = vmatpush1.xpose.msra.mxu0 0.0
        %2507 = vmatprep.subr.mxu0 0.0
        %2508 = vmatpush1.xpose.msra.mxu0 0.0
        %2509 = vmatprep.subr.mxu0 0.0
        %2510 = vmatpush1.xpose.msra.mxu0 0.0
        %2511 = vmatprep.subr.mxu0 0.0
        %2512 = vmatpush1.xpose.msra.mxu0 0.0
        %2513 = vmatprep.subr.mxu0 0.0
        %2514 = vmatpush1.xpose.msra.mxu0 0.0
        %2515 = vmatprep.subr.mxu0 0.0
        %2516 = vmatpush1.xpose.msra.mxu0 0.0
        %2517 = vmatprep.subr.mxu0 0.0
        %2518 = vmatpush1.xpose.msra.mxu0 0.0
        %2519 = vmatprep.subr.mxu0 0.0
        %2520 = vmatpush1.xpose.msra.mxu0 0.0
        %2521 = vmatprep.mubr.f32.mxu0 0.0
        %v2522 = vand.u32 %v1509, 4294901760
        %2523 = vmatmul.mubr.f32.gmra.mrb[0].mxu0 %v2522
        %v2524 = vpop.f32.mrb[0].mxu0
        %v2525 = vadd.f32 %v2451, %v2524
        %v2526 = vpop.f32.mrb[0].mxu0
        %2527 = vdwg.mxu0
        %2528 = vmatprep.subr.mxu0 0.0
        %v2529 = vand.u32 %v1511, 4294901760
        %2530 = vmatpush1.xpose.msra.mxu0 %v2529
        %2531 = vmatprep.subr.mxu0 0.0
        %2532 = vmatpush1.xpose.msra.mxu0 0.0
        %2533 = vmatprep.subr.mxu0 0.0
        %2534 = vmatpush1.xpose.msra.mxu0 0.0
        %2535 = vmatprep.subr.mxu0 0.0
        %2536 = vmatpush1.xpose.msra.mxu0 0.0
        %2537 = vmatprep.subr.mxu0 0.0
        %2538 = vmatpush1.xpose.msra.mxu0 0.0
        %2539 = vmatprep.subr.mxu0 0.0
        %2540 = vmatpush1.xpose.msra.mxu0 0.0
        %2541 = vmatprep.subr.mxu0 0.0
        %2542 = vmatpush1.xpose.msra.mxu0 0.0
        %2543 = vmatprep.subr.mxu0 0.0
        %2544 = vmatpush1.xpose.msra.mxu0 0.0
        %2545 = vmatprep.subr.mxu0 0.0
        %2546 = vmatpush1.xpose.msra.mxu0 0.0
        %2547 = vmatprep.subr.mxu0 0.0
        %2548 = vmatpush1.xpose.msra.mxu0 0.0
        %2549 = vmatprep.subr.mxu0 0.0
        %2550 = vmatpush1.xpose.msra.mxu0 0.0
        %2551 = vmatprep.subr.mxu0 0.0
        %2552 = vmatpush1.xpose.msra.mxu0 0.0
        %2553 = vmatprep.subr.mxu0 0.0
        %2554 = vmatpush1.xpose.msra.mxu0 0.0
        %2555 = vmatprep.subr.mxu0 0.0
        %2556 = vmatpush1.xpose.msra.mxu0 0.0
        %2557 = vmatprep.subr.mxu0 0.0
        %2558 = vmatpush1.xpose.msra.mxu0 0.0
        %2559 = vmatprep.subr.mxu0 0.0
        %2560 = vmatpush1.xpose.msra.mxu0 0.0
        %2561 = vmatprep.subr.mxu0 0.0
        %2562 = vmatpush1.xpose.msra.mxu0 0.0
        %2563 = vmatprep.subr.mxu0 0.0
        %2564 = vmatpush1.xpose.msra.mxu0 0.0
        %2565 = vmatprep.subr.mxu0 0.0
        %2566 = vmatpush1.xpose.msra.mxu0 0.0
        %2567 = vmatprep.subr.mxu0 0.0
        %2568 = vmatpush1.xpose.msra.mxu0 0.0
        %2569 = vmatprep.subr.mxu0 0.0
        %2570 = vmatpush1.xpose.msra.mxu0 0.0
        %2571 = vmatprep.subr.mxu0 0.0
        %2572 = vmatpush1.xpose.msra.mxu0 0.0
        %2573 = vmatprep.subr.mxu0 0.0
        %2574 = vmatpush1.xpose.msra.mxu0 0.0
        %2575 = vmatprep.subr.mxu0 0.0
        %2576 = vmatpush1.xpose.msra.mxu0 0.0
        %2577 = vmatprep.subr.mxu0 0.0
        %2578 = vmatpush1.xpose.msra.mxu0 0.0
        %2579 = vmatprep.subr.mxu0 0.0
        %2580 = vmatpush1.xpose.msra.mxu0 0.0
        %2581 = vmatprep.subr.mxu0 0.0
        %2582 = vmatpush1.xpose.msra.mxu0 0.0
        %2583 = vmatprep.subr.mxu0 0.0
        %2584 = vmatpush1.xpose.msra.mxu0 0.0
        %2585 = vmatprep.subr.mxu0 0.0
        %2586 = vmatpush1.xpose.msra.mxu0 0.0
        %2587 = vmatprep.subr.mxu0 0.0
        %2588 = vmatpush1.xpose.msra.mxu0 0.0
        %2589 = vmatprep.subr.mxu0 0.0
        %2590 = vmatpush1.xpose.msra.mxu0 0.0
        %2591 = vmatprep.subr.mxu0 0.0
        %2592 = vmatpush1.xpose.msra.mxu0 0.0
        %2593 = vmatprep.mubr.f32.mxu0 0.0
        %v2594 = vand.u32 %v1509, 4294901760
        %2595 = vmatmul.mubr.f32.gmra.mrb[0].mxu0 %v2594
        %v2596 = vpop.f32.mrb[0].mxu0
        %v2597 = vadd.f32 %v2525, %v2596
        %v2598 = vpop.f32.mrb[0].mxu0
        %2599 = vdwg.mxu0
        %vm2600 = vcmask 64512
        %v2602 = vsel %vm2600, %v2597, 0
        %2604 = vmatprep.subr.mxu0 0.0
        %v2605 = vand.u32 %v2151, 4294901760
        %2606 = vmatpush1.msra.mxu0 %v2605
        %2607 = vmatprep.subr.mxu0 0.0
        %2608 = vmatpush1.msra.mxu0 0.0
        %2609 = vmatprep.subr.mxu0 0.0
        %2610 = vmatpush1.msra.mxu0 0.0
        %2611 = vmatprep.subr.mxu0 0.0
        %2612 = vmatpush1.msra.mxu0 0.0
        %2613 = vmatprep.subr.mxu0 0.0
        %2614 = vmatpush1.msra.mxu0 0.0
        %2615 = vmatprep.subr.mxu0 0.0
        %2616 = vmatpush1.msra.mxu0 0.0
        %2617 = vmatprep.subr.mxu0 0.0
        %2618 = vmatpush1.msra.mxu0 0.0
        %2619 = vmatprep.subr.mxu0 0.0
        %2620 = vmatpush1.msra.mxu0 0.0
        %2621 = vmatprep.subr.mxu0 0.0
        %2622 = vmatpush1.msra.mxu0 0.0
        %2623 = vmatprep.subr.mxu0 0.0
        %2624 = vmatpush1.msra.mxu0 0.0
        %2625 = vmatprep.subr.mxu0 0.0
        %2626 = vmatpush1.msra.mxu0 0.0
        %2627 = vmatprep.subr.mxu0 0.0
        %2628 = vmatpush1.msra.mxu0 0.0
        %2629 = vmatprep.subr.mxu0 0.0
        %2630 = vmatpush1.msra.mxu0 0.0
        %2631 = vmatprep.subr.mxu0 0.0
        %2632 = vmatpush1.msra.mxu0 0.0
        %2633 = vmatprep.subr.mxu0 0.0
        %2634 = vmatpush1.msra.mxu0 0.0
        %2635 = vmatprep.subr.mxu0 0.0
        %2636 = vmatpush1.msra.mxu0 0.0
        %2637 = vmatprep.subr.mxu0 0.0
        %2638 = vmatpush1.msra.mxu0 0.0
        %2639 = vmatprep.subr.mxu0 0.0
        %2640 = vmatpush1.msra.mxu0 0.0
        %2641 = vmatprep.subr.mxu0 0.0
        %2642 = vmatpush1.msra.mxu0 0.0
        %2643 = vmatprep.subr.mxu0 0.0
        %2644 = vmatpush1.msra.mxu0 0.0
        %2645 = vmatprep.subr.mxu0 0.0
        %2646 = vmatpush1.msra.mxu0 0.0
        %2647 = vmatprep.subr.mxu0 0.0
        %2648 = vmatpush1.msra.mxu0 0.0
        %2649 = vmatprep.subr.mxu0 0.0
        %2650 = vmatpush1.msra.mxu0 0.0
        %2651 = vmatprep.subr.mxu0 0.0
        %2652 = vmatpush1.msra.mxu0 0.0
        %2653 = vmatprep.subr.mxu0 0.0
        %2654 = vmatpush1.msra.mxu0 0.0
        %2655 = vmatprep.subr.mxu0 0.0
        %2656 = vmatpush1.msra.mxu0 0.0
        %2657 = vmatprep.subr.mxu0 0.0
        %2658 = vmatpush1.msra.mxu0 0.0
        %2659 = vmatprep.subr.mxu0 0.0
        %2660 = vmatpush1.msra.mxu0 0.0
        %2661 = vmatprep.subr.mxu0 0.0
        %2662 = vmatpush1.msra.mxu0 0.0
        %2663 = vmatprep.subr.mxu0 0.0
        %2664 = vmatpush1.msra.mxu0 0.0
        %2665 = vmatprep.subr.mxu0 0.0
        %2666 = vmatpush1.msra.mxu0 0.0
        %2667 = vmatprep.subr.mxu0 0.0
        %2668 = vmatpush1.msra.mxu0 0.0
        %2669 = vmatprep.mubr.f32.mxu0 0.0
        %v2670 = vand.u32 %v2602, 4294901760
        %v2671 = vsub.f32 %v2602, %v2670
        %v2672 = vand.u32 %v2671, 4294901760
        %v2673 = vsub.f32 %v2671, %v2672
        %v2674 = vand.u32 %v2673, 4294901760
        %2675 = vmatmul.mubr.f32.gmra.mrb[0].mxu0 %v2674
        %v2676 = vpop.f32.mrb[0].mxu0
        %v2677 = vadd.f32 0.0, %v2676
        %v2678 = vpop.f32.mrb[0].mxu0
        %2679 = vdwg.mxu0
        %2680 = vmatprep.subr.mxu0 0.0
        %v2681 = vand.u32 %v2151, 4294901760
        %v2682 = vsub.f32 %v2151, %v2681
        %v2683 = vand.u32 %v2682, 4294901760
        %v2684 = vsub.f32 %v2682, %v2683
        %v2685 = vand.u32 %v2684, 4294901760
        %2686 = vmatpush1.msra.mxu0 %v2685
        %2687 = vmatprep.subr.mxu0 0.0
        %2688 = vmatpush1.msra.mxu0 0.0
        %2689 = vmatprep.subr.mxu0 0.0
        %2690 = vmatpush1.msra.mxu0 0.0
        %2691 = vmatprep.subr.mxu0 0.0
        %2692 = vmatpush1.msra.mxu0 0.0
        %2693 = vmatprep.subr.mxu0 0.0
        %2694 = vmatpush1.msra.mxu0 0.0
        %2695 = vmatprep.subr.mxu0 0.0
        %2696 = vmatpush1.msra.mxu0 0.0
        %2697 = vmatprep.subr.mxu0 0.0
        %2698 = vmatpush1.msra.mxu0 0.0
        %2699 = vmatprep.subr.mxu0 0.0
        %2700 = vmatpush1.msra.mxu0 0.0
        %2701 = vmatprep.subr.mxu0 0.0
        %2702 = vmatpush1.msra.mxu0 0.0
        %2703 = vmatprep.subr.mxu0 0.0
        %2704 = vmatpush1.msra.mxu0 0.0
        %2705 = vmatprep.subr.mxu0 0.0
        %2706 = vmatpush1.msra.mxu0 0.0
        %2707 = vmatprep.subr.mxu0 0.0
        %2708 = vmatpush1.msra.mxu0 0.0
        %2709 = vmatprep.subr.mxu0 0.0
        %2710 = vmatpush1.msra.mxu0 0.0
        %2711 = vmatprep.subr.mxu0 0.0
        %2712 = vmatpush1.msra.mxu0 0.0
        %2713 = vmatprep.subr.mxu0 0.0
        %2714 = vmatpush1.msra.mxu0 0.0
        %2715 = vmatprep.subr.mxu0 0.0
        %2716 = vmatpush1.msra.mxu0 0.0
        %2717 = vmatprep.subr.mxu0 0.0
        %2718 = vmatpush1.msra.mxu0 0.0
        %2719 = vmatprep.subr.mxu0 0.0
        %2720 = vmatpush1.msra.mxu0 0.0
        %2721 = vmatprep.subr.mxu0 0.0
        %2722 = vmatpush1.msra.mxu0 0.0
        %2723 = vmatprep.subr.mxu0 0.0
        %2724 = vmatpush1.msra.mxu0 0.0
        %2725 = vmatprep.subr.mxu0 0.0
        %2726 = vmatpush1.msra.mxu0 0.0
        %2727 = vmatprep.subr.mxu0 0.0
        %2728 = vmatpush1.msra.mxu0 0.0
        %2729 = vmatprep.subr.mxu0 0.0
        %2730 = vmatpush1.msra.mxu0 0.0
        %2731 = vmatprep.subr.mxu0 0.0
        %2732 = vmatpush1.msra.mxu0 0.0
        %2733 = vmatprep.subr.mxu0 0.0
        %2734 = vmatpush1.msra.mxu0 0.0
        %2735 = vmatprep.subr.mxu0 0.0
        %2736 = vmatpush1.msra.mxu0 0.0
        %2737 = vmatprep.subr.mxu0 0.0
        %2738 = vmatpush1.msra.mxu0 0.0
        %2739 = vmatprep.subr.mxu0 0.0
        %2740 = vmatpush1.msra.mxu0 0.0
        %2741 = vmatprep.subr.mxu0 0.0
        %2742 = vmatpush1.msra.mxu0 0.0
        %2743 = vmatprep.subr.mxu0 0.0
        %2744 = vmatpush1.msra.mxu0 0.0
        %2745 = vmatprep.subr.mxu0 0.0
        %2746 = vmatpush1.msra.mxu0 0.0
        %2747 = vmatprep.subr.mxu0 0.0
        %2748 = vmatpush1.msra.mxu0 0.0
        %2749 = vmatprep.mubr.f32.mxu0 0.0
        %v2750 = vand.u32 %v2602, 4294901760
        %2751 = vmatmul.mubr.f32.gmra.mrb[0].mxu0 %v2750
        %v2752 = vpop.f32.mrb[0].mxu0
        %v2753 = vadd.f32 %v2677, %v2752
        %v2754 = vpop.f32.mrb[0].mxu0
        %2755 = vdwg.mxu0
        %2756 = vmatprep.subr.mxu0 0.0
        %v2757 = vand.u32 %v2151, 4294901760
        %v2758 = vsub.f32 %v2151, %v2757
        %2759 = vmatpush1.msra.mxu0 %v2758
        %2760 = vmatprep.subr.mxu0 0.0
        %2761 = vmatpush1.msra.mxu0 0.0
        %2762 = vmatprep.subr.mxu0 0.0
        %2763 = vmatpush1.msra.mxu0 0.0
        %2764 = vmatprep.subr.mxu0 0.0
        %2765 = vmatpush1.msra.mxu0 0.0
        %2766 = vmatprep.subr.mxu0 0.0
        %2767 = vmatpush1.msra.mxu0 0.0
        %2768 = vmatprep.subr.mxu0 0.0
        %2769 = vmatpush1.msra.mxu0 0.0
        %2770 = vmatprep.subr.mxu0 0.0
        %2771 = vmatpush1.msra.mxu0 0.0
        %2772 = vmatprep.subr.mxu0 0.0
        %2773 = vmatpush1.msra.mxu0 0.0
        %2774 = vmatprep.subr.mxu0 0.0
        %2775 = vmatpush1.msra.mxu0 0.0
        %2776 = vmatprep.subr.mxu0 0.0
        %2777 = vmatpush1.msra.mxu0 0.0
        %2778 = vmatprep.subr.mxu0 0.0
        %2779 = vmatpush1.msra.mxu0 0.0
        %2780 = vmatprep.subr.mxu0 0.0
        %2781 = vmatpush1.msra.mxu0 0.0
        %2782 = vmatprep.subr.mxu0 0.0
        %2783 = vmatpush1.msra.mxu0 0.0
        %2784 = vmatprep.subr.mxu0 0.0
        %2785 = vmatpush1.msra.mxu0 0.0
        %2786 = vmatprep.subr.mxu0 0.0
        %2787 = vmatpush1.msra.mxu0 0.0
        %2788 = vmatprep.subr.mxu0 0.0
        %2789 = vmatpush1.msra.mxu0 0.0
        %2790 = vmatprep.subr.mxu0 0.0
        %2791 = vmatpush1.msra.mxu0 0.0
        %2792 = vmatprep.subr.mxu0 0.0
        %2793 = vmatpush1.msra.mxu0 0.0
        %2794 = vmatprep.subr.mxu0 0.0
        %2795 = vmatpush1.msra.mxu0 0.0
        %2796 = vmatprep.subr.mxu0 0.0
        %2797 = vmatpush1.msra.mxu0 0.0
        %2798 = vmatprep.subr.mxu0 0.0
        %2799 = vmatpush1.msra.mxu0 0.0
        %2800 = vmatprep.subr.mxu0 0.0
        %2801 = vmatpush1.msra.mxu0 0.0
        %2802 = vmatprep.subr.mxu0 0.0
        %2803 = vmatpush1.msra.mxu0 0.0
        %2804 = vmatprep.subr.mxu0 0.0
        %2805 = vmatpush1.msra.mxu0 0.0
        %2806 = vmatprep.subr.mxu0 0.0
        %2807 = vmatpush1.msra.mxu0 0.0
        %2808 = vmatprep.subr.mxu0 0.0
        %2809 = vmatpush1.msra.mxu0 0.0
        %2810 = vmatprep.subr.mxu0 0.0
        %2811 = vmatpush1.msra.mxu0 0.0
        %2812 = vmatprep.subr.mxu0 0.0
        %2813 = vmatpush1.msra.mxu0 0.0
        %2814 = vmatprep.subr.mxu0 0.0
        %2815 = vmatpush1.msra.mxu0 0.0
        %2816 = vmatprep.subr.mxu0 0.0
        %2817 = vmatpush1.msra.mxu0 0.0
        %2818 = vmatprep.subr.mxu0 0.0
        %2819 = vmatpush1.msra.mxu0 0.0
        %2820 = vmatprep.subr.mxu0 0.0
        %2821 = vmatpush1.msra.mxu0 0.0
        %2822 = vmatprep.mubr.f32.mxu0 0.0
        %v2823 = vand.u32 %v2602, 4294901760
        %v2824 = vsub.f32 %v2602, %v2823
        %2825 = vmatmul.mubr.f32.gmra.mrb[0].mxu0 %v2824
        %v2826 = vpop.f32.mrb[0].mxu0
        %v2827 = vadd.f32 %v2753, %v2826
        %v2828 = vpop.f32.mrb[0].mxu0
        %2829 = vdwg.mxu0
        %2830 = vmatprep.subr.mxu0 0.0
        %v2831 = vand.u32 %v2151, 4294901760
        %2832 = vmatpush1.msra.mxu0 %v2831
        %2833 = vmatprep.subr.mxu0 0.0
        %2834 = vmatpush1.msra.mxu0 0.0
        %2835 = vmatprep.subr.mxu0 0.0
        %2836 = vmatpush1.msra.mxu0 0.0
        %2837 = vmatprep.subr.mxu0 0.0
        %2838 = vmatpush1.msra.mxu0 0.0
        %2839 = vmatprep.subr.mxu0 0.0
        %2840 = vmatpush1.msra.mxu0 0.0
        %2841 = vmatprep.subr.mxu0 0.0
        %2842 = vmatpush1.msra.mxu0 0.0
        %2843 = vmatprep.subr.mxu0 0.0
        %2844 = vmatpush1.msra.mxu0 0.0
        %2845 = vmatprep.subr.mxu0 0.0
        %2846 = vmatpush1.msra.mxu0 0.0
        %2847 = vmatprep.subr.mxu0 0.0
        %2848 = vmatpush1.msra.mxu0 0.0
        %2849 = vmatprep.subr.mxu0 0.0
        %2850 = vmatpush1.msra.mxu0 0.0
        %2851 = vmatprep.subr.mxu0 0.0
        %2852 = vmatpush1.msra.mxu0 0.0
        %2853 = vmatprep.subr.mxu0 0.0
        %2854 = vmatpush1.msra.mxu0 0.0
        %2855 = vmatprep.subr.mxu0 0.0
        %2856 = vmatpush1.msra.mxu0 0.0
        %2857 = vmatprep.subr.mxu0 0.0
        %2858 = vmatpush1.msra.mxu0 0.0
        %2859 = vmatprep.subr.mxu0 0.0
        %2860 = vmatpush1.msra.mxu0 0.0
        %2861 = vmatprep.subr.mxu0 0.0
        %2862 = vmatpush1.msra.mxu0 0.0
        %2863 = vmatprep.subr.mxu0 0.0
        %2864 = vmatpush1.msra.mxu0 0.0
        %2865 = vmatprep.subr.mxu0 0.0
        %2866 = vmatpush1.msra.mxu0 0.0
        %2867 = vmatprep.subr.mxu0 0.0
        %2868 = vmatpush1.msra.mxu0 0.0
        %2869 = vmatprep.subr.mxu0 0.0
        %2870 = vmatpush1.msra.mxu0 0.0
        %2871 = vmatprep.subr.mxu0 0.0
        %2872 = vmatpush1.msra.mxu0 0.0
        %2873 = vmatprep.subr.mxu0 0.0
        %2874 = vmatpush1.msra.mxu0 0.0
        %2875 = vmatprep.subr.mxu0 0.0
        %2876 = vmatpush1.msra.mxu0 0.0
        %2877 = vmatprep.subr.mxu0 0.0
        %2878 = vmatpush1.msra.mxu0 0.0
        %2879 = vmatprep.subr.mxu0 0.0
        %2880 = vmatpush1.msra.mxu0 0.0
        %2881 = vmatprep.subr.mxu0 0.0
        %2882 = vmatpush1.msra.mxu0 0.0
        %2883 = vmatprep.subr.mxu0 0.0
        %2884 = vmatpush1.msra.mxu0 0.0
        %2885 = vmatprep.subr.mxu0 0.0
        %2886 = vmatpush1.msra.mxu0 0.0
        %2887 = vmatprep.subr.mxu0 0.0
        %2888 = vmatpush1.msra.mxu0 0.0
        %2889 = vmatprep.subr.mxu0 0.0
        %2890 = vmatpush1.msra.mxu0 0.0
        %2891 = vmatprep.subr.mxu0 0.0
        %2892 = vmatpush1.msra.mxu0 0.0
        %2893 = vmatprep.subr.mxu0 0.0
        %2894 = vmatpush1.msra.mxu0 0.0
        %2895 = vmatprep.mubr.f32.mxu0 0.0
        %v2896 = vand.u32 %v2602, 4294901760
        %v2897 = vsub.f32 %v2602, %v2896
        %v2898 = vand.u32 %v2897, 4294901760
        %2899 = vmatmul.mubr.f32.gmra.mrb[0].mxu0 %v2898
        %v2900 = vpop.f32.mrb[0].mxu0
        %v2901 = vadd.f32 %v2827, %v2900
        %v2902 = vpop.f32.mrb[0].mxu0
        %2903 = vdwg.mxu0
        %2904 = vmatprep.subr.mxu0 0.0
        %v2905 = vand.u32 %v2151, 4294901760
        %v2906 = vsub.f32 %v2151, %v2905
        %v2907 = vand.u32 %v2906, 4294901760
        %2908 = vmatpush1.msra.mxu0 %v2907
        %2909 = vmatprep.subr.mxu0 0.0
        %2910 = vmatpush1.msra.mxu0 0.0
        %2911 = vmatprep.subr.mxu0 0.0
        %2912 = vmatpush1.msra.mxu0 0.0
        %2913 = vmatprep.subr.mxu0 0.0
        %2914 = vmatpush1.msra.mxu0 0.0
        %2915 = vmatprep.subr.mxu0 0.0
        %2916 = vmatpush1.msra.mxu0 0.0
        %2917 = vmatprep.subr.mxu0 0.0
        %2918 = vmatpush1.msra.mxu0 0.0
        %2919 = vmatprep.subr.mxu0 0.0
        %2920 = vmatpush1.msra.mxu0 0.0
        %2921 = vmatprep.subr.mxu0 0.0
        %2922 = vmatpush1.msra.mxu0 0.0
        %2923 = vmatprep.subr.mxu0 0.0
        %2924 = vmatpush1.msra.mxu0 0.0
        %2925 = vmatprep.subr.mxu0 0.0
        %2926 = vmatpush1.msra.mxu0 0.0
        %2927 = vmatprep.subr.mxu0 0.0
        %2928 = vmatpush1.msra.mxu0 0.0
        %2929 = vmatprep.subr.mxu0 0.0
        %2930 = vmatpush1.msra.mxu0 0.0
        %2931 = vmatprep.subr.mxu0 0.0
        %2932 = vmatpush1.msra.mxu0 0.0
        %2933 = vmatprep.subr.mxu0 0.0
        %2934 = vmatpush1.msra.mxu0 0.0
        %2935 = vmatprep.subr.mxu0 0.0
        %2936 = vmatpush1.msra.mxu0 0.0
        %2937 = vmatprep.subr.mxu0 0.0
        %2938 = vmatpush1.msra.mxu0 0.0
        %2939 = vmatprep.subr.mxu0 0.0
        %2940 = vmatpush1.msra.mxu0 0.0
        %2941 = vmatprep.subr.mxu0 0.0
        %2942 = vmatpush1.msra.mxu0 0.0
        %2943 = vmatprep.subr.mxu0 0.0
        %2944 = vmatpush1.msra.mxu0 0.0
        %2945 = vmatprep.subr.mxu0 0.0
        %2946 = vmatpush1.msra.mxu0 0.0
        %2947 = vmatprep.subr.mxu0 0.0
        %2948 = vmatpush1.msra.mxu0 0.0
        %2949 = vmatprep.subr.mxu0 0.0
        %2950 = vmatpush1.msra.mxu0 0.0
        %2951 = vmatprep.subr.mxu0 0.0
        %2952 = vmatpush1.msra.mxu0 0.0
        %2953 = vmatprep.subr.mxu0 0.0
        %2954 = vmatpush1.msra.mxu0 0.0
        %2955 = vmatprep.subr.mxu0 0.0
        %2956 = vmatpush1.msra.mxu0 0.0
        %2957 = vmatprep.subr.mxu0 0.0
        %2958 = vmatpush1.msra.mxu0 0.0
        %2959 = vmatprep.subr.mxu0 0.0
        %2960 = vmatpush1.msra.mxu0 0.0
        %2961 = vmatprep.subr.mxu0 0.0
        %2962 = vmatpush1.msra.mxu0 0.0
        %2963 = vmatprep.subr.mxu0 0.0
        %2964 = vmatpush1.msra.mxu0 0.0
        %2965 = vmatprep.subr.mxu0 0.0
        %2966 = vmatpush1.msra.mxu0 0.0
        %2967 = vmatprep.subr.mxu0 0.0
        %2968 = vmatpush1.msra.mxu0 0.0
        %2969 = vmatprep.subr.mxu0 0.0
        %2970 = vmatpush1.msra.mxu0 0.0
        %2971 = vmatprep.mubr.f32.mxu0 0.0
        %v2972 = vand.u32 %v2602, 4294901760
        %2973 = vmatmul.mubr.f32.gmra.mrb[0].mxu0 %v2972
        %v2974 = vpop.f32.mrb[0].mxu0
        %v2975 = vadd.f32 %v2901, %v2974
        %v2976 = vpop.f32.mrb[0].mxu0
        %2977 = vdwg.mxu0
        %2978 = vmatprep.subr.mxu0 0.0
        %v2979 = vand.u32 %v2151, 4294901760
        %2980 = vmatpush1.msra.mxu0 %v2979
        %2981 = vmatprep.subr.mxu0 0.0
        %2982 = vmatpush1.msra.mxu0 0.0
        %2983 = vmatprep.subr.mxu0 0.0
        %2984 = vmatpush1.msra.mxu0 0.0
        %2985 = vmatprep.subr.mxu0 0.0
        %2986 = vmatpush1.msra.mxu0 0.0
        %2987 = vmatprep.subr.mxu0 0.0
        %2988 = vmatpush1.msra.mxu0 0.0
        %2989 = vmatprep.subr.mxu0 0.0
        %2990 = vmatpush1.msra.mxu0 0.0
        %2991 = vmatprep.subr.mxu0 0.0
        %2992 = vmatpush1.msra.mxu0 0.0
        %2993 = vmatprep.subr.mxu0 0.0
        %2994 = vmatpush1.msra.mxu0 0.0
        %2995 = vmatprep.subr.mxu0 0.0
        %2996 = vmatpush1.msra.mxu0 0.0
        %2997 = vmatprep.subr.mxu0 0.0
        %2998 = vmatpush1.msra.mxu0 0.0
        %2999 = vmatprep.subr.mxu0 0.0
        %3000 = vmatpush1.msra.mxu0 0.0
        %3001 = vmatprep.subr.mxu0 0.0
        %3002 = vmatpush1.msra.mxu0 0.0
        %3003 = vmatprep.subr.mxu0 0.0
        %3004 = vmatpush1.msra.mxu0 0.0
        %3005 = vmatprep.subr.mxu0 0.0
        %3006 = vmatpush1.msra.mxu0 0.0
        %3007 = vmatprep.subr.mxu0 0.0
        %3008 = vmatpush1.msra.mxu0 0.0
        %3009 = vmatprep.subr.mxu0 0.0
        %3010 = vmatpush1.msra.mxu0 0.0
        %3011 = vmatprep.subr.mxu0 0.0
        %3012 = vmatpush1.msra.mxu0 0.0
        %3013 = vmatprep.subr.mxu0 0.0
        %3014 = vmatpush1.msra.mxu0 0.0
        %3015 = vmatprep.subr.mxu0 0.0
        %3016 = vmatpush1.msra.mxu0 0.0
        %3017 = vmatprep.subr.mxu0 0.0
        %3018 = vmatpush1.msra.mxu0 0.0
        %3019 = vmatprep.subr.mxu0 0.0
        %3020 = vmatpush1.msra.mxu0 0.0
        %3021 = vmatprep.subr.mxu0 0.0
        %3022 = vmatpush1.msra.mxu0 0.0
        %3023 = vmatprep.subr.mxu0 0.0
        %3024 = vmatpush1.msra.mxu0 0.0
        %3025 = vmatprep.subr.mxu0 0.0
        %3026 = vmatpush1.msra.mxu0 0.0
        %3027 = vmatprep.subr.mxu0 0.0
        %3028 = vmatpush1.msra.mxu0 0.0
        %3029 = vmatprep.subr.mxu0 0.0
        %3030 = vmatpush1.msra.mxu0 0.0
        %3031 = vmatprep.subr.mxu0 0.0
        %3032 = vmatpush1.msra.mxu0 0.0
        %3033 = vmatprep.subr.mxu0 0.0
        %3034 = vmatpush1.msra.mxu0 0.0
        %3035 = vmatprep.subr.mxu0 0.0
        %3036 = vmatpush1.msra.mxu0 0.0
        %3037 = vmatprep.subr.mxu0 0.0
        %3038 = vmatpush1.msra.mxu0 0.0
        %3039 = vmatprep.subr.mxu0 0.0
        %3040 = vmatpush1.msra.mxu0 0.0
        %3041 = vmatprep.subr.mxu0 0.0
        %3042 = vmatpush1.msra.mxu0 0.0
        %3043 = vmatprep.mubr.f32.mxu0 0.0
        %v3044 = vand.u32 %v2602, 4294901760
        %3045 = vmatmul.mubr.f32.gmra.mrb[0].mxu0 %v3044
        %v3046 = vpop.f32.mrb[0].mxu0
        %v3047 = vadd.f32 %v2975, %v3046
        %v3048 = vpop.f32.mrb[0].mxu0
        %3049 = vdwg.mxu0
        %3050 = vadd.xlane.f32.xlu0 %v3047
        %v3051 = vpop.xlane.xlu0 %3050
        %v3052 = vmul.f32 %v3051, 0.03125
        %v3053 = vsub.f32 %v3047, %v3052
        %v3054 = vlaneseq
        %v3055 = vand.u32 %v3054, 127
        %vm3056 = vcmp.lt.s32.totalorder %v3055, 32
        %v3057 = vsel %vm3056, %v3053, 0.0
        %v3058 = vmul.f32 %v3057, %v3057
        %3059 = vadd.xlane.f32.xlu0 %v3058
        %v3060 = vpop.xlane.xlu0 %3059
        %v3061 = vmul.f32 %v3060, 0.03125
        %v3062 = vadd.f32 %v3061, 1e-05
        %v3063 = vrsqrt.pop %v3062
        %v3064 = vmul.f32 %v3057, %v3063
        %v3065 = vld [vmem:[%s574] sm:$0x1]
        %v3067 = vlaneseq
        %v3068 = vshrl.u32 %v3067, 7
        %v3069 = vsub.s32 0, %v3068
        %v3070 = vrot.slane %v3065, %v3069
        %v3072 = vmul.f32 %v3064, %v3070
        %v3073 = vld [vmem:[%s577] sm:$0x1]
        %v3075 = vlaneseq
        %v3076 = vshrl.u32 %v3075, 7
        %v3077 = vsub.s32 0, %v3076
        %v3078 = vrot.slane %v3073, %v3077
        %v3080 = vadd.f32 %v3072, %v3078
        %v3081 = vld [vmem:[%s491] sm:$0xff]
        %v3082 = vld [vmem:[%s491 + $0x8] sm:$0xff]
        %v3083 = vld [vmem:[%s491 + $0x10] sm:$0xff]
        %v3084 = vld [vmem:[%s491 + $0x18] sm:$0xff]
        %v3085 = vld [vmem:[%s491 + $0x20] sm:$0xff]
        %v3086 = vld [vmem:[%s491 + $0x28] sm:$0xff]
        %v3087 = vld [vmem:[%s491 + $0x30] sm:$0xff]
        %v3088 = vld [vmem:[%s491 + $0x38] sm:$0xff]
        %v3089 = vld [vmem:[%s491 + $0x40] sm:$0xff]
        %v3090 = vld [vmem:[%s491 + $0x48] sm:$0xff]
        %v3091 = vld [vmem:[%s491 + $0x50] sm:$0xff]
        %v3092 = vld [vmem:[%s491 + $0x58] sm:$0xff]
        %v3093 = vld [vmem:[%s491 + $0x60] sm:$0xff]
        %v3094 = vld [vmem:[%s491 + $0x68] sm:$0xff]
        %v3095 = vld [vmem:[%s491 + $0x70] sm:$0xff]
        %v3096 = vld [vmem:[%s491 + $0x78] sm:$0xff]
        %v3097 = vld [vmem:[%s580] sm:$0x1]
        %v3099 = vlaneseq
        %v3100 = vshrl.u32 %v3099, 7
        %v3101 = vsub.s32 0, %v3100
        %v3102 = vrot.slane %v3097, %v3101
        %3104 = vmatprep.subr.mxu0 0.0
        %v3105 = vand.u32 %v3081, 4294901760
        %3106 = vmatpush1.msra.mxu0 %v3105
        %3107 = vmatprep.subr.mxu0 0.0
        %v3108 = vand.u32 %v3082, 4294901760
        %3109 = vmatpush1.msra.mxu0 %v3108
        %3110 = vmatprep.subr.mxu0 0.0
        %v3111 = vand.u32 %v3083, 4294901760
        %3112 = vmatpush1.msra.mxu0 %v3111
        %3113 = vmatprep.subr.mxu0 0.0
        %v3114 = vand.u32 %v3084, 4294901760
        %3115 = vmatpush1.msra.mxu0 %v3114
        %3116 = vmatprep.subr.mxu0 0.0
        %v3117 = vand.u32 %v3085, 4294901760
        %3118 = vmatpush1.msra.mxu0 %v3117
        %3119 = vmatprep.subr.mxu0 0.0
        %v3120 = vand.u32 %v3086, 4294901760
        %3121 = vmatpush1.msra.mxu0 %v3120
        %3122 = vmatprep.subr.mxu0 0.0
        %v3123 = vand.u32 %v3087, 4294901760
        %3124 = vmatpush1.msra.mxu0 %v3123
        %3125 = vmatprep.subr.mxu0 0.0
        %v3126 = vand.u32 %v3088, 4294901760
        %3127 = vmatpush1.msra.mxu0 %v3126
        %3128 = vmatprep.subr.mxu0 0.0
        %v3129 = vand.u32 %v3089, 4294901760
        %3130 = vmatpush1.msra.mxu0 %v3129
        %3131 = vmatprep.subr.mxu0 0.0
        %v3132 = vand.u32 %v3090, 4294901760
        %3133 = vmatpush1.msra.mxu0 %v3132
        %3134 = vmatprep.subr.mxu0 0.0
        %v3135 = vand.u32 %v3091, 4294901760
        %3136 = vmatpush1.msra.mxu0 %v3135
        %3137 = vmatprep.subr.mxu0 0.0
        %v3138 = vand.u32 %v3092, 4294901760
        %3139 = vmatpush1.msra.mxu0 %v3138
        %3140 = vmatprep.subr.mxu0 0.0
        %v3141 = vand.u32 %v3093, 4294901760
        %3142 = vmatpush1.msra.mxu0 %v3141
        %3143 = vmatprep.subr.mxu0 0.0
        %v3144 = vand.u32 %v3094, 4294901760
        %3145 = vmatpush1.msra.mxu0 %v3144
        %3146 = vmatprep.subr.mxu0 0.0
        %v3147 = vand.u32 %v3095, 4294901760
        %3148 = vmatpush1.msra.mxu0 %v3147
        %3149 = vmatprep.subr.mxu0 0.0
        %v3150 = vand.u32 %v3096, 4294901760
        %3151 = vmatpush1.msra.mxu0 %v3150
        %3152 = vmatprep.subr.mxu0 0.0
        %3153 = vmatpush1.msra.mxu0 0.0
        %3154 = vmatprep.subr.mxu0 0.0
        %3155 = vmatpush1.msra.mxu0 0.0
        %3156 = vmatprep.subr.mxu0 0.0
        %3157 = vmatpush1.msra.mxu0 0.0
        %3158 = vmatprep.subr.mxu0 0.0
        %3159 = vmatpush1.msra.mxu0 0.0
        %3160 = vmatprep.subr.mxu0 0.0
        %3161 = vmatpush1.msra.mxu0 0.0
        %3162 = vmatprep.subr.mxu0 0.0
        %3163 = vmatpush1.msra.mxu0 0.0
        %3164 = vmatprep.subr.mxu0 0.0
        %3165 = vmatpush1.msra.mxu0 0.0
        %3166 = vmatprep.subr.mxu0 0.0
        %3167 = vmatpush1.msra.mxu0 0.0
        %3168 = vmatprep.subr.mxu0 0.0
        %3169 = vmatpush1.msra.mxu0 0.0
        %3170 = vmatprep.subr.mxu0 0.0
        %3171 = vmatpush1.msra.mxu0 0.0
        %3172 = vmatprep.subr.mxu0 0.0
        %3173 = vmatpush1.msra.mxu0 0.0
        %3174 = vmatprep.subr.mxu0 0.0
        %3175 = vmatpush1.msra.mxu0 0.0
        %3176 = vmatprep.subr.mxu0 0.0
        %3177 = vmatpush1.msra.mxu0 0.0
        %3178 = vmatprep.subr.mxu0 0.0
        %3179 = vmatpush1.msra.mxu0 0.0
        %3180 = vmatprep.subr.mxu0 0.0
        %3181 = vmatpush1.msra.mxu0 0.0
        %3182 = vmatprep.subr.mxu0 0.0
        %3183 = vmatpush1.msra.mxu0 0.0
        %3184 = vmatprep.mubr.f32.mxu0 0.0
        %v3185 = vand.u32 %v3080, 4294901760
        %v3186 = vsub.f32 %v3080, %v3185
        %v3187 = vand.u32 %v3186, 4294901760
        %v3188 = vsub.f32 %v3186, %v3187
        %v3189 = vand.u32 %v3188, 4294901760
        %3190 = vmatmul.mubr.f32.gmra.mrb[0].mxu0 %v3189
        %v3191 = vpop.f32.mrb[0].mxu0
        %v3192 = vadd.f32 %v3102, %v3191
        %v3193 = vpop.f32.mrb[0].mxu0
        %3194 = vdwg.mxu0
        %3195 = vmatprep.subr.mxu0 0.0
        %v3196 = vand.u32 %v3081, 4294901760
        %v3197 = vsub.f32 %v3081, %v3196
        %v3198 = vand.u32 %v3197, 4294901760
        %v3199 = vsub.f32 %v3197, %v3198
        %v3200 = vand.u32 %v3199, 4294901760
        %3201 = vmatpush1.msra.mxu0 %v3200
        %3202 = vmatprep.subr.mxu0 0.0
        %v3203 = vand.u32 %v3082, 4294901760
        %v3204 = vsub.f32 %v3082, %v3203
        %v3205 = vand.u32 %v3204, 4294901760
        %v3206 = vsub.f32 %v3204, %v3205
        %v3207 = vand.u32 %v3206, 4294901760
        %3208 = vmatpush1.msra.mxu0 %v3207
        %3209 = vmatprep.subr.mxu0 0.0
        %v3210 = vand.u32 %v3083, 4294901760
        %v3211 = vsub.f32 %v3083, %v3210
        %v3212 = vand.u32 %v3211, 4294901760
        %v3213 = vsub.f32 %v3211, %v3212
        %v3214 = vand.u32 %v3213, 4294901760
        %3215 = vmatpush1.msra.mxu0 %v3214
        %3216 = vmatprep.subr.mxu0 0.0
        %v3217 = vand.u32 %v3084, 4294901760
        %v3218 = vsub.f32 %v3084, %v3217
        %v3219 = vand.u32 %v3218, 4294901760
        %v3220 = vsub.f32 %v3218, %v3219
        %v3221 = vand.u32 %v3220, 4294901760
        %3222 = vmatpush1.msra.mxu0 %v3221
        %3223 = vmatprep.subr.mxu0 0.0
        %v3224 = vand.u32 %v3085, 4294901760
        %v3225 = vsub.f32 %v3085, %v3224
        %v3226 = vand.u32 %v3225, 4294901760
        %v3227 = vsub.f32 %v3225, %v3226
        %v3228 = vand.u32 %v3227, 4294901760
        %3229 = vmatpush1.msra.mxu0 %v3228
        %3230 = vmatprep.subr.mxu0 0.0
        %v3231 = vand.u32 %v3086, 4294901760
        %v3232 = vsub.f32 %v3086, %v3231
        %v3233 = vand.u32 %v3232, 4294901760
        %v3234 = vsub.f32 %v3232, %v3233
        %v3235 = vand.u32 %v3234, 4294901760
        %3236 = vmatpush1.msra.mxu0 %v3235
        %3237 = vmatprep.subr.mxu0 0.0
        %v3238 = vand.u32 %v3087, 4294901760
        %v3239 = vsub.f32 %v3087, %v3238
        %v3240 = vand.u32 %v3239, 4294901760
        %v3241 = vsub.f32 %v3239, %v3240
        %v3242 = vand.u32 %v3241, 4294901760
        %3243 = vmatpush1.msra.mxu0 %v3242
        %3244 = vmatprep.subr.mxu0 0.0
        %v3245 = vand.u32 %v3088, 4294901760
        %v3246 = vsub.f32 %v3088, %v3245
        %v3247 = vand.u32 %v3246, 4294901760
        %v3248 = vsub.f32 %v3246, %v3247
        %v3249 = vand.u32 %v3248, 4294901760
        %3250 = vmatpush1.msra.mxu0 %v3249
        %3251 = vmatprep.subr.mxu0 0.0
        %v3252 = vand.u32 %v3089, 4294901760
        %v3253 = vsub.f32 %v3089, %v3252
        %v3254 = vand.u32 %v3253, 4294901760
        %v3255 = vsub.f32 %v3253, %v3254
        %v3256 = vand.u32 %v3255, 4294901760
        %3257 = vmatpush1.msra.mxu0 %v3256
        %3258 = vmatprep.subr.mxu0 0.0
        %v3259 = vand.u32 %v3090, 4294901760
        %v3260 = vsub.f32 %v3090, %v3259
        %v3261 = vand.u32 %v3260, 4294901760
        %v3262 = vsub.f32 %v3260, %v3261
        %v3263 = vand.u32 %v3262, 4294901760
        %3264 = vmatpush1.msra.mxu0 %v3263
        %3265 = vmatprep.subr.mxu0 0.0
        %v3266 = vand.u32 %v3091, 4294901760
        %v3267 = vsub.f32 %v3091, %v3266
        %v3268 = vand.u32 %v3267, 4294901760
        %v3269 = vsub.f32 %v3267, %v3268
        %v3270 = vand.u32 %v3269, 4294901760
        %3271 = vmatpush1.msra.mxu0 %v3270
        %3272 = vmatprep.subr.mxu0 0.0
        %v3273 = vand.u32 %v3092, 4294901760
        %v3274 = vsub.f32 %v3092, %v3273
        %v3275 = vand.u32 %v3274, 4294901760
        %v3276 = vsub.f32 %v3274, %v3275
        %v3277 = vand.u32 %v3276, 4294901760
        %3278 = vmatpush1.msra.mxu0 %v3277
        %3279 = vmatprep.subr.mxu0 0.0
        %v3280 = vand.u32 %v3093, 4294901760
        %v3281 = vsub.f32 %v3093, %v3280
        %v3282 = vand.u32 %v3281, 4294901760
        %v3283 = vsub.f32 %v3281, %v3282
        %v3284 = vand.u32 %v3283, 4294901760
        %3285 = vmatpush1.msra.mxu0 %v3284
        %3286 = vmatprep.subr.mxu0 0.0
        %v3287 = vand.u32 %v3094, 4294901760
        %v3288 = vsub.f32 %v3094, %v3287
        %v3289 = vand.u32 %v3288, 4294901760
        %v3290 = vsub.f32 %v3288, %v3289
        %v3291 = vand.u32 %v3290, 4294901760
        %3292 = vmatpush1.msra.mxu0 %v3291
        %3293 = vmatprep.subr.mxu0 0.0
        %v3294 = vand.u32 %v3095, 4294901760
        %v3295 = vsub.f32 %v3095, %v3294
        %v3296 = vand.u32 %v3295, 4294901760
        %v3297 = vsub.f32 %v3295, %v3296
        %v3298 = vand.u32 %v3297, 4294901760
        %3299 = vmatpush1.msra.mxu0 %v3298
        %3300 = vmatprep.subr.mxu0 0.0
        %v3301 = vand.u32 %v3096, 4294901760
        %v3302 = vsub.f32 %v3096, %v3301
        %v3303 = vand.u32 %v3302, 4294901760
        %v3304 = vsub.f32 %v3302, %v3303
        %v3305 = vand.u32 %v3304, 4294901760
        %3306 = vmatpush1.msra.mxu0 %v3305
        %3307 = vmatprep.subr.mxu0 0.0
        %3308 = vmatpush1.msra.mxu0 0.0
        %3309 = vmatprep.subr.mxu0 0.0
        %3310 = vmatpush1.msra.mxu0 0.0
        %3311 = vmatprep.subr.mxu0 0.0
        %3312 = vmatpush1.msra.mxu0 0.0
        %3313 = vmatprep.subr.mxu0 0.0
        %3314 = vmatpush1.msra.mxu0 0.0
        %3315 = vmatprep.subr.mxu0 0.0
        %3316 = vmatpush1.msra.mxu0 0.0
        %3317 = vmatprep.subr.mxu0 0.0
        %3318 = vmatpush1.msra.mxu0 0.0
        %3319 = vmatprep.subr.mxu0 0.0
        %3320 = vmatpush1.msra.mxu0 0.0
        %3321 = vmatprep.subr.mxu0 0.0
        %3322 = vmatpush1.msra.mxu0 0.0
        %3323 = vmatprep.subr.mxu0 0.0
        %3324 = vmatpush1.msra.mxu0 0.0
        %3325 = vmatprep.subr.mxu0 0.0
        %3326 = vmatpush1.msra.mxu0 0.0
        %3327 = vmatprep.subr.mxu0 0.0
        %3328 = vmatpush1.msra.mxu0 0.0
        %3329 = vmatprep.subr.mxu0 0.0
        %3330 = vmatpush1.msra.mxu0 0.0
        %3331 = vmatprep.subr.mxu0 0.0
        %3332 = vmatpush1.msra.mxu0 0.0
        %3333 = vmatprep.subr.mxu0 0.0
        %3334 = vmatpush1.msra.mxu0 0.0
        %3335 = vmatprep.subr.mxu0 0.0
        %3336 = vmatpush1.msra.mxu0 0.0
        %3337 = vmatprep.subr.mxu0 0.0
        %3338 = vmatpush1.msra.mxu0 0.0
        %3339 = vmatprep.mubr.f32.mxu0 0.0
        %v3340 = vand.u32 %v3080, 4294901760
        %3341 = vmatmul.mubr.f32.gmra.mrb[0].mxu0 %v3340
        %v3342 = vpop.f32.mrb[0].mxu0
        %v3343 = vadd.f32 %v3192, %v3342
        %v3344 = vpop.f32.mrb[0].mxu0
        %3345 = vdwg.mxu0
        %3346 = vmatprep.subr.mxu0 0.0
        %v3347 = vand.u32 %v3081, 4294901760
        %v3348 = vsub.f32 %v3081, %v3347
        %3349 = vmatpush1.msra.mxu0 %v3348
        %3350 = vmatprep.subr.mxu0 0.0
        %v3351 = vand.u32 %v3082, 4294901760
        %v3352 = vsub.f32 %v3082, %v3351
        %3353 = vmatpush1.msra.mxu0 %v3352
        %3354 = vmatprep.subr.mxu0 0.0
        %v3355 = vand.u32 %v3083, 4294901760
        %v3356 = vsub.f32 %v3083, %v3355
        %3357 = vmatpush1.msra.mxu0 %v3356
        %3358 = vmatprep.subr.mxu0 0.0
        %v3359 = vand.u32 %v3084, 4294901760
        %v3360 = vsub.f32 %v3084, %v3359
        %3361 = vmatpush1.msra.mxu0 %v3360
        %3362 = vmatprep.subr.mxu0 0.0
        %v3363 = vand.u32 %v3085, 4294901760
        %v3364 = vsub.f32 %v3085, %v3363
        %3365 = vmatpush1.msra.mxu0 %v3364
        %3366 = vmatprep.subr.mxu0 0.0
        %v3367 = vand.u32 %v3086, 4294901760
        %v3368 = vsub.f32 %v3086, %v3367
        %3369 = vmatpush1.msra.mxu0 %v3368
        %3370 = vmatprep.subr.mxu0 0.0
        %v3371 = vand.u32 %v3087, 4294901760
        %v3372 = vsub.f32 %v3087, %v3371
        %3373 = vmatpush1.msra.mxu0 %v3372
        %3374 = vmatprep.subr.mxu0 0.0
        %v3375 = vand.u32 %v3088, 4294901760
        %v3376 = vsub.f32 %v3088, %v3375
        %3377 = vmatpush1.msra.mxu0 %v3376
        %3378 = vmatprep.subr.mxu0 0.0
        %v3379 = vand.u32 %v3089, 4294901760
        %v3380 = vsub.f32 %v3089, %v3379
        %3381 = vmatpush1.msra.mxu0 %v3380
        %3382 = vmatprep.subr.mxu0 0.0
        %v3383 = vand.u32 %v3090, 4294901760
        %v3384 = vsub.f32 %v3090, %v3383
        %3385 = vmatpush1.msra.mxu0 %v3384
        %3386 = vmatprep.subr.mxu0 0.0
        %v3387 = vand.u32 %v3091, 4294901760
        %v3388 = vsub.f32 %v3091, %v3387
        %3389 = vmatpush1.msra.mxu0 %v3388
        %3390 = vmatprep.subr.mxu0 0.0
        %v3391 = vand.u32 %v3092, 4294901760
        %v3392 = vsub.f32 %v3092, %v3391
        %3393 = vmatpush1.msra.mxu0 %v3392
        %3394 = vmatprep.subr.mxu0 0.0
        %v3395 = vand.u32 %v3093, 4294901760
        %v3396 = vsub.f32 %v3093, %v3395
        %3397 = vmatpush1.msra.mxu0 %v3396
        %3398 = vmatprep.subr.mxu0 0.0
        %v3399 = vand.u32 %v3094, 4294901760
        %v3400 = vsub.f32 %v3094, %v3399
        %3401 = vmatpush1.msra.mxu0 %v3400
        %3402 = vmatprep.subr.mxu0 0.0
        %v3403 = vand.u32 %v3095, 4294901760
        %v3404 = vsub.f32 %v3095, %v3403
        %3405 = vmatpush1.msra.mxu0 %v3404
        %3406 = vmatprep.subr.mxu0 0.0
        %v3407 = vand.u32 %v3096, 4294901760
        %v3408 = vsub.f32 %v3096, %v3407
        %3409 = vmatpush1.msra.mxu0 %v3408
        %3410 = vmatprep.subr.mxu0 0.0
        %3411 = vmatpush1.msra.mxu0 0.0
        %3412 = vmatprep.subr.mxu0 0.0
        %3413 = vmatpush1.msra.mxu0 0.0
        %3414 = vmatprep.subr.mxu0 0.0
        %3415 = vmatpush1.msra.mxu0 0.0
        %3416 = vmatprep.subr.mxu0 0.0
        %3417 = vmatpush1.msra.mxu0 0.0
        %3418 = vmatprep.subr.mxu0 0.0
        %3419 = vmatpush1.msra.mxu0 0.0
        %3420 = vmatprep.subr.mxu0 0.0
        %3421 = vmatpush1.msra.mxu0 0.0
        %3422 = vmatprep.subr.mxu0 0.0
        %3423 = vmatpush1.msra.mxu0 0.0
        %3424 = vmatprep.subr.mxu0 0.0
        %3425 = vmatpush1.msra.mxu0 0.0
        %3426 = vmatprep.subr.mxu0 0.0
        %3427 = vmatpush1.msra.mxu0 0.0
        %3428 = vmatprep.subr.mxu0 0.0
        %3429 = vmatpush1.msra.mxu0 0.0
        %3430 = vmatprep.subr.mxu0 0.0
        %3431 = vmatpush1.msra.mxu0 0.0
        %3432 = vmatprep.subr.mxu0 0.0
        %3433 = vmatpush1.msra.mxu0 0.0
        %3434 = vmatprep.subr.mxu0 0.0
        %3435 = vmatpush1.msra.mxu0 0.0
        %3436 = vmatprep.subr.mxu0 0.0
        %3437 = vmatpush1.msra.mxu0 0.0
        %3438 = vmatprep.subr.mxu0 0.0
        %3439 = vmatpush1.msra.mxu0 0.0
        %3440 = vmatprep.subr.mxu0 0.0
        %3441 = vmatpush1.msra.mxu0 0.0
        %3442 = vmatprep.mubr.f32.mxu0 0.0
        %v3443 = vand.u32 %v3080, 4294901760
        %v3444 = vsub.f32 %v3080, %v3443
        %3445 = vmatmul.mubr.f32.gmra.mrb[0].mxu0 %v3444
        %v3446 = vpop.f32.mrb[0].mxu0
        %v3447 = vadd.f32 %v3343, %v3446
        %v3448 = vpop.f32.mrb[0].mxu0
        %3449 = vdwg.mxu0
        %3450 = vmatprep.subr.mxu0 0.0
        %v3451 = vand.u32 %v3081, 4294901760
        %3452 = vmatpush1.msra.mxu0 %v3451
        %3453 = vmatprep.subr.mxu0 0.0
        %v3454 = vand.u32 %v3082, 4294901760
        %3455 = vmatpush1.msra.mxu0 %v3454
        %3456 = vmatprep.subr.mxu0 0.0
        %v3457 = vand.u32 %v3083, 4294901760
        %3458 = vmatpush1.msra.mxu0 %v3457
        %3459 = vmatprep.subr.mxu0 0.0
        %v3460 = vand.u32 %v3084, 4294901760
        %3461 = vmatpush1.msra.mxu0 %v3460
        %3462 = vmatprep.subr.mxu0 0.0
        %v3463 = vand.u32 %v3085, 4294901760
        %3464 = vmatpush1.msra.mxu0 %v3463
        %3465 = vmatprep.subr.mxu0 0.0
        %v3466 = vand.u32 %v3086, 4294901760
        %3467 = vmatpush1.msra.mxu0 %v3466
        %3468 = vmatprep.subr.mxu0 0.0
        %v3469 = vand.u32 %v3087, 4294901760
        %3470 = vmatpush1.msra.mxu0 %v3469
        %3471 = vmatprep.subr.mxu0 0.0
        %v3472 = vand.u32 %v3088, 4294901760
        %3473 = vmatpush1.msra.mxu0 %v3472
        %3474 = vmatprep.subr.mxu0 0.0
        %v3475 = vand.u32 %v3089, 4294901760
        %3476 = vmatpush1.msra.mxu0 %v3475
        %3477 = vmatprep.subr.mxu0 0.0
        %v3478 = vand.u32 %v3090, 4294901760
        %3479 = vmatpush1.msra.mxu0 %v3478
        %3480 = vmatprep.subr.mxu0 0.0
        %v3481 = vand.u32 %v3091, 4294901760
        %3482 = vmatpush1.msra.mxu0 %v3481
        %3483 = vmatprep.subr.mxu0 0.0
        %v3484 = vand.u32 %v3092, 4294901760
        %3485 = vmatpush1.msra.mxu0 %v3484
        %3486 = vmatprep.subr.mxu0 0.0
        %v3487 = vand.u32 %v3093, 4294901760
        %3488 = vmatpush1.msra.mxu0 %v3487
        %3489 = vmatprep.subr.mxu0 0.0
        %v3490 = vand.u32 %v3094, 4294901760
        %3491 = vmatpush1.msra.mxu0 %v3490
        %3492 = vmatprep.subr.mxu0 0.0
        %v3493 = vand.u32 %v3095, 4294901760
        %3494 = vmatpush1.msra.mxu0 %v3493
        %3495 = vmatprep.subr.mxu0 0.0
        %v3496 = vand.u32 %v3096, 4294901760
        %3497 = vmatpush1.msra.mxu0 %v3496
        %3498 = vmatprep.subr.mxu0 0.0
        %3499 = vmatpush1.msra.mxu0 0.0
        %3500 = vmatprep.subr.mxu0 0.0
        %3501 = vmatpush1.msra.mxu0 0.0
        %3502 = vmatprep.subr.mxu0 0.0
        %3503 = vmatpush1.msra.mxu0 0.0
        %3504 = vmatprep.subr.mxu0 0.0
        %3505 = vmatpush1.msra.mxu0 0.0
        %3506 = vmatprep.subr.mxu0 0.0
        %3507 = vmatpush1.msra.mxu0 0.0
        %3508 = vmatprep.subr.mxu0 0.0
        %3509 = vmatpush1.msra.mxu0 0.0
        %3510 = vmatprep.subr.mxu0 0.0
        %3511 = vmatpush1.msra.mxu0 0.0
        %3512 = vmatprep.subr.mxu0 0.0
        %3513 = vmatpush1.msra.mxu0 0.0
        %3514 = vmatprep.subr.mxu0 0.0
        %3515 = vmatpush1.msra.mxu0 0.0
        %3516 = vmatprep.subr.mxu0 0.0
        %3517 = vmatpush1.msra.mxu0 0.0
        %3518 = vmatprep.subr.mxu0 0.0
        %3519 = vmatpush1.msra.mxu0 0.0
        %3520 = vmatprep.subr.mxu0 0.0
        %3521 = vmatpush1.msra.mxu0 0.0
        %3522 = vmatprep.subr.mxu0 0.0
        %3523 = vmatpush1.msra.mxu0 0.0
        %3524 = vmatprep.subr.mxu0 0.0
        %3525 = vmatpush1.msra.mxu0 0.0
        %3526 = vmatprep.subr.mxu0 0.0
        %3527 = vmatpush1.msra.mxu0 0.0
        %3528 = vmatprep.subr.mxu0 0.0
        %3529 = vmatpush1.msra.mxu0 0.0
        %3530 = vmatprep.mubr.f32.mxu0 0.0
        %v3531 = vand.u32 %v3080, 4294901760
        %v3532 = vsub.f32 %v3080, %v3531
        %v3533 = vand.u32 %v3532, 4294901760
        %3534 = vmatmul.mubr.f32.gmra.mrb[0].mxu0 %v3533
        %v3535 = vpop.f32.mrb[0].mxu0
        %v3536 = vadd.f32 %v3447, %v3535
        %v3537 = vpop.f32.mrb[0].mxu0
        %3538 = vdwg.mxu0
        %3539 = vmatprep.subr.mxu0 0.0
        %v3540 = vand.u32 %v3081, 4294901760
        %v3541 = vsub.f32 %v3081, %v3540
        %v3542 = vand.u32 %v3541, 4294901760
        %3543 = vmatpush1.msra.mxu0 %v3542
        %3544 = vmatprep.subr.mxu0 0.0
        %v3545 = vand.u32 %v3082, 4294901760
        %v3546 = vsub.f32 %v3082, %v3545
        %v3547 = vand.u32 %v3546, 4294901760
        %3548 = vmatpush1.msra.mxu0 %v3547
        %3549 = vmatprep.subr.mxu0 0.0
        %v3550 = vand.u32 %v3083, 4294901760
        %v3551 = vsub.f32 %v3083, %v3550
        %v3552 = vand.u32 %v3551, 4294901760
        %3553 = vmatpush1.msra.mxu0 %v3552
        %3554 = vmatprep.subr.mxu0 0.0
        %v3555 = vand.u32 %v3084, 4294901760
        %v3556 = vsub.f32 %v3084, %v3555
        %v3557 = vand.u32 %v3556, 4294901760
        %3558 = vmatpush1.msra.mxu0 %v3557
        %3559 = vmatprep.subr.mxu0 0.0
        %v3560 = vand.u32 %v3085, 4294901760
        %v3561 = vsub.f32 %v3085, %v3560
        %v3562 = vand.u32 %v3561, 4294901760
        %3563 = vmatpush1.msra.mxu0 %v3562
        %3564 = vmatprep.subr.mxu0 0.0
        %v3565 = vand.u32 %v3086, 4294901760
        %v3566 = vsub.f32 %v3086, %v3565
        %v3567 = vand.u32 %v3566, 4294901760
        %3568 = vmatpush1.msra.mxu0 %v3567
        %3569 = vmatprep.subr.mxu0 0.0
        %v3570 = vand.u32 %v3087, 4294901760
        %v3571 = vsub.f32 %v3087, %v3570
        %v3572 = vand.u32 %v3571, 4294901760
        %3573 = vmatpush1.msra.mxu0 %v3572
        %3574 = vmatprep.subr.mxu0 0.0
        %v3575 = vand.u32 %v3088, 4294901760
        %v3576 = vsub.f32 %v3088, %v3575
        %v3577 = vand.u32 %v3576, 4294901760
        %3578 = vmatpush1.msra.mxu0 %v3577
        %3579 = vmatprep.subr.mxu0 0.0
        %v3580 = vand.u32 %v3089, 4294901760
        %v3581 = vsub.f32 %v3089, %v3580
        %v3582 = vand.u32 %v3581, 4294901760
        %3583 = vmatpush1.msra.mxu0 %v3582
        %3584 = vmatprep.subr.mxu0 0.0
        %v3585 = vand.u32 %v3090, 4294901760
        %v3586 = vsub.f32 %v3090, %v3585
        %v3587 = vand.u32 %v3586, 4294901760
        %3588 = vmatpush1.msra.mxu0 %v3587
        %3589 = vmatprep.subr.mxu0 0.0
        %v3590 = vand.u32 %v3091, 4294901760
        %v3591 = vsub.f32 %v3091, %v3590
        %v3592 = vand.u32 %v3591, 4294901760
        %3593 = vmatpush1.msra.mxu0 %v3592
        %3594 = vmatprep.subr.mxu0 0.0
        %v3595 = vand.u32 %v3092, 4294901760
        %v3596 = vsub.f32 %v3092, %v3595
        %v3597 = vand.u32 %v3596, 4294901760
        %3598 = vmatpush1.msra.mxu0 %v3597
        %3599 = vmatprep.subr.mxu0 0.0
        %v3600 = vand.u32 %v3093, 4294901760
        %v3601 = vsub.f32 %v3093, %v3600
        %v3602 = vand.u32 %v3601, 4294901760
        %3603 = vmatpush1.msra.mxu0 %v3602
        %3604 = vmatprep.subr.mxu0 0.0
        %v3605 = vand.u32 %v3094, 4294901760
        %v3606 = vsub.f32 %v3094, %v3605
        %v3607 = vand.u32 %v3606, 4294901760
        %3608 = vmatpush1.msra.mxu0 %v3607
        %3609 = vmatprep.subr.mxu0 0.0
        %v3610 = vand.u32 %v3095, 4294901760
        %v3611 = vsub.f32 %v3095, %v3610
        %v3612 = vand.u32 %v3611, 4294901760
        %3613 = vmatpush1.msra.mxu0 %v3612
        %3614 = vmatprep.subr.mxu0 0.0
        %v3615 = vand.u32 %v3096, 4294901760
        %v3616 = vsub.f32 %v3096, %v3615
        %v3617 = vand.u32 %v3616, 4294901760
        %3618 = vmatpush1.msra.mxu0 %v3617
        %3619 = vmatprep.subr.mxu0 0.0
        %3620 = vmatpush1.msra.mxu0 0.0
        %3621 = vmatprep.subr.mxu0 0.0
        %3622 = vmatpush1.msra.mxu0 0.0
        %3623 = vmatprep.subr.mxu0 0.0
        %3624 = vmatpush1.msra.mxu0 0.0
        %3625 = vmatprep.subr.mxu0 0.0
        %3626 = vmatpush1.msra.mxu0 0.0
        %3627 = vmatprep.subr.mxu0 0.0
        %3628 = vmatpush1.msra.mxu0 0.0
        %3629 = vmatprep.subr.mxu0 0.0
        %3630 = vmatpush1.msra.mxu0 0.0
        %3631 = vmatprep.subr.mxu0 0.0
        %3632 = vmatpush1.msra.mxu0 0.0
        %3633 = vmatprep.subr.mxu0 0.0
        %3634 = vmatpush1.msra.mxu0 0.0
        %3635 = vmatprep.subr.mxu0 0.0
        %3636 = vmatpush1.msra.mxu0 0.0
        %3637 = vmatprep.subr.mxu0 0.0
        %3638 = vmatpush1.msra.mxu0 0.0
        %3639 = vmatprep.subr.mxu0 0.0
        %3640 = vmatpush1.msra.mxu0 0.0
        %3641 = vmatprep.subr.mxu0 0.0
        %3642 = vmatpush1.msra.mxu0 0.0
        %3643 = vmatprep.subr.mxu0 0.0
        %3644 = vmatpush1.msra.mxu0 0.0
        %3645 = vmatprep.subr.mxu0 0.0
        %3646 = vmatpush1.msra.mxu0 0.0
        %3647 = vmatprep.subr.mxu0 0.0
        %3648 = vmatpush1.msra.mxu0 0.0
        %3649 = vmatprep.subr.mxu0 0.0
        %3650 = vmatpush1.msra.mxu0 0.0
        %3651 = vmatprep.mubr.f32.mxu0 0.0
        %v3652 = vand.u32 %v3080, 4294901760
        %3653 = vmatmul.mubr.f32.gmra.mrb[0].mxu0 %v3652
        %v3654 = vpop.f32.mrb[0].mxu0
        %v3655 = vadd.f32 %v3536, %v3654
        %v3656 = vpop.f32.mrb[0].mxu0
        %3657 = vdwg.mxu0
        %3658 = vmatprep.subr.mxu0 0.0
        %v3659 = vand.u32 %v3081, 4294901760
        %3660 = vmatpush1.msra.mxu0 %v3659
        %3661 = vmatprep.subr.mxu0 0.0
        %v3662 = vand.u32 %v3082, 4294901760
        %3663 = vmatpush1.msra.mxu0 %v3662
        %3664 = vmatprep.subr.mxu0 0.0
        %v3665 = vand.u32 %v3083, 4294901760
        %3666 = vmatpush1.msra.mxu0 %v3665
        %3667 = vmatprep.subr.mxu0 0.0
        %v3668 = vand.u32 %v3084, 4294901760
        %3669 = vmatpush1.msra.mxu0 %v3668
        %3670 = vmatprep.subr.mxu0 0.0
        %v3671 = vand.u32 %v3085, 4294901760
        %3672 = vmatpush1.msra.mxu0 %v3671
        %3673 = vmatprep.subr.mxu0 0.0
        %v3674 = vand.u32 %v3086, 4294901760
        %3675 = vmatpush1.msra.mxu0 %v3674
        %3676 = vmatprep.subr.mxu0 0.0
        %v3677 = vand.u32 %v3087, 4294901760
        %3678 = vmatpush1.msra.mxu0 %v3677
        %3679 = vmatprep.subr.mxu0 0.0
        %v3680 = vand.u32 %v3088, 4294901760
        %3681 = vmatpush1.msra.mxu0 %v3680
        %3682 = vmatprep.subr.mxu0 0.0
        %v3683 = vand.u32 %v3089, 4294901760
        %3684 = vmatpush1.msra.mxu0 %v3683
        %3685 = vmatprep.subr.mxu0 0.0
        %v3686 = vand.u32 %v3090, 4294901760
        %3687 = vmatpush1.msra.mxu0 %v3686
        %3688 = vmatprep.subr.mxu0 0.0
        %v3689 = vand.u32 %v3091, 4294901760
        %3690 = vmatpush1.msra.mxu0 %v3689
        %3691 = vmatprep.subr.mxu0 0.0
        %v3692 = vand.u32 %v3092, 4294901760
        %3693 = vmatpush1.msra.mxu0 %v3692
        %3694 = vmatprep.subr.mxu0 0.0
        %v3695 = vand.u32 %v3093, 4294901760
        %3696 = vmatpush1.msra.mxu0 %v3695
        %3697 = vmatprep.subr.mxu0 0.0
        %v3698 = vand.u32 %v3094, 4294901760
        %3699 = vmatpush1.msra.mxu0 %v3698
        %3700 = vmatprep.subr.mxu0 0.0
        %v3701 = vand.u32 %v3095, 4294901760
        %3702 = vmatpush1.msra.mxu0 %v3701
        %3703 = vmatprep.subr.mxu0 0.0
        %v3704 = vand.u32 %v3096, 4294901760
        %3705 = vmatpush1.msra.mxu0 %v3704
        %3706 = vmatprep.subr.mxu0 0.0
        %3707 = vmatpush1.msra.mxu0 0.0
        %3708 = vmatprep.subr.mxu0 0.0
        %3709 = vmatpush1.msra.mxu0 0.0
        %3710 = vmatprep.subr.mxu0 0.0
        %3711 = vmatpush1.msra.mxu0 0.0
        %3712 = vmatprep.subr.mxu0 0.0
        %3713 = vmatpush1.msra.mxu0 0.0
        %3714 = vmatprep.subr.mxu0 0.0
        %3715 = vmatpush1.msra.mxu0 0.0
        %3716 = vmatprep.subr.mxu0 0.0
        %3717 = vmatpush1.msra.mxu0 0.0
        %3718 = vmatprep.subr.mxu0 0.0
        %3719 = vmatpush1.msra.mxu0 0.0
        %3720 = vmatprep.subr.mxu0 0.0
        %3721 = vmatpush1.msra.mxu0 0.0
        %3722 = vmatprep.subr.mxu0 0.0
        %3723 = vmatpush1.msra.mxu0 0.0
        %3724 = vmatprep.subr.mxu0 0.0
        %3725 = vmatpush1.msra.mxu0 0.0
        %3726 = vmatprep.subr.mxu0 0.0
        %3727 = vmatpush1.msra.mxu0 0.0
        %3728 = vmatprep.subr.mxu0 0.0
        %3729 = vmatpush1.msra.mxu0 0.0
        %3730 = vmatprep.subr.mxu0 0.0
        %3731 = vmatpush1.msra.mxu0 0.0
        %3732 = vmatprep.subr.mxu0 0.0
        %3733 = vmatpush1.msra.mxu0 0.0
        %3734 = vmatprep.subr.mxu0 0.0
        %3735 = vmatpush1.msra.mxu0 0.0
        %3736 = vmatprep.subr.mxu0 0.0
        %3737 = vmatpush1.msra.mxu0 0.0
        %3738 = vmatprep.mubr.f32.mxu0 0.0
        %v3739 = vand.u32 %v3080, 4294901760
        %3740 = vmatmul.mubr.f32.gmra.mrb[0].mxu0 %v3739
        %v3741 = vpop.f32.mrb[0].mxu0
        %v3742 = vadd.f32 %v3655, %v3741
        %v3743 = vpop.f32.mrb[0].mxu0
        %3744 = vdwg.mxu0
        %v3745 = vmul.f32 %v3742, 0.5
        %v3746 = vmul.f32 %v3742, 0.70710677
        %v3747 = verf.f32.pop %v3746
        %v3748 = vadd.f32 %v3747, 1.0
        %v3749 = vmul.f32 %v3745, %v3748
        %v3750 = vld [vmem:[%s500] sm:$0xff]
        %v3751 = vld [vmem:[%s500 + $0x8] sm:$0xff]
        %v3752 = vld [vmem:[%s500 + $0x10] sm:$0xff]
        %v3753 = vld [vmem:[%s500 + $0x18] sm:$0xff]
        %v3754 = vld [vmem:[%s500 + $0x20] sm:$0xff]
        %v3755 = vld [vmem:[%s500 + $0x28] sm:$0xff]
        %v3756 = vld [vmem:[%s500 + $0x30] sm:$0xff]
        %v3757 = vld [vmem:[%s500 + $0x38] sm:$0xff]
        %v3758 = vld [vmem:[%s500 + $0x40] sm:$0xff]
        %v3759 = vld [vmem:[%s500 + $0x48] sm:$0xff]
        %v3760 = vld [vmem:[%s500 + $0x50] sm:$0xff]
        %v3761 = vld [vmem:[%s500 + $0x58] sm:$0xff]
        %v3762 = vld [vmem:[%s500 + $0x60] sm:$0xff]
        %v3763 = vld [vmem:[%s500 + $0x68] sm:$0xff]
        %v3764 = vld [vmem:[%s500 + $0x70] sm:$0xff]
        %v3765 = vld [vmem:[%s500 + $0x78] sm:$0xff]
        %v3766 = vld [vmem:[%s583] sm:$0x1]
        %v3768 = vlaneseq
        %v3769 = vshrl.u32 %v3768, 7
        %v3770 = vsub.s32 0, %v3769
        %v3771 = vrot.slane %v3766, %v3770
        %3773 = vmatprep.subr.mxu0 0.0
        %v3774 = vand.u32 %v3750, 4294901760
        %3775 = vmatpush1.msra.mxu0 %v3774
        %3776 = vmatprep.subr.mxu0 0.0
        %v3777 = vand.u32 %v3751, 4294901760
        %3778 = vmatpush1.msra.mxu0 %v3777
        %3779 = vmatprep.subr.mxu0 0.0
        %v3780 = vand.u32 %v3752, 4294901760
        %3781 = vmatpush1.msra.mxu0 %v3780
        %3782 = vmatprep.subr.mxu0 0.0
        %v3783 = vand.u32 %v3753, 4294901760
        %3784 = vmatpush1.msra.mxu0 %v3783
        %3785 = vmatprep.subr.mxu0 0.0
        %v3786 = vand.u32 %v3754, 4294901760
        %3787 = vmatpush1.msra.mxu0 %v3786
        %3788 = vmatprep.subr.mxu0 0.0
        %v3789 = vand.u32 %v3755, 4294901760
        %3790 = vmatpush1.msra.mxu0 %v3789
        %3791 = vmatprep.subr.mxu0 0.0
        %v3792 = vand.u32 %v3756, 4294901760
        %3793 = vmatpush1.msra.mxu0 %v3792
        %3794 = vmatprep.subr.mxu0 0.0
        %v3795 = vand.u32 %v3757, 4294901760
        %3796 = vmatpush1.msra.mxu0 %v3795
        %3797 = vmatprep.subr.mxu0 0.0
        %v3798 = vand.u32 %v3758, 4294901760
        %3799 = vmatpush1.msra.mxu0 %v3798
        %3800 = vmatprep.subr.mxu0 0.0
        %v3801 = vand.u32 %v3759, 4294901760
        %3802 = vmatpush1.msra.mxu0 %v3801
        %3803 = vmatprep.subr.mxu0 0.0
        %v3804 = vand.u32 %v3760, 4294901760
        %3805 = vmatpush1.msra.mxu0 %v3804
        %3806 = vmatprep.subr.mxu0 0.0
        %v3807 = vand.u32 %v3761, 4294901760
        %3808 = vmatpush1.msra.mxu0 %v3807
        %3809 = vmatprep.subr.mxu0 0.0
        %v3810 = vand.u32 %v3762, 4294901760
        %3811 = vmatpush1.msra.mxu0 %v3810
        %3812 = vmatprep.subr.mxu0 0.0
        %v3813 = vand.u32 %v3763, 4294901760
        %3814 = vmatpush1.msra.mxu0 %v3813
        %3815 = vmatprep.subr.mxu0 0.0
        %v3816 = vand.u32 %v3764, 4294901760
        %3817 = vmatpush1.msra.mxu0 %v3816
        %3818 = vmatprep.subr.mxu0 0.0
        %v3819 = vand.u32 %v3765, 4294901760
        %3820 = vmatpush1.msra.mxu0 %v3819
        %3821 = vmatprep.subr.mxu0 0.0
        %3822 = vmatpush1.msra.mxu0 0.0
        %3823 = vmatprep.subr.mxu0 0.0
        %3824 = vmatpush1.msra.mxu0 0.0
        %3825 = vmatprep.subr.mxu0 0.0
        %3826 = vmatpush1.msra.mxu0 0.0
        %3827 = vmatprep.subr.mxu0 0.0
        %3828 = vmatpush1.msra.mxu0 0.0
        %3829 = vmatprep.subr.mxu0 0.0
        %3830 = vmatpush1.msra.mxu0 0.0
        %3831 = vmatprep.subr.mxu0 0.0
        %3832 = vmatpush1.msra.mxu0 0.0
        %3833 = vmatprep.subr.mxu0 0.0
        %3834 = vmatpush1.msra.mxu0 0.0
        %3835 = vmatprep.subr.mxu0 0.0
        %3836 = vmatpush1.msra.mxu0 0.0
        %3837 = vmatprep.subr.mxu0 0.0
        %3838 = vmatpush1.msra.mxu0 0.0
        %3839 = vmatprep.subr.mxu0 0.0
        %3840 = vmatpush1.msra.mxu0 0.0
        %3841 = vmatprep.subr.mxu0 0.0
        %3842 = vmatpush1.msra.mxu0 0.0
        %3843 = vmatprep.subr.mxu0 0.0
        %3844 = vmatpush1.msra.mxu0 0.0
        %3845 = vmatprep.subr.mxu0 0.0
        %3846 = vmatpush1.msra.mxu0 0.0
        %3847 = vmatprep.subr.mxu0 0.0
        %3848 = vmatpush1.msra.mxu0 0.0
        %3849 = vmatprep.subr.mxu0 0.0
        %3850 = vmatpush1.msra.mxu0 0.0
        %3851 = vmatprep.subr.mxu0 0.0
        %3852 = vmatpush1.msra.mxu0 0.0
        %3853 = vmatprep.mubr.f32.mxu0 0.0
        %v3854 = vand.u32 %v3749, 4294901760
        %v3855 = vsub.f32 %v3749, %v3854
        %v3856 = vand.u32 %v3855, 4294901760
        %v3857 = vsub.f32 %v3855, %v3856
        %v3858 = vand.u32 %v3857, 4294901760
        %3859 = vmatmul.mubr.f32.gmra.mrb[0].mxu0 %v3858
        %v3860 = vpop.f32.mrb[0].mxu0
        %v3861 = vadd.f32 %v3771, %v3860
        %v3862 = vpop.f32.mrb[0].mxu0
        %3863 = vdwg.mxu0
        %3864 = vmatprep.subr.mxu0 0.0
        %v3865 = vand.u32 %v3750, 4294901760
        %v3866 = vsub.f32 %v3750, %v3865
        %v3867 = vand.u32 %v3866, 4294901760
        %v3868 = vsub.f32 %v3866, %v3867
        %v3869 = vand.u32 %v3868, 4294901760
        %3870 = vmatpush1.msra.mxu0 %v3869
        %3871 = vmatprep.subr.mxu0 0.0
        %v3872 = vand.u32 %v3751, 4294901760
        %v3873 = vsub.f32 %v3751, %v3872
        %v3874 = vand.u32 %v3873, 4294901760
        %v3875 = vsub.f32 %v3873, %v3874
        %v3876 = vand.u32 %v3875, 4294901760
        %3877 = vmatpush1.msra.mxu0 %v3876
        %3878 = vmatprep.subr.mxu0 0.0
        %v3879 = vand.u32 %v3752, 4294901760
        %v3880 = vsub.f32 %v3752, %v3879
        %v3881 = vand.u32 %v3880, 4294901760
        %v3882 = vsub.f32 %v3880, %v3881
        %v3883 = vand.u32 %v3882, 4294901760
        %3884 = vmatpush1.msra.mxu0 %v3883
        %3885 = vmatprep.subr.mxu0 0.0
        %v3886 = vand.u32 %v3753, 4294901760
        %v3887 = vsub.f32 %v3753, %v3886
        %v3888 = vand.u32 %v3887, 4294901760
        %v3889 = vsub.f32 %v3887, %v3888
        %v3890 = vand.u32 %v3889, 4294901760
        %3891 = vmatpush1.msra.mxu0 %v3890
        %3892 = vmatprep.subr.mxu0 0.0
        %v3893 = vand.u32 %v3754, 4294901760
        %v3894 = vsub.f32 %v3754, %v3893
        %v3895 = vand.u32 %v3894, 4294901760
        %v3896 = vsub.f32 %v3894, %v3895
        %v3897 = vand.u32 %v3896, 4294901760
        %3898 = vmatpush1.msra.mxu0 %v3897
        %3899 = vmatprep.subr.mxu0 0.0
        %v3900 = vand.u32 %v3755, 4294901760
        %v3901 = vsub.f32 %v3755, %v3900
        %v3902 = vand.u32 %v3901, 4294901760
        %v3903 = vsub.f32 %v3901, %v3902
        %v3904 = vand.u32 %v3903, 4294901760
        %3905 = vmatpush1.msra.mxu0 %v3904
        %3906 = vmatprep.subr.mxu0 0.0
        %v3907 = vand.u32 %v3756, 4294901760
        %v3908 = vsub.f32 %v3756, %v3907
        %v3909 = vand.u32 %v3908, 4294901760
        %v3910 = vsub.f32 %v3908, %v3909
        %v3911 = vand.u32 %v3910, 4294901760
        %3912 = vmatpush1.msra.mxu0 %v3911
        %3913 = vmatprep.subr.mxu0 0.0
        %v3914 = vand.u32 %v3757, 4294901760
        %v3915 = vsub.f32 %v3757, %v3914
        %v3916 = vand.u32 %v3915, 4294901760
        %v3917 = vsub.f32 %v3915, %v3916
        %v3918 = vand.u32 %v3917, 4294901760
        %3919 = vmatpush1.msra.mxu0 %v3918
        %3920 = vmatprep.subr.mxu0 0.0
        %v3921 = vand.u32 %v3758, 4294901760
        %v3922 = vsub.f32 %v3758, %v3921
        %v3923 = vand.u32 %v3922, 4294901760
        %v3924 = vsub.f32 %v3922, %v3923
        %v3925 = vand.u32 %v3924, 4294901760
        %3926 = vmatpush1.msra.mxu0 %v3925
        %3927 = vmatprep.subr.mxu0 0.0
        %v3928 = vand.u32 %v3759, 4294901760
        %v3929 = vsub.f32 %v3759, %v3928
        %v3930 = vand.u32 %v3929, 4294901760
        %v3931 = vsub.f32 %v3929, %v3930
        %v3932 = vand.u32 %v3931, 4294901760
        %3933 = vmatpush1.msra.mxu0 %v3932
        %3934 = vmatprep.subr.mxu0 0.0
        %v3935 = vand.u32 %v3760, 4294901760
        %v3936 = vsub.f32 %v3760, %v3935
        %v3937 = vand.u32 %v3936, 4294901760
        %v3938 = vsub.f32 %v3936, %v3937
        %v3939 = vand.u32 %v3938, 4294901760
        %3940 = vmatpush1.msra.mxu0 %v3939
        %3941 = vmatprep.subr.mxu0 0.0
        %v3942 = vand.u32 %v3761, 4294901760
        %v3943 = vsub.f32 %v3761, %v3942
        %v3944 = vand.u32 %v3943, 4294901760
        %v3945 = vsub.f32 %v3943, %v3944
        %v3946 = vand.u32 %v3945, 4294901760
        %3947 = vmatpush1.msra.mxu0 %v3946
        %3948 = vmatprep.subr.mxu0 0.0
        %v3949 = vand.u32 %v3762, 4294901760
        %v3950 = vsub.f32 %v3762, %v3949
        %v3951 = vand.u32 %v3950, 4294901760
        %v3952 = vsub.f32 %v3950, %v3951
        %v3953 = vand.u32 %v3952, 4294901760
        %3954 = vmatpush1.msra.mxu0 %v3953
        %3955 = vmatprep.subr.mxu0 0.0
        %v3956 = vand.u32 %v3763, 4294901760
        %v3957 = vsub.f32 %v3763, %v3956
        %v3958 = vand.u32 %v3957, 4294901760
        %v3959 = vsub.f32 %v3957, %v3958
        %v3960 = vand.u32 %v3959, 4294901760
        %3961 = vmatpush1.msra.mxu0 %v3960
        %3962 = vmatprep.subr.mxu0 0.0
        %v3963 = vand.u32 %v3764, 4294901760
        %v3964 = vsub.f32 %v3764, %v3963
        %v3965 = vand.u32 %v3964, 4294901760
        %v3966 = vsub.f32 %v3964, %v3965
        %v3967 = vand.u32 %v3966, 4294901760
        %3968 = vmatpush1.msra.mxu0 %v3967
        %3969 = vmatprep.subr.mxu0 0.0
        %v3970 = vand.u32 %v3765, 4294901760
        %v3971 = vsub.f32 %v3765, %v3970
        %v3972 = vand.u32 %v3971, 4294901760
        %v3973 = vsub.f32 %v3971, %v3972
        %v3974 = vand.u32 %v3973, 4294901760
        %3975 = vmatpush1.msra.mxu0 %v3974
        %3976 = vmatprep.subr.mxu0 0.0
        %3977 = vmatpush1.msra.mxu0 0.0
        %3978 = vmatprep.subr.mxu0 0.0
        %3979 = vmatpush1.msra.mxu0 0.0
        %3980 = vmatprep.subr.mxu0 0.0
        %3981 = vmatpush1.msra.mxu0 0.0
        %3982 = vmatprep.subr.mxu0 0.0
        %3983 = vmatpush1.msra.mxu0 0.0
        %3984 = vmatprep.subr.mxu0 0.0
        %3985 = vmatpush1.msra.mxu0 0.0
        %3986 = vmatprep.subr.mxu0 0.0
        %3987 = vmatpush1.msra.mxu0 0.0
        %3988 = vmatprep.subr.mxu0 0.0
        %3989 = vmatpush1.msra.mxu0 0.0
        %3990 = vmatprep.subr.mxu0 0.0
        %3991 = vmatpush1.msra.mxu0 0.0
        %3992 = vmatprep.subr.mxu0 0.0
        %3993 = vmatpush1.msra.mxu0 0.0
        %3994 = vmatprep.subr.mxu0 0.0
        %3995 = vmatpush1.msra.mxu0 0.0
        %3996 = vmatprep.subr.mxu0 0.0
        %3997 = vmatpush1.msra.mxu0 0.0
        %3998 = vmatprep.subr.mxu0 0.0
        %3999 = vmatpush1.msra.mxu0 0.0
        %4000 = vmatprep.subr.mxu0 0.0
        %4001 = vmatpush1.msra.mxu0 0.0
        %4002 = vmatprep.subr.mxu0 0.0
        %4003 = vmatpush1.msra.mxu0 0.0
        %4004 = vmatprep.subr.mxu0 0.0
        %4005 = vmatpush1.msra.mxu0 0.0
        %4006 = vmatprep.subr.mxu0 0.0
        %4007 = vmatpush1.msra.mxu0 0.0
        %4008 = vmatprep.mubr.f32.mxu0 0.0
        %v4009 = vand.u32 %v3749, 4294901760
        %4010 = vmatmul.mubr.f32.gmra.mrb[0].mxu0 %v4009
        %v4011 = vpop.f32.mrb[0].mxu0
        %v4012 = vadd.f32 %v3861, %v4011
        %v4013 = vpop.f32.mrb[0].mxu0
        %4014 = vdwg.mxu0
        %4015 = vmatprep.subr.mxu0 0.0
        %v4016 = vand.u32 %v3750, 4294901760
        %v4017 = vsub.f32 %v3750, %v4016
        %4018 = vmatpush1.msra.mxu0 %v4017
        %4019 = vmatprep.subr.mxu0 0.0
        %v4020 = vand.u32 %v3751, 4294901760
        %v4021 = vsub.f32 %v3751, %v4020
        %4022 = vmatpush1.msra.mxu0 %v4021
        %4023 = vmatprep.subr.mxu0 0.0
        %v4024 = vand.u32 %v3752, 4294901760
        %v4025 = vsub.f32 %v3752, %v4024
        %4026 = vmatpush1.msra.mxu0 %v4025
        %4027 = vmatprep.subr.mxu0 0.0
        %v4028 = vand.u32 %v3753, 4294901760
        %v4029 = vsub.f32 %v3753, %v4028
        %4030 = vmatpush1.msra.mxu0 %v4029
        %4031 = vmatprep.subr.mxu0 0.0
        %v4032 = vand.u32 %v3754, 4294901760
        %v4033 = vsub.f32 %v3754, %v4032
        %4034 = vmatpush1.msra.mxu0 %v4033
        %4035 = vmatprep.subr.mxu0 0.0
        %v4036 = vand.u32 %v3755, 4294901760
        %v4037 = vsub.f32 %v3755, %v4036
        %4038 = vmatpush1.msra.mxu0 %v4037
        %4039 = vmatprep.subr.mxu0 0.0
        %v4040 = vand.u32 %v3756, 4294901760
        %v4041 = vsub.f32 %v3756, %v4040
        %4042 = vmatpush1.msra.mxu0 %v4041
        %4043 = vmatprep.subr.mxu0 0.0
        %v4044 = vand.u32 %v3757, 4294901760
        %v4045 = vsub.f32 %v3757, %v4044
        %4046 = vmatpush1.msra.mxu0 %v4045
        %4047 = vmatprep.subr.mxu0 0.0
        %v4048 = vand.u32 %v3758, 4294901760
        %v4049 = vsub.f32 %v3758, %v4048
        %4050 = vmatpush1.msra.mxu0 %v4049
        %4051 = vmatprep.subr.mxu0 0.0
        %v4052 = vand.u32 %v3759, 4294901760
        %v4053 = vsub.f32 %v3759, %v4052
        %4054 = vmatpush1.msra.mxu0 %v4053
        %4055 = vmatprep.subr.mxu0 0.0
        %v4056 = vand.u32 %v3760, 4294901760
        %v4057 = vsub.f32 %v3760, %v4056
        %4058 = vmatpush1.msra.mxu0 %v4057
        %4059 = vmatprep.subr.mxu0 0.0
        %v4060 = vand.u32 %v3761, 4294901760
        %v4061 = vsub.f32 %v3761, %v4060
        %4062 = vmatpush1.msra.mxu0 %v4061
        %4063 = vmatprep.subr.mxu0 0.0
        %v4064 = vand.u32 %v3762, 4294901760
        %v4065 = vsub.f32 %v3762, %v4064
        %4066 = vmatpush1.msra.mxu0 %v4065
        %4067 = vmatprep.subr.mxu0 0.0
        %v4068 = vand.u32 %v3763, 4294901760
        %v4069 = vsub.f32 %v3763, %v4068
        %4070 = vmatpush1.msra.mxu0 %v4069
        %4071 = vmatprep.subr.mxu0 0.0
        %v4072 = vand.u32 %v3764, 4294901760
        %v4073 = vsub.f32 %v3764, %v4072
        %4074 = vmatpush1.msra.mxu0 %v4073
        %4075 = vmatprep.subr.mxu0 0.0
        %v4076 = vand.u32 %v3765, 4294901760
        %v4077 = vsub.f32 %v3765, %v4076
        %4078 = vmatpush1.msra.mxu0 %v4077
        %4079 = vmatprep.subr.mxu0 0.0
        %4080 = vmatpush1.msra.mxu0 0.0
        %4081 = vmatprep.subr.mxu0 0.0
        %4082 = vmatpush1.msra.mxu0 0.0
        %4083 = vmatprep.subr.mxu0 0.0
        %4084 = vmatpush1.msra.mxu0 0.0
        %4085 = vmatprep.subr.mxu0 0.0
        %4086 = vmatpush1.msra.mxu0 0.0
        %4087 = vmatprep.subr.mxu0 0.0
        %4088 = vmatpush1.msra.mxu0 0.0
        %4089 = vmatprep.subr.mxu0 0.0
        %4090 = vmatpush1.msra.mxu0 0.0
        %4091 = vmatprep.subr.mxu0 0.0
        %4092 = vmatpush1.msra.mxu0 0.0
        %4093 = vmatprep.subr.mxu0 0.0
        %4094 = vmatpush1.msra.mxu0 0.0
        %4095 = vmatprep.subr.mxu0 0.0
        %4096 = vmatpush1.msra.mxu0 0.0
        %4097 = vmatprep.subr.mxu0 0.0
        %4098 = vmatpush1.msra.mxu0 0.0
        %4099 = vmatprep.subr.mxu0 0.0
        %4100 = vmatpush1.msra.mxu0 0.0
        %4101 = vmatprep.subr.mxu0 0.0
        %4102 = vmatpush1.msra.mxu0 0.0
        %4103 = vmatprep.subr.mxu0 0.0
        %4104 = vmatpush1.msra.mxu0 0.0
        %4105 = vmatprep.subr.mxu0 0.0
        %4106 = vmatpush1.msra.mxu0 0.0
        %4107 = vmatprep.subr.mxu0 0.0
        %4108 = vmatpush1.msra.mxu0 0.0
        %4109 = vmatprep.subr.mxu0 0.0
        %4110 = vmatpush1.msra.mxu0 0.0
        %4111 = vmatprep.mubr.f32.mxu0 0.0
        %v4112 = vand.u32 %v3749, 4294901760
        %v4113 = vsub.f32 %v3749, %v4112
        %4114 = vmatmul.mubr.f32.gmra.mrb[0].mxu0 %v4113
        %v4115 = vpop.f32.mrb[0].mxu0
        %v4116 = vadd.f32 %v4012, %v4115
        %v4117 = vpop.f32.mrb[0].mxu0
        %4118 = vdwg.mxu0
        %4119 = vmatprep.subr.mxu0 0.0
        %v4120 = vand.u32 %v3750, 4294901760
        %4121 = vmatpush1.msra.mxu0 %v4120
        %4122 = vmatprep.subr.mxu0 0.0
        %v4123 = vand.u32 %v3751, 4294901760
        %4124 = vmatpush1.msra.mxu0 %v4123
        %4125 = vmatprep.subr.mxu0 0.0
        %v4126 = vand.u32 %v3752, 4294901760
        %4127 = vmatpush1.msra.mxu0 %v4126
        %4128 = vmatprep.subr.mxu0 0.0
        %v4129 = vand.u32 %v3753, 4294901760
        %4130 = vmatpush1.msra.mxu0 %v4129
        %4131 = vmatprep.subr.mxu0 0.0
        %v4132 = vand.u32 %v3754, 4294901760
        %4133 = vmatpush1.msra.mxu0 %v4132
        %4134 = vmatprep.subr.mxu0 0.0
        %v4135 = vand.u32 %v3755, 4294901760
        %4136 = vmatpush1.msra.mxu0 %v4135
        %4137 = vmatprep.subr.mxu0 0.0
        %v4138 = vand.u32 %v3756, 4294901760
        %4139 = vmatpush1.msra.mxu0 %v4138
        %4140 = vmatprep.subr.mxu0 0.0
        %v4141 = vand.u32 %v3757, 4294901760
        %4142 = vmatpush1.msra.mxu0 %v4141
        %4143 = vmatprep.subr.mxu0 0.0
        %v4144 = vand.u32 %v3758, 4294901760
        %4145 = vmatpush1.msra.mxu0 %v4144
        %4146 = vmatprep.subr.mxu0 0.0
        %v4147 = vand.u32 %v3759, 4294901760
        %4148 = vmatpush1.msra.mxu0 %v4147
        %4149 = vmatprep.subr.mxu0 0.0
        %v4150 = vand.u32 %v3760, 4294901760
        %4151 = vmatpush1.msra.mxu0 %v4150
        %4152 = vmatprep.subr.mxu0 0.0
        %v4153 = vand.u32 %v3761, 4294901760
        %4154 = vmatpush1.msra.mxu0 %v4153
        %4155 = vmatprep.subr.mxu0 0.0
        %v4156 = vand.u32 %v3762, 4294901760
        %4157 = vmatpush1.msra.mxu0 %v4156
        %4158 = vmatprep.subr.mxu0 0.0
        %v4159 = vand.u32 %v3763, 4294901760
        %4160 = vmatpush1.msra.mxu0 %v4159
        %4161 = vmatprep.subr.mxu0 0.0
        %v4162 = vand.u32 %v3764, 4294901760
        %4163 = vmatpush1.msra.mxu0 %v4162
        %4164 = vmatprep.subr.mxu0 0.0
        %v4165 = vand.u32 %v3765, 4294901760
        %4166 = vmatpush1.msra.mxu0 %v4165
        %4167 = vmatprep.subr.mxu0 0.0
        %4168 = vmatpush1.msra.mxu0 0.0
        %4169 = vmatprep.subr.mxu0 0.0
        %4170 = vmatpush1.msra.mxu0 0.0
        %4171 = vmatprep.subr.mxu0 0.0
        %4172 = vmatpush1.msra.mxu0 0.0
        %4173 = vmatprep.subr.mxu0 0.0
        %4174 = vmatpush1.msra.mxu0 0.0
        %4175 = vmatprep.subr.mxu0 0.0
        %4176 = vmatpush1.msra.mxu0 0.0
        %4177 = vmatprep.subr.mxu0 0.0
        %4178 = vmatpush1.msra.mxu0 0.0
        %4179 = vmatprep.subr.mxu0 0.0
        %4180 = vmatpush1.msra.mxu0 0.0
        %4181 = vmatprep.subr.mxu0 0.0
        %4182 = vmatpush1.msra.mxu0 0.0
        %4183 = vmatprep.subr.mxu0 0.0
        %4184 = vmatpush1.msra.mxu0 0.0
        %4185 = vmatprep.subr.mxu0 0.0
        %4186 = vmatpush1.msra.mxu0 0.0
        %4187 = vmatprep.subr.mxu0 0.0
        %4188 = vmatpush1.msra.mxu0 0.0
        %4189 = vmatprep.subr.mxu0 0.0
        %4190 = vmatpush1.msra.mxu0 0.0
        %4191 = vmatprep.subr.mxu0 0.0
        %4192 = vmatpush1.msra.mxu0 0.0
        %4193 = vmatprep.subr.mxu0 0.0
        %4194 = vmatpush1.msra.mxu0 0.0
        %4195 = vmatprep.subr.mxu0 0.0
        %4196 = vmatpush1.msra.mxu0 0.0
        %4197 = vmatprep.subr.mxu0 0.0
        %4198 = vmatpush1.msra.mxu0 0.0
        %4199 = vmatprep.mubr.f32.mxu0 0.0
        %v4200 = vand.u32 %v3749, 4294901760
        %v4201 = vsub.f32 %v3749, %v4200
        %v4202 = vand.u32 %v4201, 4294901760
        %4203 = vmatmul.mubr.f32.gmra.mrb[0].mxu0 %v4202
        %v4204 = vpop.f32.mrb[0].mxu0
        %v4205 = vadd.f32 %v4116, %v4204
        %v4206 = vpop.f32.mrb[0].mxu0
        %4207 = vdwg.mxu0
        %4208 = vmatprep.subr.mxu0 0.0
        %v4209 = vand.u32 %v3750, 4294901760
        %v4210 = vsub.f32 %v3750, %v4209
        %v4211 = vand.u32 %v4210, 4294901760
        %4212 = vmatpush1.msra.mxu0 %v4211
        %4213 = vmatprep.subr.mxu0 0.0
        %v4214 = vand.u32 %v3751, 4294901760
        %v4215 = vsub.f32 %v3751, %v4214
        %v4216 = vand.u32 %v4215, 4294901760
        %4217 = vmatpush1.msra.mxu0 %v4216
        %4218 = vmatprep.subr.mxu0 0.0
        %v4219 = vand.u32 %v3752, 4294901760
        %v4220 = vsub.f32 %v3752, %v4219
        %v4221 = vand.u32 %v4220, 4294901760
        %4222 = vmatpush1.msra.mxu0 %v4221
        %4223 = vmatprep.subr.mxu0 0.0
        %v4224 = vand.u32 %v3753, 4294901760
        %v4225 = vsub.f32 %v3753, %v4224
        %v4226 = vand.u32 %v4225, 4294901760
        %4227 = vmatpush1.msra.mxu0 %v4226
        %4228 = vmatprep.subr.mxu0 0.0
        %v4229 = vand.u32 %v3754, 4294901760
        %v4230 = vsub.f32 %v3754, %v4229
        %v4231 = vand.u32 %v4230, 4294901760
        %4232 = vmatpush1.msra.mxu0 %v4231
        %4233 = vmatprep.subr.mxu0 0.0
        %v4234 = vand.u32 %v3755, 4294901760
        %v4235 = vsub.f32 %v3755, %v4234
        %v4236 = vand.u32 %v4235, 4294901760
        %4237 = vmatpush1.msra.mxu0 %v4236
        %4238 = vmatprep.subr.mxu0 0.0
        %v4239 = vand.u32 %v3756, 4294901760
        %v4240 = vsub.f32 %v3756, %v4239
        %v4241 = vand.u32 %v4240, 4294901760
        %4242 = vmatpush1.msra.mxu0 %v4241
        %4243 = vmatprep.subr.mxu0 0.0
        %v4244 = vand.u32 %v3757, 4294901760
        %v4245 = vsub.f32 %v3757, %v4244
        %v4246 = vand.u32 %v4245, 4294901760
        %4247 = vmatpush1.msra.mxu0 %v4246
        %4248 = vmatprep.subr.mxu0 0.0
        %v4249 = vand.u32 %v3758, 4294901760
        %v4250 = vsub.f32 %v3758, %v4249
        %v4251 = vand.u32 %v4250, 4294901760
        %4252 = vmatpush1.msra.mxu0 %v4251
        %4253 = vmatprep.subr.mxu0 0.0
        %v4254 = vand.u32 %v3759, 4294901760
        %v4255 = vsub.f32 %v3759, %v4254
        %v4256 = vand.u32 %v4255, 4294901760
        %4257 = vmatpush1.msra.mxu0 %v4256
        %4258 = vmatprep.subr.mxu0 0.0
        %v4259 = vand.u32 %v3760, 4294901760
        %v4260 = vsub.f32 %v3760, %v4259
        %v4261 = vand.u32 %v4260, 4294901760
        %4262 = vmatpush1.msra.mxu0 %v4261
        %4263 = vmatprep.subr.mxu0 0.0
        %v4264 = vand.u32 %v3761, 4294901760
        %v4265 = vsub.f32 %v3761, %v4264
        %v4266 = vand.u32 %v4265, 4294901760
        %4267 = vmatpush1.msra.mxu0 %v4266
        %4268 = vmatprep.subr.mxu0 0.0
        %v4269 = vand.u32 %v3762, 4294901760
        %v4270 = vsub.f32 %v3762, %v4269
        %v4271 = vand.u32 %v4270, 4294901760
        %4272 = vmatpush1.msra.mxu0 %v4271
        %4273 = vmatprep.subr.mxu0 0.0
        %v4274 = vand.u32 %v3763, 4294901760
        %v4275 = vsub.f32 %v3763, %v4274
        %v4276 = vand.u32 %v4275, 4294901760
        %4277 = vmatpush1.msra.mxu0 %v4276
        %4278 = vmatprep.subr.mxu0 0.0
        %v4279 = vand.u32 %v3764, 4294901760
        %v4280 = vsub.f32 %v3764, %v4279
        %v4281 = vand.u32 %v4280, 4294901760
        %4282 = vmatpush1.msra.mxu0 %v4281
        %4283 = vmatprep.subr.mxu0 0.0
        %v4284 = vand.u32 %v3765, 4294901760
        %v4285 = vsub.f32 %v3765, %v4284
        %v4286 = vand.u32 %v4285, 4294901760
        %4287 = vmatpush1.msra.mxu0 %v4286
        %4288 = vmatprep.subr.mxu0 0.0
        %4289 = vmatpush1.msra.mxu0 0.0
        %4290 = vmatprep.subr.mxu0 0.0
        %4291 = vmatpush1.msra.mxu0 0.0
        %4292 = vmatprep.subr.mxu0 0.0
        %4293 = vmatpush1.msra.mxu0 0.0
        %4294 = vmatprep.subr.mxu0 0.0
        %4295 = vmatpush1.msra.mxu0 0.0
        %4296 = vmatprep.subr.mxu0 0.0
        %4297 = vmatpush1.msra.mxu0 0.0
        %4298 = vmatprep.subr.mxu0 0.0
        %4299 = vmatpush1.msra.mxu0 0.0
        %4300 = vmatprep.subr.mxu0 0.0
        %4301 = vmatpush1.msra.mxu0 0.0
        %4302 = vmatprep.subr.mxu0 0.0
        %4303 = vmatpush1.msra.mxu0 0.0
        %4304 = vmatprep.subr.mxu0 0.0
        %4305 = vmatpush1.msra.mxu0 0.0
        %4306 = vmatprep.subr.mxu0 0.0
        %4307 = vmatpush1.msra.mxu0 0.0
        %4308 = vmatprep.subr.mxu0 0.0
        %4309 = vmatpush1.msra.mxu0 0.0
        %4310 = vmatprep.subr.mxu0 0.0
        %4311 = vmatpush1.msra.mxu0 0.0
        %4312 = vmatprep.subr.mxu0 0.0
        %4313 = vmatpush1.msra.mxu0 0.0
        %4314 = vmatprep.subr.mxu0 0.0
        %4315 = vmatpush1.msra.mxu0 0.0
        %4316 = vmatprep.subr.mxu0 0.0
        %4317 = vmatpush1.msra.mxu0 0.0
        %4318 = vmatprep.subr.mxu0 0.0
        %4319 = vmatpush1.msra.mxu0 0.0
        %4320 = vmatprep.mubr.f32.mxu0 0.0
        %v4321 = vand.u32 %v3749, 4294901760
        %4322 = vmatmul.mubr.f32.gmra.mrb[0].mxu0 %v4321
        %v4323 = vpop.f32.mrb[0].mxu0
        %v4324 = vadd.f32 %v4205, %v4323
        %v4325 = vpop.f32.mrb[0].mxu0
        %4326 = vdwg.mxu0
        %4327 = vmatprep.subr.mxu0 0.0
        %v4328 = vand.u32 %v3750, 4294901760
        %4329 = vmatpush1.msra.mxu0 %v4328
        %4330 = vmatprep.subr.mxu0 0.0
        %v4331 = vand.u32 %v3751, 4294901760
        %4332 = vmatpush1.msra.mxu0 %v4331
        %4333 = vmatprep.subr.mxu0 0.0
        %v4334 = vand.u32 %v3752, 4294901760
        %4335 = vmatpush1.msra.mxu0 %v4334
        %4336 = vmatprep.subr.mxu0 0.0
        %v4337 = vand.u32 %v3753, 4294901760
        %4338 = vmatpush1.msra.mxu0 %v4337
        %4339 = vmatprep.subr.mxu0 0.0
        %v4340 = vand.u32 %v3754, 4294901760
        %4341 = vmatpush1.msra.mxu0 %v4340
        %4342 = vmatprep.subr.mxu0 0.0
        %v4343 = vand.u32 %v3755, 4294901760
        %4344 = vmatpush1.msra.mxu0 %v4343
        %4345 = vmatprep.subr.mxu0 0.0
        %v4346 = vand.u32 %v3756, 4294901760
        %4347 = vmatpush1.msra.mxu0 %v4346
        %4348 = vmatprep.subr.mxu0 0.0
        %v4349 = vand.u32 %v3757, 4294901760
        %4350 = vmatpush1.msra.mxu0 %v4349
        %4351 = vmatprep.subr.mxu0 0.0
        %v4352 = vand.u32 %v3758, 4294901760
        %4353 = vmatpush1.msra.mxu0 %v4352
        %4354 = vmatprep.subr.mxu0 0.0
        %v4355 = vand.u32 %v3759, 4294901760
        %4356 = vmatpush1.msra.mxu0 %v4355
        %4357 = vmatprep.subr.mxu0 0.0
        %v4358 = vand.u32 %v3760, 4294901760
        %4359 = vmatpush1.msra.mxu0 %v4358
        %4360 = vmatprep.subr.mxu0 0.0
        %v4361 = vand.u32 %v3761, 4294901760
        %4362 = vmatpush1.msra.mxu0 %v4361
        %4363 = vmatprep.subr.mxu0 0.0
        %v4364 = vand.u32 %v3762, 4294901760
        %4365 = vmatpush1.msra.mxu0 %v4364
        %4366 = vmatprep.subr.mxu0 0.0
        %v4367 = vand.u32 %v3763, 4294901760
        %4368 = vmatpush1.msra.mxu0 %v4367
        %4369 = vmatprep.subr.mxu0 0.0
        %v4370 = vand.u32 %v3764, 4294901760
        %4371 = vmatpush1.msra.mxu0 %v4370
        %4372 = vmatprep.subr.mxu0 0.0
        %v4373 = vand.u32 %v3765, 4294901760
        %4374 = vmatpush1.msra.mxu0 %v4373
        %4375 = vmatprep.subr.mxu0 0.0
        %4376 = vmatpush1.msra.mxu0 0.0
        %4377 = vmatprep.subr.mxu0 0.0
        %4378 = vmatpush1.msra.mxu0 0.0
        %4379 = vmatprep.subr.mxu0 0.0
        %4380 = vmatpush1.msra.mxu0 0.0
        %4381 = vmatprep.subr.mxu0 0.0
        %4382 = vmatpush1.msra.mxu0 0.0
        %4383 = vmatprep.subr.mxu0 0.0
        %4384 = vmatpush1.msra.mxu0 0.0
        %4385 = vmatprep.subr.mxu0 0.0
        %4386 = vmatpush1.msra.mxu0 0.0
        %4387 = vmatprep.subr.mxu0 0.0
        %4388 = vmatpush1.msra.mxu0 0.0
        %4389 = vmatprep.subr.mxu0 0.0
        %4390 = vmatpush1.msra.mxu0 0.0
        %4391 = vmatprep.subr.mxu0 0.0
        %4392 = vmatpush1.msra.mxu0 0.0
        %4393 = vmatprep.subr.mxu0 0.0
        %4394 = vmatpush1.msra.mxu0 0.0
        %4395 = vmatprep.subr.mxu0 0.0
        %4396 = vmatpush1.msra.mxu0 0.0
        %4397 = vmatprep.subr.mxu0 0.0
        %4398 = vmatpush1.msra.mxu0 0.0
        %4399 = vmatprep.subr.mxu0 0.0
        %4400 = vmatpush1.msra.mxu0 0.0
        %4401 = vmatprep.subr.mxu0 0.0
        %4402 = vmatpush1.msra.mxu0 0.0
        %4403 = vmatprep.subr.mxu0 0.0
        %4404 = vmatpush1.msra.mxu0 0.0
        %4405 = vmatprep.subr.mxu0 0.0
        %4406 = vmatpush1.msra.mxu0 0.0
        %4407 = vmatprep.mubr.f32.mxu0 0.0
        %v4408 = vand.u32 %v3749, 4294901760
        %4409 = vmatmul.mubr.f32.gmra.mrb[0].mxu0 %v4408
        %v4410 = vpop.f32.mrb[0].mxu0
        %v4411 = vadd.f32 %v4324, %v4410
        %v4412 = vpop.f32.mrb[0].mxu0
        %4413 = vdwg.mxu0
        %v4414 = vmul.f32 %v4411, 0.5
        %v4415 = vmul.f32 %v4411, 0.70710677
        %v4416 = verf.f32.pop %v4415
        %v4417 = vadd.f32 %v4416, 1.0
        %v4418 = vmul.f32 %v4414, %v4417
        %v4419 = vadd.f32 %v4418, %v592
        %4420 = vst [vmem:[#allocation2] sm:$0xff] %v4419
        %p4421 = scmp.eq.s32.totalorder %s33, 1
        // Predicated region
        $region85: #{tpu_custom_call.1} parent=59 // pred_check
          %p4422 = pneg %p4421
        $region86: #{tpu_custom_call.1} parent=59 // pred_check_branch
          %4424 = sbr.rel (%p4422) target = $region88
        $region87: #{tpu_custom_call.1} parent=59 // pred_region
          %4425 = vst [vmem:[%s567] sm:$0xff] %v4419
        $region88: #{tpu_custom_call.1} parent=59 // pred_fallthru
          _
        %s4426 = sand.u32 %s303, 1
        %s4427 = scalar_lea.sflag [#allocation5], %s4426
        %s4428 = sand.u32 %s303, 1
        %s4429 = smul.addr %s4428, 8
        %s4430 = scalar_lea.vmem [#allocation11], %s4429
        // Predicated region
        $region89: #{tpu_custom_call.1} parent=59 // pred_check
          %p4431 = pneg %p313
        $region90: #{tpu_custom_call.1} parent=59 // pred_check_branch
          %4433 = sbr.rel (%p4431) target = $region92
        $region91: #{tpu_custom_call.1} parent=59 // pred_region
          %s4435 = ssub.s32 128, 128
          %4436 = vsyncadd %s4427, %s4435
          %s4437 = smul.addr %s32, 128
          %s4438 = scalar_lea.hbm %s10, %s4437
          %s4440 = sshll.u32 %s4430, 4
          %s4441 = int_to_ptr.vmem [resolvable:$true] %s4440
          %4443 = dma.vmem_to_hbm [thread:$0]  %s4441, 128, %s4438, %s4427
        $region92: #{tpu_custom_call.1} parent=59 // pred_fallthru
          _
      $region60: #{tpu_custom_call.1} parent=5 // pred_fallthru
        _
      %p4444 = scmp.le.s32.totalorder 2, %s23
      // Predicated region
      $region93: #{tpu_custom_call.1} parent=5 // pred_check
        %p4445 = pneg %p4444
      $region94: #{tpu_custom_call.1} parent=5 // pred_check_branch
        %4447 = sbr.rel (%p4445) target = $region96
      $region95: #{tpu_custom_call.1} parent=5 // pred_region
        %s4448 = ssub.s32 %s23, 2
        // Predicated region
        $region97: #{tpu_custom_call.1} parent=95 // pred_check
          %p4449 = pneg %p319
        $region98: #{tpu_custom_call.1} parent=95 // pred_check_branch
          %4451 = sbr.rel (%p4449) target = $region100
        $region99: #{tpu_custom_call.1} parent=95 // pred_region
          %s4452 = sand.u32 %s304, 1
          %s4453 = scalar_lea.sflag [#allocation5], %s4452
          %s4454 = sand.u32 %s304, 1
          %s4455 = smul.addr %s4454, 8
          %s4456 = scalar_lea.vmem [#allocation11], %s4455
          %4457 = dma.done %s4453, 128
        $region100: #{tpu_custom_call.1} parent=95 // pred_fallthru
          _
      $region96: #{tpu_custom_call.1} parent=5 // pred_fallthru
        _
    $region6: #{tpu_custom_call.1} parent=1 // loop_footer
      %s27 = sadd.s32 1, %s23
    $region7: #{tpu_custom_call.1} parent=1 // loop_footer_branch
      %22 = sbr.rel target = $region3
    $region8: #{tpu_custom_call.1} parent=1 // loop_exit
      _
    %4458 = vsyncpa [#allocation4], 1
    %s4459 = scalar_lea.sflag [#allocation4], 1
    %4460 = vsyncpa %s4459, 1
    %4461 = vsyncpa [#allocation7], 1
    %4462 = vsyncpa [#allocation5], 1
    %s4463 = scalar_lea.sflag [#allocation5], 1
    %4464 = vsyncpa %s4463, 1

</llo_original>
